<compile_context>
chip_gen: v7x
topology: tpu7x:2x2x1
jax: 0.10.0
libtpu: 0.0.40
codegen_flags: <defaults>
</compile_context>

<pallas_src>
import functools
import math

import numpy as np
import jax
import jax.numpy as jnp
from jax import lax
from jax.experimental import pallas as pl
from jax.experimental.pallas import tpu as pltpu


# ----------------------------- shared math (kernel + reference) ----------------

def _layernorm(x, gamma, beta, eps=1e-5):
    mu = jnp.mean(x, axis=-1, keepdims=True)
    xc = x - mu
    var = jnp.mean(xc * xc, axis=-1, keepdims=True)
    return xc * lax.rsqrt(var + eps) * gamma + beta


def _gelu_tanh(x):
    # TODO(synk): PyTorch nn.GELU() defaults to exact erf GELU; tanh approximation used here.
    c = math.sqrt(2.0 / math.pi)
    return 0.5 * x * (1.0 + jnp.tanh(c * (x + 0.044715 * x * x * x)))


# ----------------------------- Pallas kernel -----------------------------------

def _prior_kernel(n_heads,
                  onehot_ref, cond_ref, bias_ref, pos_ref,
                  tok_w_ref, state_w_ref, state_b_ref,
                  wqkv_ref, bqkv_ref, wproj_ref, bproj_ref,
                  ln_w_ref, ln_b_ref,
                  mlp_w1_ref, mlp_b1_ref, mlp_w2_ref, mlp_b2_ref,
                  lnf_w_ref, lnf_b_ref, pred_w_ref, pred_b_ref,
                  logits_ref):
    f32, bf16 = jnp.float32, jnp.bfloat16
    R = onehot_ref.shape[0]          # rows = BB * Tp (batch x padded-time on sublanes)
    Tp, D = pos_ref.shape
    L = wqkv_ref.shape[0]
    H = n_heads
    Dh = D // H
    BB = R // Tp
    scale = 1.0 / math.sqrt(Dh)

    # ---- embeddings: one-hot matmul keeps the F.pad zero slot / padded rows exact ----
    tok_e = jnp.dot(onehot_ref[...], tok_w_ref[...], preferred_element_type=f32)   # (R, D)
    state_e = jnp.dot(cond_ref[...], state_w_ref[...],
                      preferred_element_type=f32) + state_b_ref[...]               # (R, D)
    pos_e = pos_ref[...]
    if BB > 1:
        pos_e = jnp.concatenate([pos_e] * BB, axis=0)                              # (R, D)
    x = tok_e + pos_e + state_e                                                    # residual stream, f32

    bias = bias_ref[...]                                                           # (R, R) additive mask

    for l in range(L):
        lw = ln_w_ref[l]                      # (2, 1, D)
        lb = ln_b_ref[l]

        # ---- causal multi-head self-attention (pre-LN) ----
        h = _layernorm(x, lw[0], lb[0]).astype(bf16)
        qkv = jnp.dot(h, wqkv_ref[l], preferred_element_type=f32) + bqkv_ref[l]    # (R, 3D)
        q = qkv[:, 0:D].astype(bf16)
        k = qkv[:, D:2 * D].astype(bf16)
        v = qkv[:, 2 * D:3 * D].astype(bf16)

        head_outs = []
        for hh in range(H):                    # static unroll over heads, 2D MXU ops only
            sl = slice(hh * Dh, (hh + 1) * Dh)
            qh, kh, vh = q[:, sl], k[:, sl], v[:, sl]
            s = jnp.einsum("rd,sd->rs", qh, kh,
                           preferred_element_type=f32) * scale + bias              # (R, R)
            s = s - jnp.max(s, axis=-1, keepdims=True)
            p = jnp.exp(s)
            p = p * pl.reciprocal(jnp.sum(p, axis=-1, keepdims=True), approx=True)
            head_outs.append(jnp.dot(p.astype(bf16), vh,
                                     preferred_element_type=f32))                  # (R, Dh)
        y = jnp.concatenate(head_outs, axis=-1).astype(bf16)                       # (R, D)
        x = x + jnp.dot(y, wproj_ref[l], preferred_element_type=f32) + bproj_ref[l]

        # ---- MLP ----
        h2 = _layernorm(x, lw[1], lb[1]).astype(bf16)
        m = jnp.dot(h2, mlp_w1_ref[l], preferred_element_type=f32) + mlp_b1_ref[l]
        m = _gelu_tanh(m).astype(bf16)
        m = jnp.dot(m, mlp_w2_ref[l], preferred_element_type=f32) + mlp_b2_ref[l]
        x = x + m

    x = _layernorm(x, lnf_w_ref[...], lnf_b_ref[...]).astype(bf16)
    logits_ref[...] = jnp.dot(x, pred_w_ref[...],
                              preferred_element_type=f32) + pred_b_ref[...]


# ----------------------------- weight re-layout (pure data movement) ------------

def _prep_weights(params, Vp):
    f32, bf16 = jnp.float32, jnp.bfloat16
    V, D = params["tok_emb"].shape

    tok_w = jnp.pad(params["tok_emb"], ((0, Vp - V), (0, 0))).astype(bf16)     # (Vp, D)

    aw = params["attn_w"]   # (L, 4, D, D): Wq, Wk, Wv, Wproj
    ab = params["attn_b"]   # (L, 4, 1, D)

    # Fused QKV: columns = [q (all heads) | k (all heads) | v (all heads)]
    w_qkv = jnp.concatenate([aw[:, 0], aw[:, 1], aw[:, 2]], axis=-1).astype(bf16)  # (L, D, 3D)
    b_qkv = jnp.concatenate([ab[:, 0], ab[:, 1], ab[:, 2]], axis=-1).astype(f32)   # (L, 1, 3D)
    w_proj = aw[:, 3].astype(bf16)                                                 # (L, D, D)
    b_proj = ab[:, 3].astype(f32)                                                  # (L, 1, D)

    pred_w = jnp.pad(params["pred_w"], ((0, 0), (0, Vp - V))).astype(bf16)     # (D, Vp) lane-dense
    pred_b = jnp.pad(params["pred_b"], ((0, 0), (0, Vp - V))).astype(f32)      # (1, Vp)

    return dict(
        tok_w=tok_w,
        state_w=params["state_w"].astype(f32),
        state_b=params["state_b"].astype(f32),
        w_qkv=w_qkv, b_qkv=b_qkv, w_proj=w_proj, b_proj=b_proj,
        ln_w=params["ln_w"].astype(f32), ln_b=params["ln_b"].astype(f32),
        mlp_w1=params["mlp_w1"].astype(bf16), mlp_b1=params["mlp_b1"].astype(f32),
        mlp_w2=params["mlp_w2"].astype(bf16), mlp_b2=params["mlp_b2"].astype(f32),
        lnf_w=params["lnf_w"].astype(f32), lnf_b=params["lnf_b"].astype(f32),
        pred_w=pred_w, pred_b=pred_b,
    )


# ----------------------------- wrapper ------------------------------------------

def transformer_prior_forward(idx, condition, params, n_heads, targets=None):
    idx = jnp.asarray(idx)
    B, S = idx.shape
    V, D = params["tok_emb"].shape
    T = S + 1
    obs = condition.shape[-1]
    assert T <= params["pos_emb"].shape[0]
    assert D % n_heads == 0

    f32, bf16 = jnp.float32, jnp.bfloat16

    Tp = ((T + 15) // 16) * 16              # pad sequence for clean sublane tiles
    Vp = ((V + 127) // 128) * 128           # lane-dense vocab -> unmasked logit stores
    BB = max(1, min(B, 128 // Tp))          # batches folded into one grid step
    Bp = ((B + BB - 1) // BB) * BB
    R = BB * Tp                             # rows per block (sublane axis)

    # ---- flatten (batch, time) onto the sublane axis (layout only) ----
    onehot = jax.nn.one_hot(idx, Vp, dtype=bf16)                      # (B, S, Vp)
    onehot = jnp.pad(onehot, ((0, Bp - B), (1, Tp - T), (0, 0)))      # slot 0 zero == F.pad
    onehot = onehot.reshape(Bp * Tp, Vp)

    cond = jnp.asarray(condition, f32)
    cond = jnp.pad(cond, ((0, Bp - B), (0, 0)))
    cond_rows = jnp.repeat(cond, Tp, axis=0)                          # (Bp*Tp, obs)

    pos = jnp.pad(params["pos_emb"][:T].astype(f32), ((0, Tp - T), (0, 0)))   # (Tp, D)

    # block-diagonal causal additive mask over flattened rows (same for every block)
    t_id = jnp.arange(R) % Tp
    b_id = jnp.arange(R) // Tp
    allow = (b_id[:, None] == b_id[None, :]) & (t_id[None, :] <= t_id[:, None])
    attn_bias = jnp.where(allow, 0.0, -1e30).astype(f32)              # (R, R)

    w = _prep_weights(params, Vp)

    def full(arr):
        shp = arr.shape
        return pl.BlockSpec(shp, lambda *_: (0,) * len(shp))

    in_specs = [
        pl.BlockSpec((R, Vp), lambda i: (i, 0)),     # one-hot rows (per batch-group)
        pl.BlockSpec((R, obs), lambda i: (i, 0)),    # condition rows (per batch-group)
        full(attn_bias), full(pos),
        full(w["tok_w"]), full(w["state_w"]), full(w["state_b"]),
        full(w["w_qkv"]), full(w["b_qkv"]), full(w["w_proj"]), full(w["b_proj"]),
        full(w["ln_w"]), full(w["ln_b"]),
        full(w["mlp_w1"]), full(w["mlp_b1"]), full(w["mlp_w2"]), full(w["mlp_b2"]),
        full(w["lnf_w"]), full(w["lnf_b"]), full(w["pred_w"]), full(w["pred_b"]),
    ]
    out_spec = pl.BlockSpec((R, Vp), lambda i: (i, 0))

    kernel = functools.partial(_prior_kernel, n_heads)

    logits_flat = pl.pallas_call(
        kernel,
        out_shape=jax.ShapeDtypeStruct((Bp * Tp, Vp), f32),
        grid_spec=pltpu.PrefetchScalarGridSpec(
            num_scalar_prefetch=0,
            grid=(Bp // BB,),
            in_specs=in_specs,
            out_specs=out_spec,
        ),
        compiler_params=pltpu.CompilerParams(dimension_semantics=("parallel",)),
    )(onehot, cond_rows, attn_bias, pos,
      w["tok_w"], w["state_w"], w["state_b"],
      w["w_qkv"], w["b_qkv"], w["w_proj"], w["b_proj"],
      w["ln_w"], w["ln_b"],
      w["mlp_w1"], w["mlp_b1"], w["mlp_w2"], w["mlp_b2"],
      w["lnf_w"], w["lnf_b"], w["pred_w"], w["pred_b"])

    logits = logits_flat.reshape(Bp, Tp, Vp)[:B, :T, :V]

    loss = None
    if targets is not None:
        # glue: F.cross_entropy(logits.view(-1, V), targets.flatten(), reduction='mean')
        logp = jax.nn.log_softmax(logits.reshape(-1, V), axis=-1)
        tgt = jnp.asarray(targets).reshape(-1)
        loss = -jnp.mean(jnp.take_along_axis(logp, tgt[:, None], axis=-1))
    return logits, loss


# ----------------------------- pure-JAX reference --------------------------------

def ref_forward(idx, condition, params, n_heads):
    B, S = idx.shape
    V, D = params["tok_emb"].shape
    T = S + 1
    L = params["attn_w"].shape[0]
    Dh = D // n_heads
    scale = 1.0 / math.sqrt(Dh)

    tok = params["tok_emb"][idx]                              # (B, S, D)
    tok = jnp.pad(tok, ((0, 0), (1, 0), (0, 0)))              # (B, T, D)
    pos = params["pos_emb"][:T][None]
    st = condition.astype(jnp.float32) @ params["state_w"] + params["state_b"]   # (B, D)
    x = tok + pos + st[:, None, :]

    causal = jnp.arange(T)[None, :] <= jnp.arange(T)[:, None]

    for l in range(L):
        aw, ab = params["attn_w"][l], params["attn_b"][l]
        lw, lb = params["ln_w"][l], params["ln_b"][l]
        h = _layernorm(x, lw[0], lb[0])
        q = h @ aw[0] + ab[0]
        k = h @ aw[1] + ab[1]
        v = h @ aw[2] + ab[2]
        y = jnp.zeros_like(x) + ab[3]
        for hh in range(n_heads):
            sl = slice(hh * Dh, (hh + 1) * Dh)
            qh, kh, vh = q[..., sl], k[..., sl], v[..., sl]
            s = jnp.einsum("btd,bsd->bts", qh, kh) * scale
            s = jnp.where(causal, s, jnp.float32(-1e30))
            s = s - jnp.max(s, axis=-1, keepdims=True)
            p = jnp.exp(s)
            p = p / jnp.sum(p, axis=-1, keepdims=True)
            yh = jnp.einsum("bts,bsd->btd", p, vh)
            y = y + yh @ aw[3][sl, :]
        x = x + y
        h2 = _layernorm(x, lw[1], lb[1])
        m = _gelu_tanh(h2 @ params["mlp_w1"][l] + params["mlp_b1"][l])
        x = x + m @ params["mlp_w2"][l] + params["mlp_b2"][l]

    x = _layernorm(x, params["lnf_w"], params["lnf_b"])
    return x @ params["pred_w"] + params["pred_b"]


# ----------------------------- deterministic parameter init ----------------------

def make_params(key, *, n_tokens, emb_dim, block_size, obs_dim, n_layers):
    D, V, L, F4 = emb_dim, n_tokens, n_layers, 4 * emb_dim
    keys = jax.random.split(key, 8)
    s = 0.02

    def rnd(k, shape):
        return (s * jax.random.normal(k, shape)).astype(jnp.float32)

    return dict(
        tok_emb=rnd(keys[0], (V, D)),
        pos_emb=rnd(keys[1], (block_size, D)),
        state_w=rnd(keys[2], (obs_dim, D)),
        state_b=jnp.zeros((1, D), jnp.float32),
        attn_w=rnd(keys[3], (L, 4, D, D)),
        attn_b=jnp.zeros((L, 4, 1, D), jnp.float32),
        ln_w=jnp.ones((L, 2, 1, D), jnp.float32),
        ln_b=jnp.zeros((L, 2, 1, D), jnp.float32),
        mlp_w1=rnd(keys[4], (L, D, F4)),
        mlp_b1=jnp.zeros((L, 1, F4), jnp.float32),
        mlp_w2=rnd(keys[5], (L, F4, D)),
        mlp_b2=jnp.zeros((L, 1, D), jnp.float32),
        lnf_w=jnp.ones((1, D), jnp.float32),
        lnf_b=jnp.zeros((1, D), jnp.float32),
        pred_w=rnd(keys[6], (D, V)),
        pred_b=jnp.zeros((1, V), jnp.float32),
    )


# ----------------------------- main ------------------------------------------------

if __name__ == "__main__":
    n_tokens, emb_dim, block_size, obs_dim = 16, 32, 16, 4
    n_layers, n_heads = 2, 2
    B, S = 2, 8                       # seq_len=8 -> T = seq_len + 1 = 9

    key = jax.random.PRNGKey(0)
    kp, ki, kc, kt = jax.random.split(key, 4)
    params = make_params(kp, n_tokens=n_tokens, emb_dim=emb_dim,
                         block_size=block_size, obs_dim=obs_dim, n_layers=n_layers)
    idx = jax.random.randint(ki, (B, S), 0, n_tokens)
    condition = jax.random.normal(kc, (B, obs_dim), dtype=jnp.float32)
    targets = jax.random.randint(kt, (B, S + 1), 0, n_tokens)

    logits, loss = transformer_prior_forward(idx, condition, params, n_heads, targets=targets)
    logits = jax.block_until_ready(logits)
    loss = jax.block_until_ready(loss)

    ref = ref_forward(idx, condition, params, n_heads)
    np.testing.assert_allclose(np.asarray(logits), np.asarray(ref), rtol=2e-2, atol=2e-2)
    assert logits.shape == (B, S + 1, n_tokens)

    print("KERNEL_OK")
</pallas_src>

<mosaic_0001>
module attributes {stable_mosaic.version = 11 : i64} {
  func.func @_prior_kernel(%arg0: i32, %arg1: memref<32x128xbf16, #tpu.memory_space<vmem>>, %arg2: memref<32x4xf32, #tpu.memory_space<vmem>>, %arg3: memref<32x32xf32, #tpu.memory_space<vmem>>, %arg4: memref<16x32xf32, #tpu.memory_space<vmem>>, %arg5: memref<128x32xbf16, #tpu.memory_space<vmem>>, %arg6: memref<4x32xf32, #tpu.memory_space<vmem>>, %arg7: memref<1x32xf32, #tpu.memory_space<vmem>>, %arg8: memref<2x32x96xbf16, #tpu.memory_space<vmem>>, %arg9: memref<2x1x96xf32, #tpu.memory_space<vmem>>, %arg10: memref<2x32x32xbf16, #tpu.memory_space<vmem>>, %arg11: memref<2x1x32xf32, #tpu.memory_space<vmem>>, %arg12: memref<2x2x1x32xf32, #tpu.memory_space<vmem>>, %arg13: memref<2x2x1x32xf32, #tpu.memory_space<vmem>>, %arg14: memref<2x32x128xbf16, #tpu.memory_space<vmem>>, %arg15: memref<2x1x128xf32, #tpu.memory_space<vmem>>, %arg16: memref<2x128x32xbf16, #tpu.memory_space<vmem>>, %arg17: memref<2x1x32xf32, #tpu.memory_space<vmem>>, %arg18: memref<1x32xf32, #tpu.memory_space<vmem>>, %arg19: memref<1x32xf32, #tpu.memory_space<vmem>>, %arg20: memref<32x128xbf16, #tpu.memory_space<vmem>>, %arg21: memref<1x128xf32, #tpu.memory_space<vmem>>, %arg22: memref<32x128xf32, #tpu.memory_space<vmem>>) attributes {dimension_semantics = [#tpu.dimension_semantics<parallel>], iteration_bounds = array<i64: 1>, scalar_prefetch = 0 : i64, scratch_operands = 0 : i64, tpu.core_type = #tpu.core_type<tc>, window_params = [{transform_indices = @transform_0, window_bounds = array<i64: 32, 128>}, {transform_indices = @transform_1, window_bounds = array<i64: 32, 4>}, {pipeline_mode = #tpu.pipeline_mode<synchronous>, transform_indices = @transform_2, window_bounds = array<i64: 32, 32>}, {pipeline_mode = #tpu.pipeline_mode<synchronous>, transform_indices = @transform_3, window_bounds = array<i64: 16, 32>}, {pipeline_mode = #tpu.pipeline_mode<synchronous>, transform_indices = @transform_4, window_bounds = array<i64: 128, 32>}, {pipeline_mode = #tpu.pipeline_mode<synchronous>, transform_indices = @transform_5, window_bounds = array<i64: 4, 32>}, {pipeline_mode = #tpu.pipeline_mode<synchronous>, transform_indices = @transform_6, window_bounds = array<i64: 1, 32>}, {pipeline_mode = #tpu.pipeline_mode<synchronous>, transform_indices = @transform_7, window_bounds = array<i64: 2, 32, 96>}, {pipeline_mode = #tpu.pipeline_mode<synchronous>, transform_indices = @transform_8, window_bounds = array<i64: 2, 1, 96>}, {pipeline_mode = #tpu.pipeline_mode<synchronous>, transform_indices = @transform_9, window_bounds = array<i64: 2, 32, 32>}, {pipeline_mode = #tpu.pipeline_mode<synchronous>, transform_indices = @transform_10, window_bounds = array<i64: 2, 1, 32>}, {pipeline_mode = #tpu.pipeline_mode<synchronous>, transform_indices = @transform_11, window_bounds = array<i64: 2, 2, 1, 32>}, {pipeline_mode = #tpu.pipeline_mode<synchronous>, transform_indices = @transform_12, window_bounds = array<i64: 2, 2, 1, 32>}, {pipeline_mode = #tpu.pipeline_mode<synchronous>, transform_indices = @transform_13, window_bounds = array<i64: 2, 32, 128>}, {pipeline_mode = #tpu.pipeline_mode<synchronous>, transform_indices = @transform_14, window_bounds = array<i64: 2, 1, 128>}, {pipeline_mode = #tpu.pipeline_mode<synchronous>, transform_indices = @transform_15, window_bounds = array<i64: 2, 128, 32>}, {pipeline_mode = #tpu.pipeline_mode<synchronous>, transform_indices = @transform_16, window_bounds = array<i64: 2, 1, 32>}, {pipeline_mode = #tpu.pipeline_mode<synchronous>, transform_indices = @transform_17, window_bounds = array<i64: 1, 32>}, {pipeline_mode = #tpu.pipeline_mode<synchronous>, transform_indices = @transform_18, window_bounds = array<i64: 1, 32>}, {pipeline_mode = #tpu.pipeline_mode<synchronous>, transform_indices = @transform_19, window_bounds = array<i64: 32, 128>}, {pipeline_mode = #tpu.pipeline_mode<synchronous>, transform_indices = @transform_20, window_bounds = array<i64: 1, 128>}, {transform_indices = @transform_21, window_bounds = array<i64: 32, 128>}]} {
    %c0 = arith.constant 0 : index
    %c0_0 = arith.constant 0 : index
    %0 = vector.load %arg1[%c0, %c0_0] : memref<32x128xbf16, #tpu.memory_space<vmem>>, vector<32x128xbf16>
    %c0_1 = arith.constant 0 : index
    %c0_2 = arith.constant 0 : index
    %1 = vector.load %arg5[%c0_1, %c0_2] : memref<128x32xbf16, #tpu.memory_space<vmem>>, vector<128x32xbf16>
    %cst = arith.constant dense<0.000000e+00> : vector<32x32xf32>
    %2 = tpu.matmul %0, %1, %cst {dimension_numbers = #tpu.dot_dimension_numbers<[1], [0], [0], [1], [0, 0, 1, 1], [], []>} : vector<32x128xbf16>, vector<128x32xbf16>, vector<32x32xf32> -> vector<32x32xf32>
    %c0_3 = arith.constant 0 : index
    %c0_4 = arith.constant 0 : index
    %3 = vector.load %arg2[%c0_3, %c0_4] : memref<32x4xf32, #tpu.memory_space<vmem>>, vector<32x4xf32>
    %c0_5 = arith.constant 0 : index
    %c0_6 = arith.constant 0 : index
    %4 = vector.load %arg6[%c0_5, %c0_6] : memref<4x32xf32, #tpu.memory_space<vmem>>, vector<4x32xf32>
    %cst_7 = arith.constant dense<0.000000e+00> : vector<32x32xf32>
    %5 = tpu.matmul %3, %4, %cst_7 {dimension_numbers = #tpu.dot_dimension_numbers<[1], [0], [0], [1], [0, 0, 1, 1], [], []>} : vector<32x4xf32>, vector<4x32xf32>, vector<32x32xf32> -> vector<32x32xf32>
    %c0_8 = arith.constant 0 : index
    %c0_9 = arith.constant 0 : index
    %6 = vector.load %arg7[%c0_8, %c0_9] : memref<1x32xf32, #tpu.memory_space<vmem>>, vector<1x32xf32>
    %7 = vector.broadcast %6 : vector<1x32xf32> to vector<32x32xf32>
    %8 = arith.addf %5, %7 : vector<32x32xf32>
    %c0_10 = arith.constant 0 : index
    %c0_11 = arith.constant 0 : index
    %9 = vector.load %arg4[%c0_10, %c0_11] : memref<16x32xf32, #tpu.memory_space<vmem>>, vector<16x32xf32>
    %10 = tpu.concatenate %9, %9 in 0 : vector<16x32xf32>, vector<16x32xf32> -> vector<32x32xf32>
    %11 = arith.addf %2, %10 : vector<32x32xf32>
    %12 = arith.addf %11, %8 : vector<32x32xf32>
    %c0_12 = arith.constant 0 : index
    %c0_13 = arith.constant 0 : index
    %13 = vector.load %arg3[%c0_12, %c0_13] : memref<32x32xf32, #tpu.memory_space<vmem>>, vector<32x32xf32>
    %c0_14 = arith.constant 0 : index
    %c0_15 = arith.constant 0 : index
    %c0_16 = arith.constant 0 : index
    %c0_17 = arith.constant 0 : index
    %14 = vector.load %arg12[%c0_14, %c0_15, %c0_16, %c0_17] : memref<2x2x1x32xf32, #tpu.memory_space<vmem>>, vector<1x2x1x32xf32>
    %15 = vector.shape_cast %14 : vector<1x2x1x32xf32> to vector<2x1x32xf32>
    %c0_18 = arith.constant 0 : index
    %c0_19 = arith.constant 0 : index
    %c0_20 = arith.constant 0 : index
    %c0_21 = arith.constant 0 : index
    %16 = vector.load %arg13[%c0_18, %c0_19, %c0_20, %c0_21] : memref<2x2x1x32xf32, #tpu.memory_space<vmem>>, vector<1x2x1x32xf32>
    %17 = vector.shape_cast %16 : vector<1x2x1x32xf32> to vector<2x1x32xf32>
    %18 = vector.extract_strided_slice %15 {offsets = [0, 0, 0], sizes = [1, 1, 32], strides = [1, 1, 1]} : vector<2x1x32xf32> to vector<1x1x32xf32>
    %19 = vector.shape_cast %18 : vector<1x1x32xf32> to vector<1x32xf32>
    %20 = vector.extract_strided_slice %17 {offsets = [0, 0, 0], sizes = [1, 1, 32], strides = [1, 1, 1]} : vector<2x1x32xf32> to vector<1x1x32xf32>
    %21 = vector.shape_cast %20 : vector<1x1x32xf32> to vector<1x32xf32>
    %cst_22 = arith.constant dense<0.000000e+00> : vector<32xf32>
    %22 = vector.multi_reduction <add>, %12, %cst_22 [1] : vector<32x32xf32> to vector<32xf32>
    %23 = vector.shape_cast %22 : vector<32xf32> to vector<32x1xf32>
    %cst_23 = arith.constant 3.200000e+01 : f32
    %24 = vector.broadcast %cst_23 : f32 to vector<32x1xf32>
    %25 = arith.divf %23, %24 : vector<32x1xf32>
    %26 = vector.broadcast %25 : vector<32x1xf32> to vector<32x32xf32>
    %27 = arith.subf %12, %26 : vector<32x32xf32>
    %28 = arith.mulf %27, %27 : vector<32x32xf32>
    %cst_24 = arith.constant dense<0.000000e+00> : vector<32xf32>
    %29 = vector.multi_reduction <add>, %28, %cst_24 [1] : vector<32x32xf32> to vector<32xf32>
    %30 = vector.shape_cast %29 : vector<32xf32> to vector<32x1xf32>
    %cst_25 = arith.constant 3.200000e+01 : f32
    %31 = vector.broadcast %cst_25 : f32 to vector<32x1xf32>
    %32 = arith.divf %30, %31 : vector<32x1xf32>
    %cst_26 = arith.constant 9.99999974E-6 : f32
    %33 = vector.broadcast %cst_26 : f32 to vector<32x1xf32>
    %34 = arith.addf %32, %33 : vector<32x1xf32>
    %35 = math.rsqrt %34 : vector<32x1xf32>
    %36 = vector.broadcast %35 : vector<32x1xf32> to vector<32x32xf32>
    %37 = arith.mulf %27, %36 : vector<32x32xf32>
    %38 = vector.broadcast %19 : vector<1x32xf32> to vector<32x32xf32>
    %39 = arith.mulf %37, %38 : vector<32x32xf32>
    %40 = vector.broadcast %21 : vector<1x32xf32> to vector<32x32xf32>
    %41 = arith.addf %39, %40 : vector<32x32xf32>
    %42 = arith.truncf %41 : vector<32x32xf32> to vector<32x32xbf16>
    %c0_27 = arith.constant 0 : index
    %c0_28 = arith.constant 0 : index
    %c0_29 = arith.constant 0 : index
    %43 = vector.load %arg8[%c0_27, %c0_28, %c0_29] : memref<2x32x96xbf16, #tpu.memory_space<vmem>>, vector<1x32x96xbf16>
    %44 = vector.shape_cast %43 : vector<1x32x96xbf16> to vector<32x96xbf16>
    %cst_30 = arith.constant dense<0.000000e+00> : vector<32x96xf32>
    %45 = tpu.matmul %42, %44, %cst_30 {dimension_numbers = #tpu.dot_dimension_numbers<[1], [0], [0], [1], [0, 0, 1, 1], [], []>} : vector<32x32xbf16>, vector<32x96xbf16>, vector<32x96xf32> -> vector<32x96xf32>
    %c0_31 = arith.constant 0 : index
    %c0_32 = arith.constant 0 : index
    %c0_33 = arith.constant 0 : index
    %46 = vector.load %arg9[%c0_31, %c0_32, %c0_33] : memref<2x1x96xf32, #tpu.memory_space<vmem>>, vector<1x1x96xf32>
    %47 = vector.shape_cast %46 : vector<1x1x96xf32> to vector<1x96xf32>
    %48 = vector.broadcast %47 : vector<1x96xf32> to vector<32x96xf32>
    %49 = arith.addf %45, %48 : vector<32x96xf32>
    %50 = vector.extract_strided_slice %49 {offsets = [0, 0], sizes = [32, 32], strides = [1, 1]} : vector<32x96xf32> to vector<32x32xf32>
    %51 = arith.truncf %50 : vector<32x32xf32> to vector<32x32xbf16>
    %52 = vector.extract_strided_slice %49 {offsets = [0, 32], sizes = [32, 32], strides = [1, 1]} : vector<32x96xf32> to vector<32x32xf32>
    %53 = arith.truncf %52 : vector<32x32xf32> to vector<32x32xbf16>
    %54 = vector.extract_strided_slice %49 {offsets = [0, 64], sizes = [32, 32], strides = [1, 1]} : vector<32x96xf32> to vector<32x32xf32>
    %55 = arith.truncf %54 : vector<32x32xf32> to vector<32x32xbf16>
    %56 = vector.extract_strided_slice %51 {offsets = [0, 0], sizes = [32, 16], strides = [1, 1]} : vector<32x32xbf16> to vector<32x16xbf16>
    %57 = vector.extract_strided_slice %53 {offsets = [0, 0], sizes = [32, 16], strides = [1, 1]} : vector<32x32xbf16> to vector<32x16xbf16>
    %58 = vector.extract_strided_slice %55 {offsets = [0, 0], sizes = [32, 16], strides = [1, 1]} : vector<32x32xbf16> to vector<32x16xbf16>
    "tpu.trace_start"() <{level = 10 : i32, message = "rd,sd->rs"}> : () -> ()
    %cst_34 = arith.constant dense<0.000000e+00> : vector<32x32xf32>
    %59 = tpu.matmul %56, %57, %cst_34 {dimension_numbers = #tpu.dot_dimension_numbers<[1], [1], [0], [0], [0, 0, 1, 0], [], []>} : vector<32x16xbf16>, vector<32x16xbf16>, vector<32x32xf32> -> vector<32x32xf32>
    "tpu.trace_stop"() : () -> ()
    %cst_35 = arith.constant 2.500000e-01 : f32
    %60 = vector.broadcast %cst_35 : f32 to vector<32x32xf32>
    %61 = arith.mulf %59, %60 : vector<32x32xf32>
    %62 = arith.addf %61, %13 : vector<32x32xf32>
    %cst_36 = arith.constant dense<0xFF800000> : vector<32xf32>
    %63 = vector.multi_reduction <maximumf>, %62, %cst_36 [1] : vector<32x32xf32> to vector<32xf32>
    %64 = vector.shape_cast %63 : vector<32xf32> to vector<32x1xf32>
    %65 = vector.broadcast %64 : vector<32x1xf32> to vector<32x32xf32>
    %66 = arith.subf %62, %65 : vector<32x32xf32>
    %67 = math.exp %66 : vector<32x32xf32>
    %cst_37 = arith.constant dense<0.000000e+00> : vector<32xf32>
    %68 = vector.multi_reduction <add>, %67, %cst_37 [1] : vector<32x32xf32> to vector<32xf32>
    %69 = vector.shape_cast %68 : vector<32xf32> to vector<32x1xf32>
    %70 = tpu.reciprocal %69 {approx = true} : vector<32x1xf32> -> vector<32x1xf32>
    %71 = vector.broadcast %70 : vector<32x1xf32> to vector<32x32xf32>
    %72 = arith.mulf %67, %71 : vector<32x32xf32>
    %73 = arith.truncf %72 : vector<32x32xf32> to vector<32x32xbf16>
    %cst_38 = arith.constant dense<0.000000e+00> : vector<32x16xf32>
    %74 = tpu.matmul %73, %58, %cst_38 {dimension_numbers = #tpu.dot_dimension_numbers<[1], [0], [0], [1], [0, 0, 1, 1], [], []>} : vector<32x32xbf16>, vector<32x16xbf16>, vector<32x16xf32> -> vector<32x16xf32>
    %75 = vector.extract_strided_slice %51 {offsets = [0, 16], sizes = [32, 16], strides = [1, 1]} : vector<32x32xbf16> to vector<32x16xbf16>
    %76 = vector.extract_strided_slice %53 {offsets = [0, 16], sizes = [32, 16], strides = [1, 1]} : vector<32x32xbf16> to vector<32x16xbf16>
    %77 = vector.extract_strided_slice %55 {offsets = [0, 16], sizes = [32, 16], strides = [1, 1]} : vector<32x32xbf16> to vector<32x16xbf16>
    "tpu.trace_start"() <{level = 10 : i32, message = "rd,sd->rs"}> : () -> ()
    %cst_39 = arith.constant dense<0.000000e+00> : vector<32x32xf32>
    %78 = tpu.matmul %75, %76, %cst_39 {dimension_numbers = #tpu.dot_dimension_numbers<[1], [1], [0], [0], [0, 0, 1, 0], [], []>} : vector<32x16xbf16>, vector<32x16xbf16>, vector<32x32xf32> -> vector<32x32xf32>
    "tpu.trace_stop"() : () -> ()
    %cst_40 = arith.constant 2.500000e-01 : f32
    %79 = vector.broadcast %cst_40 : f32 to vector<32x32xf32>
    %80 = arith.mulf %78, %79 : vector<32x32xf32>
    %81 = arith.addf %80, %13 : vector<32x32xf32>
    %cst_41 = arith.constant dense<0xFF800000> : vector<32xf32>
    %82 = vector.multi_reduction <maximumf>, %81, %cst_41 [1] : vector<32x32xf32> to vector<32xf32>
    %83 = vector.shape_cast %82 : vector<32xf32> to vector<32x1xf32>
    %84 = vector.broadcast %83 : vector<32x1xf32> to vector<32x32xf32>
    %85 = arith.subf %81, %84 : vector<32x32xf32>
    %86 = math.exp %85 : vector<32x32xf32>
    %cst_42 = arith.constant dense<0.000000e+00> : vector<32xf32>
    %87 = vector.multi_reduction <add>, %86, %cst_42 [1] : vector<32x32xf32> to vector<32xf32>
    %88 = vector.shape_cast %87 : vector<32xf32> to vector<32x1xf32>
    %89 = tpu.reciprocal %88 {approx = true} : vector<32x1xf32> -> vector<32x1xf32>
    %90 = vector.broadcast %89 : vector<32x1xf32> to vector<32x32xf32>
    %91 = arith.mulf %86, %90 : vector<32x32xf32>
    %92 = arith.truncf %91 : vector<32x32xf32> to vector<32x32xbf16>
    %cst_43 = arith.constant dense<0.000000e+00> : vector<32x16xf32>
    %93 = tpu.matmul %92, %77, %cst_43 {dimension_numbers = #tpu.dot_dimension_numbers<[1], [0], [0], [1], [0, 0, 1, 1], [], []>} : vector<32x32xbf16>, vector<32x16xbf16>, vector<32x16xf32> -> vector<32x16xf32>
    %94 = tpu.concatenate %74, %93 in 1 : vector<32x16xf32>, vector<32x16xf32> -> vector<32x32xf32>
    %95 = arith.truncf %94 : vector<32x32xf32> to vector<32x32xbf16>
    %c0_44 = arith.constant 0 : index
    %c0_45 = arith.constant 0 : index
    %c0_46 = arith.constant 0 : index
    %96 = vector.load %arg10[%c0_44, %c0_45, %c0_46] : memref<2x32x32xbf16, #tpu.memory_space<vmem>>, vector<1x32x32xbf16>
    %97 = vector.shape_cast %96 : vector<1x32x32xbf16> to vector<32x32xbf16>
    %cst_47 = arith.constant dense<0.000000e+00> : vector<32x32xf32>
    %98 = tpu.matmul %95, %97, %cst_47 {dimension_numbers = #tpu.dot_dimension_numbers<[1], [0], [0], [1], [0, 0, 1, 1], [], []>} : vector<32x32xbf16>, vector<32x32xbf16>, vector<32x32xf32> -> vector<32x32xf32>
    %99 = arith.addf %12, %98 : vector<32x32xf32>
    %c0_48 = arith.constant 0 : index
    %c0_49 = arith.constant 0 : index
    %c0_50 = arith.constant 0 : index
    %100 = vector.load %arg11[%c0_48, %c0_49, %c0_50] : memref<2x1x32xf32, #tpu.memory_space<vmem>>, vector<1x1x32xf32>
    %101 = vector.shape_cast %100 : vector<1x1x32xf32> to vector<1x32xf32>
    %102 = vector.broadcast %101 : vector<1x32xf32> to vector<32x32xf32>
    %103 = arith.addf %99, %102 : vector<32x32xf32>
    %104 = vector.extract_strided_slice %15 {offsets = [1, 0, 0], sizes = [1, 1, 32], strides = [1, 1, 1]} : vector<2x1x32xf32> to vector<1x1x32xf32>
    %105 = vector.shape_cast %104 : vector<1x1x32xf32> to vector<1x32xf32>
    %106 = vector.extract_strided_slice %17 {offsets = [1, 0, 0], sizes = [1, 1, 32], strides = [1, 1, 1]} : vector<2x1x32xf32> to vector<1x1x32xf32>
    %107 = vector.shape_cast %106 : vector<1x1x32xf32> to vector<1x32xf32>
    %cst_51 = arith.constant dense<0.000000e+00> : vector<32xf32>
    %108 = vector.multi_reduction <add>, %103, %cst_51 [1] : vector<32x32xf32> to vector<32xf32>
    %109 = vector.shape_cast %108 : vector<32xf32> to vector<32x1xf32>
    %cst_52 = arith.constant 3.200000e+01 : f32
    %110 = vector.broadcast %cst_52 : f32 to vector<32x1xf32>
    %111 = arith.divf %109, %110 : vector<32x1xf32>
    %112 = vector.broadcast %111 : vector<32x1xf32> to vector<32x32xf32>
    %113 = arith.subf %103, %112 : vector<32x32xf32>
    %114 = arith.mulf %113, %113 : vector<32x32xf32>
    %cst_53 = arith.constant dense<0.000000e+00> : vector<32xf32>
    %115 = vector.multi_reduction <add>, %114, %cst_53 [1] : vector<32x32xf32> to vector<32xf32>
    %116 = vector.shape_cast %115 : vector<32xf32> to vector<32x1xf32>
    %cst_54 = arith.constant 3.200000e+01 : f32
    %117 = vector.broadcast %cst_54 : f32 to vector<32x1xf32>
    %118 = arith.divf %116, %117 : vector<32x1xf32>
    %cst_55 = arith.constant 9.99999974E-6 : f32
    %119 = vector.broadcast %cst_55 : f32 to vector<32x1xf32>
    %120 = arith.addf %118, %119 : vector<32x1xf32>
    %121 = math.rsqrt %120 : vector<32x1xf32>
    %122 = vector.broadcast %121 : vector<32x1xf32> to vector<32x32xf32>
    %123 = arith.mulf %113, %122 : vector<32x32xf32>
    %124 = vector.broadcast %105 : vector<1x32xf32> to vector<32x32xf32>
    %125 = arith.mulf %123, %124 : vector<32x32xf32>
    %126 = vector.broadcast %107 : vector<1x32xf32> to vector<32x32xf32>
    %127 = arith.addf %125, %126 : vector<32x32xf32>
    %128 = arith.truncf %127 : vector<32x32xf32> to vector<32x32xbf16>
    %c0_56 = arith.constant 0 : index
    %c0_57 = arith.constant 0 : index
    %c0_58 = arith.constant 0 : index
    %129 = vector.load %arg14[%c0_56, %c0_57, %c0_58] : memref<2x32x128xbf16, #tpu.memory_space<vmem>>, vector<1x32x128xbf16>
    %130 = vector.shape_cast %129 : vector<1x32x128xbf16> to vector<32x128xbf16>
    %cst_59 = arith.constant dense<0.000000e+00> : vector<32x128xf32>
    %131 = tpu.matmul %128, %130, %cst_59 {dimension_numbers = #tpu.dot_dimension_numbers<[1], [0], [0], [1], [0, 0, 1, 1], [], []>} : vector<32x32xbf16>, vector<32x128xbf16>, vector<32x128xf32> -> vector<32x128xf32>
    %c0_60 = arith.constant 0 : index
    %c0_61 = arith.constant 0 : index
    %c0_62 = arith.constant 0 : index
    %132 = vector.load %arg15[%c0_60, %c0_61, %c0_62] : memref<2x1x128xf32, #tpu.memory_space<vmem>>, vector<1x1x128xf32>
    %133 = vector.shape_cast %132 : vector<1x1x128xf32> to vector<1x128xf32>
    %134 = vector.broadcast %133 : vector<1x128xf32> to vector<32x128xf32>
    %135 = arith.addf %131, %134 : vector<32x128xf32>
    %cst_63 = arith.constant 5.000000e-01 : f32
    %136 = vector.broadcast %cst_63 : f32 to vector<32x128xf32>
    %137 = arith.mulf %136, %135 : vector<32x128xf32>
    %cst_64 = arith.constant 4.471500e-02 : f32
    %138 = vector.broadcast %cst_64 : f32 to vector<32x128xf32>
    %139 = arith.mulf %138, %135 : vector<32x128xf32>
    %140 = arith.mulf %139, %135 : vector<32x128xf32>
    %141 = arith.mulf %140, %135 : vector<32x128xf32>
    %142 = arith.addf %135, %141 : vector<32x128xf32>
    %cst_65 = arith.constant 0.797884583 : f32
    %143 = vector.broadcast %cst_65 : f32 to vector<32x128xf32>
    %144 = arith.mulf %143, %142 : vector<32x128xf32>
    %145 = math.tanh %144 : vector<32x128xf32>
    %cst_66 = arith.constant 1.000000e+00 : f32
    %146 = vector.broadcast %cst_66 : f32 to vector<32x128xf32>
    %147 = arith.addf %146, %145 : vector<32x128xf32>
    %148 = arith.mulf %137, %147 : vector<32x128xf32>
    %149 = arith.truncf %148 : vector<32x128xf32> to vector<32x128xbf16>
    %c0_67 = arith.constant 0 : index
    %c0_68 = arith.constant 0 : index
    %c0_69 = arith.constant 0 : index
    %150 = vector.load %arg16[%c0_67, %c0_68, %c0_69] : memref<2x128x32xbf16, #tpu.memory_space<vmem>>, vector<1x128x32xbf16>
    %151 = vector.shape_cast %150 : vector<1x128x32xbf16> to vector<128x32xbf16>
    %cst_70 = arith.constant dense<0.000000e+00> : vector<32x32xf32>
    %152 = tpu.matmul %149, %151, %cst_70 {dimension_numbers = #tpu.dot_dimension_numbers<[1], [0], [0], [1], [0, 0, 1, 1], [], []>} : vector<32x128xbf16>, vector<128x32xbf16>, vector<32x32xf32> -> vector<32x32xf32>
    %c0_71 = arith.constant 0 : index
    %c0_72 = arith.constant 0 : index
    %c0_73 = arith.constant 0 : index
    %153 = vector.load %arg17[%c0_71, %c0_72, %c0_73] : memref<2x1x32xf32, #tpu.memory_space<vmem>>, vector<1x1x32xf32>
    %154 = vector.shape_cast %153 : vector<1x1x32xf32> to vector<1x32xf32>
    %155 = vector.broadcast %154 : vector<1x32xf32> to vector<32x32xf32>
    %156 = arith.addf %152, %155 : vector<32x32xf32>
    %157 = arith.addf %103, %156 : vector<32x32xf32>
    %c1 = arith.constant 1 : index
    %c0_74 = arith.constant 0 : index
    %c0_75 = arith.constant 0 : index
    %c0_76 = arith.constant 0 : index
    %158 = vector.load %arg12[%c1, %c0_74, %c0_75, %c0_76] : memref<2x2x1x32xf32, #tpu.memory_space<vmem>>, vector<1x2x1x32xf32>
    %159 = vector.shape_cast %158 : vector<1x2x1x32xf32> to vector<2x1x32xf32>
    %c1_77 = arith.constant 1 : index
    %c0_78 = arith.constant 0 : index
    %c0_79 = arith.constant 0 : index
    %c0_80 = arith.constant 0 : index
    %160 = vector.load %arg13[%c1_77, %c0_78, %c0_79, %c0_80] : memref<2x2x1x32xf32, #tpu.memory_space<vmem>>, vector<1x2x1x32xf32>
    %161 = vector.shape_cast %160 : vector<1x2x1x32xf32> to vector<2x1x32xf32>
    %162 = vector.extract_strided_slice %159 {offsets = [0, 0, 0], sizes = [1, 1, 32], strides = [1, 1, 1]} : vector<2x1x32xf32> to vector<1x1x32xf32>
    %163 = vector.shape_cast %162 : vector<1x1x32xf32> to vector<1x32xf32>
    %164 = vector.extract_strided_slice %161 {offsets = [0, 0, 0], sizes = [1, 1, 32], strides = [1, 1, 1]} : vector<2x1x32xf32> to vector<1x1x32xf32>
    %165 = vector.shape_cast %164 : vector<1x1x32xf32> to vector<1x32xf32>
    %cst_81 = arith.constant dense<0.000000e+00> : vector<32xf32>
    %166 = vector.multi_reduction <add>, %157, %cst_81 [1] : vector<32x32xf32> to vector<32xf32>
    %167 = vector.shape_cast %166 : vector<32xf32> to vector<32x1xf32>
    %cst_82 = arith.constant 3.200000e+01 : f32
    %168 = vector.broadcast %cst_82 : f32 to vector<32x1xf32>
    %169 = arith.divf %167, %168 : vector<32x1xf32>
    %170 = vector.broadcast %169 : vector<32x1xf32> to vector<32x32xf32>
    %171 = arith.subf %157, %170 : vector<32x32xf32>
    %172 = arith.mulf %171, %171 : vector<32x32xf32>
    %cst_83 = arith.constant dense<0.000000e+00> : vector<32xf32>
    %173 = vector.multi_reduction <add>, %172, %cst_83 [1] : vector<32x32xf32> to vector<32xf32>
    %174 = vector.shape_cast %173 : vector<32xf32> to vector<32x1xf32>
    %cst_84 = arith.constant 3.200000e+01 : f32
    %175 = vector.broadcast %cst_84 : f32 to vector<32x1xf32>
    %176 = arith.divf %174, %175 : vector<32x1xf32>
    %cst_85 = arith.constant 9.99999974E-6 : f32
    %177 = vector.broadcast %cst_85 : f32 to vector<32x1xf32>
    %178 = arith.addf %176, %177 : vector<32x1xf32>
    %179 = math.rsqrt %178 : vector<32x1xf32>
    %180 = vector.broadcast %179 : vector<32x1xf32> to vector<32x32xf32>
    %181 = arith.mulf %171, %180 : vector<32x32xf32>
    %182 = vector.broadcast %163 : vector<1x32xf32> to vector<32x32xf32>
    %183 = arith.mulf %181, %182 : vector<32x32xf32>
    %184 = vector.broadcast %165 : vector<1x32xf32> to vector<32x32xf32>
    %185 = arith.addf %183, %184 : vector<32x32xf32>
    %186 = arith.truncf %185 : vector<32x32xf32> to vector<32x32xbf16>
    %c1_86 = arith.constant 1 : index
    %c0_87 = arith.constant 0 : index
    %c0_88 = arith.constant 0 : index
    %187 = vector.load %arg8[%c1_86, %c0_87, %c0_88] : memref<2x32x96xbf16, #tpu.memory_space<vmem>>, vector<1x32x96xbf16>
    %188 = vector.shape_cast %187 : vector<1x32x96xbf16> to vector<32x96xbf16>
    %cst_89 = arith.constant dense<0.000000e+00> : vector<32x96xf32>
    %189 = tpu.matmul %186, %188, %cst_89 {dimension_numbers = #tpu.dot_dimension_numbers<[1], [0], [0], [1], [0, 0, 1, 1], [], []>} : vector<32x32xbf16>, vector<32x96xbf16>, vector<32x96xf32> -> vector<32x96xf32>
    %c1_90 = arith.constant 1 : index
    %c0_91 = arith.constant 0 : index
    %c0_92 = arith.constant 0 : index
    %190 = vector.load %arg9[%c1_90, %c0_91, %c0_92] : memref<2x1x96xf32, #tpu.memory_space<vmem>>, vector<1x1x96xf32>
    %191 = vector.shape_cast %190 : vector<1x1x96xf32> to vector<1x96xf32>
    %192 = vector.broadcast %191 : vector<1x96xf32> to vector<32x96xf32>
    %193 = arith.addf %189, %192 : vector<32x96xf32>
    %194 = vector.extract_strided_slice %193 {offsets = [0, 0], sizes = [32, 32], strides = [1, 1]} : vector<32x96xf32> to vector<32x32xf32>
    %195 = arith.truncf %194 : vector<32x32xf32> to vector<32x32xbf16>
    %196 = vector.extract_strided_slice %193 {offsets = [0, 32], sizes = [32, 32], strides = [1, 1]} : vector<32x96xf32> to vector<32x32xf32>
    %197 = arith.truncf %196 : vector<32x32xf32> to vector<32x32xbf16>
    %198 = vector.extract_strided_slice %193 {offsets = [0, 64], sizes = [32, 32], strides = [1, 1]} : vector<32x96xf32> to vector<32x32xf32>
    %199 = arith.truncf %198 : vector<32x32xf32> to vector<32x32xbf16>
    %200 = vector.extract_strided_slice %195 {offsets = [0, 0], sizes = [32, 16], strides = [1, 1]} : vector<32x32xbf16> to vector<32x16xbf16>
    %201 = vector.extract_strided_slice %197 {offsets = [0, 0], sizes = [32, 16], strides = [1, 1]} : vector<32x32xbf16> to vector<32x16xbf16>
    %202 = vector.extract_strided_slice %199 {offsets = [0, 0], sizes = [32, 16], strides = [1, 1]} : vector<32x32xbf16> to vector<32x16xbf16>
    "tpu.trace_start"() <{level = 10 : i32, message = "rd,sd->rs"}> : () -> ()
    %cst_93 = arith.constant dense<0.000000e+00> : vector<32x32xf32>
    %203 = tpu.matmul %200, %201, %cst_93 {dimension_numbers = #tpu.dot_dimension_numbers<[1], [1], [0], [0], [0, 0, 1, 0], [], []>} : vector<32x16xbf16>, vector<32x16xbf16>, vector<32x32xf32> -> vector<32x32xf32>
    "tpu.trace_stop"() : () -> ()
    %cst_94 = arith.constant 2.500000e-01 : f32
    %204 = vector.broadcast %cst_94 : f32 to vector<32x32xf32>
    %205 = arith.mulf %203, %204 : vector<32x32xf32>
    %206 = arith.addf %205, %13 : vector<32x32xf32>
    %cst_95 = arith.constant dense<0xFF800000> : vector<32xf32>
    %207 = vector.multi_reduction <maximumf>, %206, %cst_95 [1] : vector<32x32xf32> to vector<32xf32>
    %208 = vector.shape_cast %207 : vector<32xf32> to vector<32x1xf32>
    %209 = vector.broadcast %208 : vector<32x1xf32> to vector<32x32xf32>
    %210 = arith.subf %206, %209 : vector<32x32xf32>
    %211 = math.exp %210 : vector<32x32xf32>
    %cst_96 = arith.constant dense<0.000000e+00> : vector<32xf32>
    %212 = vector.multi_reduction <add>, %211, %cst_96 [1] : vector<32x32xf32> to vector<32xf32>
    %213 = vector.shape_cast %212 : vector<32xf32> to vector<32x1xf32>
    %214 = tpu.reciprocal %213 {approx = true} : vector<32x1xf32> -> vector<32x1xf32>
    %215 = vector.broadcast %214 : vector<32x1xf32> to vector<32x32xf32>
    %216 = arith.mulf %211, %215 : vector<32x32xf32>
    %217 = arith.truncf %216 : vector<32x32xf32> to vector<32x32xbf16>
    %cst_97 = arith.constant dense<0.000000e+00> : vector<32x16xf32>
    %218 = tpu.matmul %217, %202, %cst_97 {dimension_numbers = #tpu.dot_dimension_numbers<[1], [0], [0], [1], [0, 0, 1, 1], [], []>} : vector<32x32xbf16>, vector<32x16xbf16>, vector<32x16xf32> -> vector<32x16xf32>
    %219 = vector.extract_strided_slice %195 {offsets = [0, 16], sizes = [32, 16], strides = [1, 1]} : vector<32x32xbf16> to vector<32x16xbf16>
    %220 = vector.extract_strided_slice %197 {offsets = [0, 16], sizes = [32, 16], strides = [1, 1]} : vector<32x32xbf16> to vector<32x16xbf16>
    %221 = vector.extract_strided_slice %199 {offsets = [0, 16], sizes = [32, 16], strides = [1, 1]} : vector<32x32xbf16> to vector<32x16xbf16>
    "tpu.trace_start"() <{level = 10 : i32, message = "rd,sd->rs"}> : () -> ()
    %cst_98 = arith.constant dense<0.000000e+00> : vector<32x32xf32>
    %222 = tpu.matmul %219, %220, %cst_98 {dimension_numbers = #tpu.dot_dimension_numbers<[1], [1], [0], [0], [0, 0, 1, 0], [], []>} : vector<32x16xbf16>, vector<32x16xbf16>, vector<32x32xf32> -> vector<32x32xf32>
    "tpu.trace_stop"() : () -> ()
    %cst_99 = arith.constant 2.500000e-01 : f32
    %223 = vector.broadcast %cst_99 : f32 to vector<32x32xf32>
    %224 = arith.mulf %222, %223 : vector<32x32xf32>
    %225 = arith.addf %224, %13 : vector<32x32xf32>
    %cst_100 = arith.constant dense<0xFF800000> : vector<32xf32>
    %226 = vector.multi_reduction <maximumf>, %225, %cst_100 [1] : vector<32x32xf32> to vector<32xf32>
    %227 = vector.shape_cast %226 : vector<32xf32> to vector<32x1xf32>
    %228 = vector.broadcast %227 : vector<32x1xf32> to vector<32x32xf32>
    %229 = arith.subf %225, %228 : vector<32x32xf32>
    %230 = math.exp %229 : vector<32x32xf32>
    %cst_101 = arith.constant dense<0.000000e+00> : vector<32xf32>
    %231 = vector.multi_reduction <add>, %230, %cst_101 [1] : vector<32x32xf32> to vector<32xf32>
    %232 = vector.shape_cast %231 : vector<32xf32> to vector<32x1xf32>
    %233 = tpu.reciprocal %232 {approx = true} : vector<32x1xf32> -> vector<32x1xf32>
    %234 = vector.broadcast %233 : vector<32x1xf32> to vector<32x32xf32>
    %235 = arith.mulf %230, %234 : vector<32x32xf32>
    %236 = arith.truncf %235 : vector<32x32xf32> to vector<32x32xbf16>
    %cst_102 = arith.constant dense<0.000000e+00> : vector<32x16xf32>
    %237 = tpu.matmul %236, %221, %cst_102 {dimension_numbers = #tpu.dot_dimension_numbers<[1], [0], [0], [1], [0, 0, 1, 1], [], []>} : vector<32x32xbf16>, vector<32x16xbf16>, vector<32x16xf32> -> vector<32x16xf32>
    %238 = tpu.concatenate %218, %237 in 1 : vector<32x16xf32>, vector<32x16xf32> -> vector<32x32xf32>
    %239 = arith.truncf %238 : vector<32x32xf32> to vector<32x32xbf16>
    %c1_103 = arith.constant 1 : index
    %c0_104 = arith.constant 0 : index
    %c0_105 = arith.constant 0 : index
    %240 = vector.load %arg10[%c1_103, %c0_104, %c0_105] : memref<2x32x32xbf16, #tpu.memory_space<vmem>>, vector<1x32x32xbf16>
    %241 = vector.shape_cast %240 : vector<1x32x32xbf16> to vector<32x32xbf16>
    %cst_106 = arith.constant dense<0.000000e+00> : vector<32x32xf32>
    %242 = tpu.matmul %239, %241, %cst_106 {dimension_numbers = #tpu.dot_dimension_numbers<[1], [0], [0], [1], [0, 0, 1, 1], [], []>} : vector<32x32xbf16>, vector<32x32xbf16>, vector<32x32xf32> -> vector<32x32xf32>
    %243 = arith.addf %157, %242 : vector<32x32xf32>
    %c1_107 = arith.constant 1 : index
    %c0_108 = arith.constant 0 : index
    %c0_109 = arith.constant 0 : index
    %244 = vector.load %arg11[%c1_107, %c0_108, %c0_109] : memref<2x1x32xf32, #tpu.memory_space<vmem>>, vector<1x1x32xf32>
    %245 = vector.shape_cast %244 : vector<1x1x32xf32> to vector<1x32xf32>
    %246 = vector.broadcast %245 : vector<1x32xf32> to vector<32x32xf32>
    %247 = arith.addf %243, %246 : vector<32x32xf32>
    %248 = vector.extract_strided_slice %159 {offsets = [1, 0, 0], sizes = [1, 1, 32], strides = [1, 1, 1]} : vector<2x1x32xf32> to vector<1x1x32xf32>
    %249 = vector.shape_cast %248 : vector<1x1x32xf32> to vector<1x32xf32>
    %250 = vector.extract_strided_slice %161 {offsets = [1, 0, 0], sizes = [1, 1, 32], strides = [1, 1, 1]} : vector<2x1x32xf32> to vector<1x1x32xf32>
    %251 = vector.shape_cast %250 : vector<1x1x32xf32> to vector<1x32xf32>
    %cst_110 = arith.constant dense<0.000000e+00> : vector<32xf32>
    %252 = vector.multi_reduction <add>, %247, %cst_110 [1] : vector<32x32xf32> to vector<32xf32>
    %253 = vector.shape_cast %252 : vector<32xf32> to vector<32x1xf32>
    %cst_111 = arith.constant 3.200000e+01 : f32
    %254 = vector.broadcast %cst_111 : f32 to vector<32x1xf32>
    %255 = arith.divf %253, %254 : vector<32x1xf32>
    %256 = vector.broadcast %255 : vector<32x1xf32> to vector<32x32xf32>
    %257 = arith.subf %247, %256 : vector<32x32xf32>
    %258 = arith.mulf %257, %257 : vector<32x32xf32>
    %cst_112 = arith.constant dense<0.000000e+00> : vector<32xf32>
    %259 = vector.multi_reduction <add>, %258, %cst_112 [1] : vector<32x32xf32> to vector<32xf32>
    %260 = vector.shape_cast %259 : vector<32xf32> to vector<32x1xf32>
    %cst_113 = arith.constant 3.200000e+01 : f32
    %261 = vector.broadcast %cst_113 : f32 to vector<32x1xf32>
    %262 = arith.divf %260, %261 : vector<32x1xf32>
    %cst_114 = arith.constant 9.99999974E-6 : f32
    %263 = vector.broadcast %cst_114 : f32 to vector<32x1xf32>
    %264 = arith.addf %262, %263 : vector<32x1xf32>
    %265 = math.rsqrt %264 : vector<32x1xf32>
    %266 = vector.broadcast %265 : vector<32x1xf32> to vector<32x32xf32>
    %267 = arith.mulf %257, %266 : vector<32x32xf32>
    %268 = vector.broadcast %249 : vector<1x32xf32> to vector<32x32xf32>
    %269 = arith.mulf %267, %268 : vector<32x32xf32>
    %270 = vector.broadcast %251 : vector<1x32xf32> to vector<32x32xf32>
    %271 = arith.addf %269, %270 : vector<32x32xf32>
    %272 = arith.truncf %271 : vector<32x32xf32> to vector<32x32xbf16>
    %c1_115 = arith.constant 1 : index
    %c0_116 = arith.constant 0 : index
    %c0_117 = arith.constant 0 : index
    %273 = vector.load %arg14[%c1_115, %c0_116, %c0_117] : memref<2x32x128xbf16, #tpu.memory_space<vmem>>, vector<1x32x128xbf16>
    %274 = vector.shape_cast %273 : vector<1x32x128xbf16> to vector<32x128xbf16>
    %cst_118 = arith.constant dense<0.000000e+00> : vector<32x128xf32>
    %275 = tpu.matmul %272, %274, %cst_118 {dimension_numbers = #tpu.dot_dimension_numbers<[1], [0], [0], [1], [0, 0, 1, 1], [], []>} : vector<32x32xbf16>, vector<32x128xbf16>, vector<32x128xf32> -> vector<32x128xf32>
    %c1_119 = arith.constant 1 : index
    %c0_120 = arith.constant 0 : index
    %c0_121 = arith.constant 0 : index
    %276 = vector.load %arg15[%c1_119, %c0_120, %c0_121] : memref<2x1x128xf32, #tpu.memory_space<vmem>>, vector<1x1x128xf32>
    %277 = vector.shape_cast %276 : vector<1x1x128xf32> to vector<1x128xf32>
    %278 = vector.broadcast %277 : vector<1x128xf32> to vector<32x128xf32>
    %279 = arith.addf %275, %278 : vector<32x128xf32>
    %cst_122 = arith.constant 5.000000e-01 : f32
    %280 = vector.broadcast %cst_122 : f32 to vector<32x128xf32>
    %281 = arith.mulf %280, %279 : vector<32x128xf32>
    %cst_123 = arith.constant 4.471500e-02 : f32
    %282 = vector.broadcast %cst_123 : f32 to vector<32x128xf32>
    %283 = arith.mulf %282, %279 : vector<32x128xf32>
    %284 = arith.mulf %283, %279 : vector<32x128xf32>
    %285 = arith.mulf %284, %279 : vector<32x128xf32>
    %286 = arith.addf %279, %285 : vector<32x128xf32>
    %cst_124 = arith.constant 0.797884583 : f32
    %287 = vector.broadcast %cst_124 : f32 to vector<32x128xf32>
    %288 = arith.mulf %287, %286 : vector<32x128xf32>
    %289 = math.tanh %288 : vector<32x128xf32>
    %cst_125 = arith.constant 1.000000e+00 : f32
    %290 = vector.broadcast %cst_125 : f32 to vector<32x128xf32>
    %291 = arith.addf %290, %289 : vector<32x128xf32>
    %292 = arith.mulf %281, %291 : vector<32x128xf32>
    %293 = arith.truncf %292 : vector<32x128xf32> to vector<32x128xbf16>
    %c1_126 = arith.constant 1 : index
    %c0_127 = arith.constant 0 : index
    %c0_128 = arith.constant 0 : index
    %294 = vector.load %arg16[%c1_126, %c0_127, %c0_128] : memref<2x128x32xbf16, #tpu.memory_space<vmem>>, vector<1x128x32xbf16>
    %295 = vector.shape_cast %294 : vector<1x128x32xbf16> to vector<128x32xbf16>
    %cst_129 = arith.constant dense<0.000000e+00> : vector<32x32xf32>
    %296 = tpu.matmul %293, %295, %cst_129 {dimension_numbers = #tpu.dot_dimension_numbers<[1], [0], [0], [1], [0, 0, 1, 1], [], []>} : vector<32x128xbf16>, vector<128x32xbf16>, vector<32x32xf32> -> vector<32x32xf32>
    %c1_130 = arith.constant 1 : index
    %c0_131 = arith.constant 0 : index
    %c0_132 = arith.constant 0 : index
    %297 = vector.load %arg17[%c1_130, %c0_131, %c0_132] : memref<2x1x32xf32, #tpu.memory_space<vmem>>, vector<1x1x32xf32>
    %298 = vector.shape_cast %297 : vector<1x1x32xf32> to vector<1x32xf32>
    %299 = vector.broadcast %298 : vector<1x32xf32> to vector<32x32xf32>
    %300 = arith.addf %296, %299 : vector<32x32xf32>
    %301 = arith.addf %247, %300 : vector<32x32xf32>
    %c0_133 = arith.constant 0 : index
    %c0_134 = arith.constant 0 : index
    %302 = vector.load %arg18[%c0_133, %c0_134] : memref<1x32xf32, #tpu.memory_space<vmem>>, vector<1x32xf32>
    %c0_135 = arith.constant 0 : index
    %c0_136 = arith.constant 0 : index
    %303 = vector.load %arg19[%c0_135, %c0_136] : memref<1x32xf32, #tpu.memory_space<vmem>>, vector<1x32xf32>
    %cst_137 = arith.constant dense<0.000000e+00> : vector<32xf32>
    %304 = vector.multi_reduction <add>, %301, %cst_137 [1] : vector<32x32xf32> to vector<32xf32>
    %305 = vector.shape_cast %304 : vector<32xf32> to vector<32x1xf32>
    %cst_138 = arith.constant 3.200000e+01 : f32
    %306 = vector.broadcast %cst_138 : f32 to vector<32x1xf32>
    %307 = arith.divf %305, %306 : vector<32x1xf32>
    %308 = vector.broadcast %307 : vector<32x1xf32> to vector<32x32xf32>
    %309 = arith.subf %301, %308 : vector<32x32xf32>
    %310 = arith.mulf %309, %309 : vector<32x32xf32>
    %cst_139 = arith.constant dense<0.000000e+00> : vector<32xf32>
    %311 = vector.multi_reduction <add>, %310, %cst_139 [1] : vector<32x32xf32> to vector<32xf32>
    %312 = vector.shape_cast %311 : vector<32xf32> to vector<32x1xf32>
    %cst_140 = arith.constant 3.200000e+01 : f32
    %313 = vector.broadcast %cst_140 : f32 to vector<32x1xf32>
    %314 = arith.divf %312, %313 : vector<32x1xf32>
    %cst_141 = arith.constant 9.99999974E-6 : f32
    %315 = vector.broadcast %cst_141 : f32 to vector<32x1xf32>
    %316 = arith.addf %314, %315 : vector<32x1xf32>
    %317 = math.rsqrt %316 : vector<32x1xf32>
    %318 = vector.broadcast %317 : vector<32x1xf32> to vector<32x32xf32>
    %319 = arith.mulf %309, %318 : vector<32x32xf32>
    %320 = vector.broadcast %302 : vector<1x32xf32> to vector<32x32xf32>
    %321 = arith.mulf %319, %320 : vector<32x32xf32>
    %322 = vector.broadcast %303 : vector<1x32xf32> to vector<32x32xf32>
    %323 = arith.addf %321, %322 : vector<32x32xf32>
    %324 = arith.truncf %323 : vector<32x32xf32> to vector<32x32xbf16>
    %c0_142 = arith.constant 0 : index
    %c0_143 = arith.constant 0 : index
    %325 = vector.load %arg20[%c0_142, %c0_143] : memref<32x128xbf16, #tpu.memory_space<vmem>>, vector<32x128xbf16>
    %cst_144 = arith.constant dense<0.000000e+00> : vector<32x128xf32>
    %326 = tpu.matmul %324, %325, %cst_144 {dimension_numbers = #tpu.dot_dimension_numbers<[1], [0], [0], [1], [0, 0, 1, 1], [], []>} : vector<32x32xbf16>, vector<32x128xbf16>, vector<32x128xf32> -> vector<32x128xf32>
    %c0_145 = arith.constant 0 : index
    %c0_146 = arith.constant 0 : index
    %327 = vector.load %arg21[%c0_145, %c0_146] : memref<1x128xf32, #tpu.memory_space<vmem>>, vector<1x128xf32>
    %328 = vector.broadcast %327 : vector<1x128xf32> to vector<32x128xf32>
    %329 = arith.addf %326, %328 : vector<32x128xf32>
    %c0_147 = arith.constant 0 : index
    %c0_148 = arith.constant 0 : index
    %330 = vector.load %arg22[%c0_147, %c0_148] : memref<32x128xf32, #tpu.memory_space<vmem>>, vector<32x128xf32>
    tpu.vector_store %arg22[%c0_147, %c0_148], %329 {strides = array<i32>} : memref<32x128xf32, #tpu.memory_space<vmem>>, vector<32x128xf32>,
    return
  }
  func.func @transform_0(%arg0: i32) -> (i32, i32) {
    %c0_i32 = arith.constant 0 : i32
    %c0_i32_0 = arith.constant 0 : i32
    return %arg0, %c0_i32 : i32, i32
  }
  func.func @transform_1(%arg0: i32) -> (i32, i32) {
    %c0_i32 = arith.constant 0 : i32
    %c0_i32_0 = arith.constant 0 : i32
    return %arg0, %c0_i32 : i32, i32
  }
  func.func @transform_2(%arg0: i32) -> (i32, i32) {
    %c0_i32 = arith.constant 0 : i32
    %c0_i32_0 = arith.constant 0 : i32
    %c0_i32_1 = arith.constant 0 : i32
    return %c0_i32, %c0_i32_0 : i32, i32
  }
  func.func @transform_3(%arg0: i32) -> (i32, i32) {
    %c0_i32 = arith.constant 0 : i32
    %c0_i32_0 = arith.constant 0 : i32
    %c0_i32_1 = arith.constant 0 : i32
    return %c0_i32, %c0_i32_0 : i32, i32
  }
  func.func @transform_4(%arg0: i32) -> (i32, i32) {
    %c0_i32 = arith.constant 0 : i32
    %c0_i32_0 = arith.constant 0 : i32
    %c0_i32_1 = arith.constant 0 : i32
    return %c0_i32, %c0_i32_0 : i32, i32
  }
  func.func @transform_5(%arg0: i32) -> (i32, i32) {
    %c0_i32 = arith.constant 0 : i32
    %c0_i32_0 = arith.constant 0 : i32
    %c0_i32_1 = arith.constant 0 : i32
    return %c0_i32, %c0_i32_0 : i32, i32
  }
  func.func @transform_6(%arg0: i32) -> (i32, i32) {
    %c0_i32 = arith.constant 0 : i32
    %c0_i32_0 = arith.constant 0 : i32
    %c0_i32_1 = arith.constant 0 : i32
    return %c0_i32, %c0_i32_0 : i32, i32
  }
  func.func @transform_7(%arg0: i32) -> (i32, i32, i32) {
    %c0_i32 = arith.constant 0 : i32
    %c0_i32_0 = arith.constant 0 : i32
    %c0_i32_1 = arith.constant 0 : i32
    %c0_i32_2 = arith.constant 0 : i32
    return %c0_i32, %c0_i32_0, %c0_i32_1 : i32, i32, i32
  }
  func.func @transform_8(%arg0: i32) -> (i32, i32, i32) {
    %c0_i32 = arith.constant 0 : i32
    %c0_i32_0 = arith.constant 0 : i32
    %c0_i32_1 = arith.constant 0 : i32
    %c0_i32_2 = arith.constant 0 : i32
    return %c0_i32, %c0_i32_0, %c0_i32_1 : i32, i32, i32
  }
  func.func @transform_9(%arg0: i32) -> (i32, i32, i32) {
    %c0_i32 = arith.constant 0 : i32
    %c0_i32_0 = arith.constant 0 : i32
    %c0_i32_1 = arith.constant 0 : i32
    %c0_i32_2 = arith.constant 0 : i32
    return %c0_i32, %c0_i32_0, %c0_i32_1 : i32, i32, i32
  }
  func.func @transform_10(%arg0: i32) -> (i32, i32, i32) {
    %c0_i32 = arith.constant 0 : i32
    %c0_i32_0 = arith.constant 0 : i32
    %c0_i32_1 = arith.constant 0 : i32
    %c0_i32_2 = arith.constant 0 : i32
    return %c0_i32, %c0_i32_0, %c0_i32_1 : i32, i32, i32
  }
  func.func @transform_11(%arg0: i32) -> (i32, i32, i32, i32) {
    %c0_i32 = arith.constant 0 : i32
    %c0_i32_0 = arith.constant 0 : i32
    %c0_i32_1 = arith.constant 0 : i32
    %c0_i32_2 = arith.constant 0 : i32
    %c0_i32_3 = arith.constant 0 : i32
    return %c0_i32, %c0_i32_0, %c0_i32_1, %c0_i32_2 : i32, i32, i32, i32
  }
  func.func @transform_12(%arg0: i32) -> (i32, i32, i32, i32) {
    %c0_i32 = arith.constant 0 : i32
    %c0_i32_0 = arith.constant 0 : i32
    %c0_i32_1 = arith.constant 0 : i32
    %c0_i32_2 = arith.constant 0 : i32
    %c0_i32_3 = arith.constant 0 : i32
    return %c0_i32, %c0_i32_0, %c0_i32_1, %c0_i32_2 : i32, i32, i32, i32
  }
  func.func @transform_13(%arg0: i32) -> (i32, i32, i32) {
    %c0_i32 = arith.constant 0 : i32
    %c0_i32_0 = arith.constant 0 : i32
    %c0_i32_1 = arith.constant 0 : i32
    %c0_i32_2 = arith.constant 0 : i32
    return %c0_i32, %c0_i32_0, %c0_i32_1 : i32, i32, i32
  }
  func.func @transform_14(%arg0: i32) -> (i32, i32, i32) {
    %c0_i32 = arith.constant 0 : i32
    %c0_i32_0 = arith.constant 0 : i32
    %c0_i32_1 = arith.constant 0 : i32
    %c0_i32_2 = arith.constant 0 : i32
    return %c0_i32, %c0_i32_0, %c0_i32_1 : i32, i32, i32
  }
  func.func @transform_15(%arg0: i32) -> (i32, i32, i32) {
    %c0_i32 = arith.constant 0 : i32
    %c0_i32_0 = arith.constant 0 : i32
    %c0_i32_1 = arith.constant 0 : i32
    %c0_i32_2 = arith.constant 0 : i32
    return %c0_i32, %c0_i32_0, %c0_i32_1 : i32, i32, i32
  }
  func.func @transform_16(%arg0: i32) -> (i32, i32, i32) {
    %c0_i32 = arith.constant 0 : i32
    %c0_i32_0 = arith.constant 0 : i32
    %c0_i32_1 = arith.constant 0 : i32
    %c0_i32_2 = arith.constant 0 : i32
    return %c0_i32, %c0_i32_0, %c0_i32_1 : i32, i32, i32
  }
  func.func @transform_17(%arg0: i32) -> (i32, i32) {
    %c0_i32 = arith.constant 0 : i32
    %c0_i32_0 = arith.constant 0 : i32
    %c0_i32_1 = arith.constant 0 : i32
    return %c0_i32, %c0_i32_0 : i32, i32
  }
  func.func @transform_18(%arg0: i32) -> (i32, i32) {
    %c0_i32 = arith.constant 0 : i32
    %c0_i32_0 = arith.constant 0 : i32
    %c0_i32_1 = arith.constant 0 : i32
    return %c0_i32, %c0_i32_0 : i32, i32
  }
  func.func @transform_19(%arg0: i32) -> (i32, i32) {
    %c0_i32 = arith.constant 0 : i32
    %c0_i32_0 = arith.constant 0 : i32
    %c0_i32_1 = arith.constant 0 : i32
    return %c0_i32, %c0_i32_0 : i32, i32
  }
  func.func @transform_20(%arg0: i32) -> (i32, i32) {
    %c0_i32 = arith.constant 0 : i32
    %c0_i32_0 = arith.constant 0 : i32
    %c0_i32_1 = arith.constant 0 : i32
    return %c0_i32, %c0_i32_0 : i32, i32
  }
  func.func @transform_21(%arg0: i32) -> (i32, i32) {
    %c0_i32 = arith.constant 0 : i32
    %c0_i32_0 = arith.constant 0 : i32
    return %arg0, %c0_i32 : i32, i32
  }
}

</mosaic_0001>

<llo_original>
// kernel: tpu_custom_call.1
$region0: #{tpu_custom_call.1}
  #allocation0 [shape = 'u32[]', space=smem, size = 0x4, offset = 0x4, fixed_abs, tag = 'smem constant byte address 0x4 - core index']
  #allocation1 [shape = 'u32[144,128]{1,0:T(1,128)}', space=vmem, size = 0x12000, scoped, tag = 'internal scratch']
  %s0 = inlined_call_operand.vmem [shape: bf16[32,128], index: 0, kind: input, shape index: {}]
  %s1 = inlined_call_operand.vmem [shape: f32[32,4], index: 1, kind: input, shape index: {}]
  %s2 = inlined_call_operand.vmem [shape: f32[32,32], index: 2, kind: input, shape index: {}]
  %s3 = inlined_call_operand.vmem [shape: f32[16,32], index: 3, kind: input, shape index: {}]
  %s4 = inlined_call_operand.vmem [shape: bf16[128,32], index: 4, kind: input, shape index: {}]
  %s5 = inlined_call_operand.vmem [shape: f32[4,32], index: 5, kind: input, shape index: {}]
  %s6 = inlined_call_operand.vmem [shape: f32[1,32], index: 6, kind: input, shape index: {}]
  %s7 = inlined_call_operand.vmem [shape: bf16[2,32,96], index: 7, kind: input, shape index: {}]
  %s8 = inlined_call_operand.vmem [shape: f32[2,1,96], index: 8, kind: input, shape index: {}]
  %s9 = inlined_call_operand.vmem [shape: bf16[2,32,32], index: 9, kind: input, shape index: {}]
  %s10 = inlined_call_operand.vmem [shape: f32[2,1,32], index: 10, kind: input, shape index: {}]
  %s11 = inlined_call_operand.vmem [shape: f32[2,2,1,32], index: 11, kind: input, shape index: {}]
  %s12 = inlined_call_operand.vmem [shape: f32[2,2,1,32], index: 12, kind: input, shape index: {}]
  %s13 = inlined_call_operand.vmem [shape: bf16[2,32,128], index: 13, kind: input, shape index: {}]
  %s14 = inlined_call_operand.vmem [shape: f32[2,1,128], index: 14, kind: input, shape index: {}]
  %s15 = inlined_call_operand.vmem [shape: bf16[2,128,32], index: 15, kind: input, shape index: {}]
  %s16 = inlined_call_operand.vmem [shape: f32[2,1,32], index: 16, kind: input, shape index: {}]
  %s17 = inlined_call_operand.vmem [shape: f32[1,32], index: 17, kind: input, shape index: {}]
  %s18 = inlined_call_operand.vmem [shape: f32[1,32], index: 18, kind: input, shape index: {}]
  %s19 = inlined_call_operand.vmem [shape: bf16[32,128], index: 19, kind: input, shape index: {}]
  %s20 = inlined_call_operand.vmem [shape: f32[1,128], index: 20, kind: input, shape index: {}]
  %s21 = inlined_call_operand.hbm [shape: f32[32,128], index: 21, kind: output, shape index: {}]
  %s22 = sld [smem:[#allocation0]]
  $region94: #{tpu_custom_call.1} parent=0
    _
  %s24 = ssub.s32 1, %s22
  %s25 = scalar_select 0, %s24, %s22
  $region1: #{tpu_custom_call.1} parent=0
    #allocation2 [shape = 'u8[16384]{0}', space=vmem, size = 0x4000, scoped, tag = 'output window, operand 0, single buffered']
    #allocation3 [shape = 's32[1]{0}', space=sflag, size = 0x4, scoped, tag = 'scoped memory for tpu_custom_call.1']
    %26 = vsyncpa [#allocation3], 0
    // Predicated region
    $region2: #{tpu_custom_call.1} parent=1 // pred_check
      _
    $region3: #{tpu_custom_call.1} parent=1 // pred_check_branch
      %28 = sbr.rel (0) target = $region5
    $region4: #{tpu_custom_call.1} parent=1 // pred_region
      _
    $region5: #{tpu_custom_call.1} parent=1 // pred_fallthru
      _
    // Predicated region
    $region6: #{tpu_custom_call.1} parent=1 // pred_check
      _
    $region7: #{tpu_custom_call.1} parent=1 // pred_check_branch
      %30 = sbr.rel (0) target = $region9
    $region8: #{tpu_custom_call.1} parent=1 // pred_region
      _
    $region9: #{tpu_custom_call.1} parent=1 // pred_fallthru
      _
    // Predicated region
    $region10: #{tpu_custom_call.1} parent=1 // pred_check
      _
    $region11: #{tpu_custom_call.1} parent=1 // pred_check_branch
      %32 = sbr.rel (0) target = $region13
    $region12: #{tpu_custom_call.1} parent=1 // pred_region
      _
    $region13: #{tpu_custom_call.1} parent=1 // pred_fallthru
      _
    // Predicated region
    $region14: #{tpu_custom_call.1} parent=1 // pred_check
      _
    $region15: #{tpu_custom_call.1} parent=1 // pred_check_branch
      %34 = sbr.rel (0) target = $region17
    $region16: #{tpu_custom_call.1} parent=1 // pred_region
      _
    $region17: #{tpu_custom_call.1} parent=1 // pred_fallthru
      _
    // Predicated region
    $region18: #{tpu_custom_call.1} parent=1 // pred_check
      _
    $region19: #{tpu_custom_call.1} parent=1 // pred_check_branch
      %36 = sbr.rel (0) target = $region21
    $region20: #{tpu_custom_call.1} parent=1 // pred_region
      _
    $region21: #{tpu_custom_call.1} parent=1 // pred_fallthru
      _
    // Predicated region
    $region22: #{tpu_custom_call.1} parent=1 // pred_check
      _
    $region23: #{tpu_custom_call.1} parent=1 // pred_check_branch
      %38 = sbr.rel (0) target = $region25
    $region24: #{tpu_custom_call.1} parent=1 // pred_region
      _
    $region25: #{tpu_custom_call.1} parent=1 // pred_fallthru
      _
    // Predicated region
    $region26: #{tpu_custom_call.1} parent=1 // pred_check
      _
    $region27: #{tpu_custom_call.1} parent=1 // pred_check_branch
      %40 = sbr.rel (0) target = $region29
    $region28: #{tpu_custom_call.1} parent=1 // pred_region
      _
    $region29: #{tpu_custom_call.1} parent=1 // pred_fallthru
      _
    // Predicated region
    $region30: #{tpu_custom_call.1} parent=1 // pred_check
      _
    $region31: #{tpu_custom_call.1} parent=1 // pred_check_branch
      %42 = sbr.rel (0) target = $region33
    $region32: #{tpu_custom_call.1} parent=1 // pred_region
      _
    $region33: #{tpu_custom_call.1} parent=1 // pred_fallthru
      _
    // Predicated region
    $region34: #{tpu_custom_call.1} parent=1 // pred_check
      _
    $region35: #{tpu_custom_call.1} parent=1 // pred_check_branch
      %44 = sbr.rel (0) target = $region37
    $region36: #{tpu_custom_call.1} parent=1 // pred_region
      _
    $region37: #{tpu_custom_call.1} parent=1 // pred_fallthru
      _
    // Predicated region
    $region38: #{tpu_custom_call.1} parent=1 // pred_check
      _
    $region39: #{tpu_custom_call.1} parent=1 // pred_check_branch
      %46 = sbr.rel (0) target = $region41
    $region40: #{tpu_custom_call.1} parent=1 // pred_region
      _
    $region41: #{tpu_custom_call.1} parent=1 // pred_fallthru
      _
    // Predicated region
    $region42: #{tpu_custom_call.1} parent=1 // pred_check
      _
    $region43: #{tpu_custom_call.1} parent=1 // pred_check_branch
      %48 = sbr.rel (0) target = $region45
    $region44: #{tpu_custom_call.1} parent=1 // pred_region
      _
    $region45: #{tpu_custom_call.1} parent=1 // pred_fallthru
      _
    // Predicated region
    $region46: #{tpu_custom_call.1} parent=1 // pred_check
      _
    $region47: #{tpu_custom_call.1} parent=1 // pred_check_branch
      %50 = sbr.rel (0) target = $region49
    $region48: #{tpu_custom_call.1} parent=1 // pred_region
      _
    $region49: #{tpu_custom_call.1} parent=1 // pred_fallthru
      _
    // Predicated region
    $region50: #{tpu_custom_call.1} parent=1 // pred_check
      _
    $region51: #{tpu_custom_call.1} parent=1 // pred_check_branch
      %52 = sbr.rel (0) target = $region53
    $region52: #{tpu_custom_call.1} parent=1 // pred_region
      _
    $region53: #{tpu_custom_call.1} parent=1 // pred_fallthru
      _
    // Predicated region
    $region54: #{tpu_custom_call.1} parent=1 // pred_check
      _
    $region55: #{tpu_custom_call.1} parent=1 // pred_check_branch
      %54 = sbr.rel (0) target = $region57
    $region56: #{tpu_custom_call.1} parent=1 // pred_region
      _
    $region57: #{tpu_custom_call.1} parent=1 // pred_fallthru
      _
    // Predicated region
    $region58: #{tpu_custom_call.1} parent=1 // pred_check
      _
    $region59: #{tpu_custom_call.1} parent=1 // pred_check_branch
      %56 = sbr.rel (0) target = $region61
    $region60: #{tpu_custom_call.1} parent=1 // pred_region
      _
    $region61: #{tpu_custom_call.1} parent=1 // pred_fallthru
      _
    // Predicated region
    $region62: #{tpu_custom_call.1} parent=1 // pred_check
      _
    $region63: #{tpu_custom_call.1} parent=1 // pred_check_branch
      %58 = sbr.rel (0) target = $region65
    $region64: #{tpu_custom_call.1} parent=1 // pred_region
      _
    $region65: #{tpu_custom_call.1} parent=1 // pred_fallthru
      _
    // Predicated region
    $region66: #{tpu_custom_call.1} parent=1 // pred_check
      _
    $region67: #{tpu_custom_call.1} parent=1 // pred_check_branch
      %60 = sbr.rel (0) target = $region69
    $region68: #{tpu_custom_call.1} parent=1 // pred_region
      _
    $region69: #{tpu_custom_call.1} parent=1 // pred_fallthru
      _
    // Predicated region
    $region70: #{tpu_custom_call.1} parent=1 // pred_check
      _
    $region71: #{tpu_custom_call.1} parent=1 // pred_check_branch
      %62 = sbr.rel (0) target = $region73
    $region72: #{tpu_custom_call.1} parent=1 // pred_region
      _
    $region73: #{tpu_custom_call.1} parent=1 // pred_fallthru
      _
    // Predicated region
    $region74: #{tpu_custom_call.1} parent=1 // pred_check
      _
    $region75: #{tpu_custom_call.1} parent=1 // pred_check_branch
      %64 = sbr.rel (0) target = $region77
    $region76: #{tpu_custom_call.1} parent=1 // pred_region
      _
    $region77: #{tpu_custom_call.1} parent=1 // pred_fallthru
      _
    // Predicated region
    $region78: #{tpu_custom_call.1} parent=1 // pred_check
      _
    $region79: #{tpu_custom_call.1} parent=1 // pred_check_branch
      %66 = sbr.rel (0) target = $region81
    $region80: #{tpu_custom_call.1} parent=1 // pred_region
      _
    $region81: #{tpu_custom_call.1} parent=1 // pred_fallthru
      _
    // Predicated region
    $region82: #{tpu_custom_call.1} parent=1 // pred_check
      _
    $region83: #{tpu_custom_call.1} parent=1 // pred_check_branch
      %68 = sbr.rel (0) target = $region85
    $region84: #{tpu_custom_call.1} parent=1 // pred_region
      _
    $region85: #{tpu_custom_call.1} parent=1 // pred_fallthru
      _
    %v70 = vld [vmem:[%s0] sm:$0xf]
    %v71 = vld [vmem:[%s0 + $0x4] sm:$0xf]
    %v72 = vld [vmem:[%s0 + $0x8] sm:$0xf]
    %v73 = vld [vmem:[%s0 + $0xc] sm:$0xf]
    %v74 = vld [vmem:[%s4] sm:$0xf]
    %v75 = vld [vmem:[%s4 + $0x4] sm:$0xf]
    %v76 = vld [vmem:[%s4 + $0x8] sm:$0xf]
    %v77 = vld [vmem:[%s4 + $0xc] sm:$0xf]
    %v78 = vld [vmem:[%s4 + $0x10] sm:$0xf]
    %v79 = vld [vmem:[%s4 + $0x14] sm:$0xf]
    %v80 = vld [vmem:[%s4 + $0x18] sm:$0xf]
    %v81 = vld [vmem:[%s4 + $0x1c] sm:$0xf]
    %v82 = vld [vmem:[%s4 + $0x20] sm:$0xf]
    %v83 = vld [vmem:[%s4 + $0x24] sm:$0xf]
    %v84 = vld [vmem:[%s4 + $0x28] sm:$0xf]
    %v85 = vld [vmem:[%s4 + $0x2c] sm:$0xf]
    %v86 = vld [vmem:[%s4 + $0x30] sm:$0xf]
    %v87 = vld [vmem:[%s4 + $0x34] sm:$0xf]
    %v88 = vld [vmem:[%s4 + $0x38] sm:$0xf]
    %v89 = vld [vmem:[%s4 + $0x3c] sm:$0xf]
    %v90 = vld [vmem:[%s1] sm:$0xff]
    %v91 = vld [vmem:[%s1 + $0x8] sm:$0xff]
    %v92 = vld [vmem:[%s1 + $0x10] sm:$0xff]
    %v93 = vld [vmem:[%s1 + $0x18] sm:$0xff]
    %v94 = vld [vmem:[%s5] sm:$0xf]
    %v95 = vld [vmem:[%s6] sm:$0x1]
    %v97 = vlaneseq
    %v98 = vshrl.u32 %v97, 7
    %v99 = vsub.s32 0, %v98
    %v100 = vrot.slane %v95, %v99
    %vm102 = vcmask 31744
    %v104 = vsel %vm102, %v90, 0
    %v107 = vsel %vm102, %v91, 0
    %v110 = vsel %vm102, %v92, 0
    %v113 = vsel %vm102, %v93, 0
    %vm115 = vcmask 1043456
    %v117 = vsel %vm115, %v94, 0
    %119 = vmatprep.subr.mxu0 0.0
    %120 = vmatpush1.msra.mxu0 %v117
    %121 = vmatprep.subr.mxu0 0.0
    %122 = vmatpush1.msra.mxu0 0.0
    %123 = vmatprep.subr.mxu0 0.0
    %124 = vmatpush1.msra.mxu0 0.0
    %125 = vmatprep.subr.mxu0 0.0
    %126 = vmatpush1.msra.mxu0 0.0
    %127 = vmatprep.subr.mxu0 0.0
    %128 = vmatpush1.msra.mxu0 0.0
    %129 = vmatprep.subr.mxu0 0.0
    %130 = vmatpush1.msra.mxu0 0.0
    %131 = vmatprep.subr.mxu0 0.0
    %132 = vmatpush1.msra.mxu0 0.0
    %133 = vmatprep.subr.mxu0 0.0
    %134 = vmatpush1.msra.mxu0 0.0
    %135 = vmatprep.subr.mxu0 0.0
    %136 = vmatpush1.msra.mxu0 0.0
    %137 = vmatprep.subr.mxu0 0.0
    %138 = vmatpush1.msra.mxu0 0.0
    %139 = vmatprep.subr.mxu0 0.0
    %140 = vmatpush1.msra.mxu0 0.0
    %141 = vmatprep.subr.mxu0 0.0
    %142 = vmatpush1.msra.mxu0 0.0
    %143 = vmatprep.subr.mxu0 0.0
    %144 = vmatpush1.msra.mxu0 0.0
    %145 = vmatprep.subr.mxu0 0.0
    %146 = vmatpush1.msra.mxu0 0.0
    %147 = vmatprep.subr.mxu0 0.0
    %148 = vmatpush1.msra.mxu0 0.0
    %149 = vmatprep.subr.mxu0 0.0
    %150 = vmatpush1.msra.mxu0 0.0
    %151 = vmatprep.subr.mxu0 0.0
    %152 = vmatpush1.msra.mxu0 0.0
    %153 = vmatprep.subr.mxu0 0.0
    %154 = vmatpush1.msra.mxu0 0.0
    %155 = vmatprep.subr.mxu0 0.0
    %156 = vmatpush1.msra.mxu0 0.0
    %157 = vmatprep.subr.mxu0 0.0
    %158 = vmatpush1.msra.mxu0 0.0
    %159 = vmatprep.subr.mxu0 0.0
    %160 = vmatpush1.msra.mxu0 0.0
    %161 = vmatprep.subr.mxu0 0.0
    %162 = vmatpush1.msra.mxu0 0.0
    %163 = vmatprep.subr.mxu0 0.0
    %164 = vmatpush1.msra.mxu0 0.0
    %165 = vmatprep.subr.mxu0 0.0
    %166 = vmatpush1.msra.mxu0 0.0
    %167 = vmatprep.subr.mxu0 0.0
    %168 = vmatpush1.msra.mxu0 0.0
    %169 = vmatprep.subr.mxu0 0.0
    %170 = vmatpush1.msra.mxu0 0.0
    %171 = vmatprep.subr.mxu0 0.0
    %172 = vmatpush1.msra.mxu0 0.0
    %173 = vmatprep.subr.mxu0 0.0
    %174 = vmatpush1.msra.mxu0 0.0
    %175 = vmatprep.subr.mxu0 0.0
    %176 = vmatpush1.msra.mxu0 0.0
    %177 = vmatprep.subr.mxu0 0.0
    %178 = vmatpush1.msra.mxu0 0.0
    %179 = vmatprep.subr.mxu0 0.0
    %180 = vmatpush1.msra.mxu0 0.0
    %181 = vmatprep.subr.mxu0 0.0
    %182 = vmatpush1.msra.mxu0 0.0
    %183 = vmatprep.mubr.f32.mxu0 0.0
    %184 = vmatmul.mubr.f32.gmra.mrb[0].mxu0 %v104
    %v185 = vpop.f32.mrb[0].mxu0
    %v186 = vadd.f32 %v100, %v185
    %v187 = vpop.f32.mrb[0].mxu0
    %188 = vmatprep.mubr.f32.mxu0 0.0
    %189 = vmatmul.mubr.f32.gmra.mrb[0].mxu0 %v107
    %v190 = vpop.f32.mrb[0].mxu0
    %v191 = vadd.f32 %v100, %v190
    %v192 = vpop.f32.mrb[0].mxu0
    %193 = vmatprep.mubr.f32.mxu0 0.0
    %194 = vmatmul.mubr.f32.gmra.mrb[0].mxu0 %v110
    %v195 = vpop.f32.mrb[0].mxu0
    %v196 = vadd.f32 %v100, %v195
    %v197 = vpop.f32.mrb[0].mxu0
    %198 = vmatprep.mubr.f32.mxu0 0.0
    %199 = vmatmul.mubr.f32.gmra.mrb[0].mxu0 %v113
    %v200 = vpop.f32.mrb[0].mxu0
    %v201 = vadd.f32 %v100, %v200
    %v202 = vpop.f32.mrb[0].mxu0
    %203 = vdwg.mxu0
    %v204 = vld [vmem:[%s3] sm:$0xff]
    %v205 = vld [vmem:[%s3 + $0x8] sm:$0xff]
    %v210 = vunpack.c.l.b16 %v70
    %v211 = vunpack.c.l.b16 %v71
    %v212 = vunpack.c.l.b16 %v72
    %v213 = vunpack.c.l.b16 %v73
    %v214 = vpack.c.b16 %v211, %v210
    %v215 = vpack.c.b16 %v213, %v212
    %v234 = vunpack.c.l.b16 %v74
    %v235 = vunpack.c.l.b16 %v75
    %v236 = vunpack.c.l.b16 %v76
    %v237 = vunpack.c.l.b16 %v77
    %v238 = vunpack.c.l.b16 %v78
    %v239 = vunpack.c.l.b16 %v79
    %v240 = vunpack.c.l.b16 %v80
    %v241 = vunpack.c.l.b16 %v81
    %v242 = vunpack.c.l.b16 %v82
    %v243 = vunpack.c.l.b16 %v83
    %v244 = vunpack.c.l.b16 %v84
    %v245 = vunpack.c.l.b16 %v85
    %v246 = vunpack.c.l.b16 %v86
    %v247 = vunpack.c.l.b16 %v87
    %v248 = vunpack.c.l.b16 %v88
    %v249 = vunpack.c.l.b16 %v89
    %v250 = vpack.c.b16 %v235, %v234
    %v251 = vpack.c.b16 %v237, %v236
    %v252 = vpack.c.b16 %v239, %v238
    %v253 = vpack.c.b16 %v241, %v240
    %v254 = vpack.c.b16 %v243, %v242
    %v255 = vpack.c.b16 %v245, %v244
    %v256 = vpack.c.b16 %v247, %v246
    %v257 = vpack.c.b16 %v249, %v248
    %266 = vmatprep.subr.bf16.mxu0 0
    %267 = vmatpush1.bf16.msra.mxu0 %v250
    %268 = vmatprep.subr.bf16.mxu0 0
    %269 = vmatpush1.bf16.msra.mxu0 %v251
    %270 = vmatprep.subr.bf16.mxu0 0
    %271 = vmatpush1.bf16.msra.mxu0 %v252
    %272 = vmatprep.subr.bf16.mxu0 0
    %273 = vmatpush1.bf16.msra.mxu0 %v253
    %274 = vmatprep.subr.bf16.mxu0 0
    %275 = vmatpush1.bf16.msra.mxu0 %v254
    %276 = vmatprep.subr.bf16.mxu0 0
    %277 = vmatpush1.bf16.msra.mxu0 %v255
    %278 = vmatprep.subr.bf16.mxu0 0
    %279 = vmatpush1.bf16.msra.mxu0 %v256
    %280 = vmatprep.subr.bf16.mxu0 0
    %281 = vmatpush1.bf16.msra.mxu0 %v257
    %282 = vmatprep.subr.bf16.mxu0 0
    %283 = vmatpush1.bf16.msra.mxu0 0
    %284 = vmatprep.subr.bf16.mxu0 0
    %285 = vmatpush1.bf16.msra.mxu0 0
    %286 = vmatprep.subr.bf16.mxu0 0
    %287 = vmatpush1.bf16.msra.mxu0 0
    %288 = vmatprep.subr.bf16.mxu0 0
    %289 = vmatpush1.bf16.msra.mxu0 0
    %290 = vmatprep.subr.bf16.mxu0 0
    %291 = vmatpush1.bf16.msra.mxu0 0
    %292 = vmatprep.subr.bf16.mxu0 0
    %293 = vmatpush1.bf16.msra.mxu0 0
    %294 = vmatprep.subr.bf16.mxu0 0
    %295 = vmatpush1.bf16.msra.mxu0 0
    %296 = vmatprep.subr.bf16.mxu0 0
    %297 = vmatpush1.bf16.msra.mxu0 0
    %298 = vmatprep.mubr.bf16.mxu0 0
    %299 = vmatmul.mubr.bf16.gmra.mrb[0].mxu0 %v214
    %v300 = vpop.f32.mrb[0].mxu0
    %v301 = vadd.f32 %v204, %v300
    %v302 = vpop.f32.mrb[0].mxu0
    %v303 = vpop.f32.mrb[0].mxu0
    %v304 = vadd.f32 %v205, %v303
    %v305 = vpop.f32.mrb[0].mxu0
    %306 = vmatprep.mubr.bf16.mxu0 0
    %307 = vmatmul.mubr.bf16.gmra.mrb[0].mxu0 %v215
    %v308 = vpop.f32.mrb[0].mxu0
    %v309 = vadd.f32 %v204, %v308
    %v310 = vpop.f32.mrb[0].mxu0
    %v311 = vpop.f32.mrb[0].mxu0
    %v312 = vadd.f32 %v205, %v311
    %v313 = vpop.f32.mrb[0].mxu0
    %314 = vdwg.mxu0
    %v315 = vadd.f32 %v301, %v186
    %v316 = vadd.f32 %v304, %v191
    %v317 = vadd.f32 %v309, %v196
    %v318 = vadd.f32 %v312, %v201
    %v319 = vld [vmem:[%s2] sm:$0xff]
    %v320 = vld [vmem:[%s2 + $0x8] sm:$0xff]
    %v321 = vld [vmem:[%s2 + $0x10] sm:$0xff]
    %v322 = vld [vmem:[%s2 + $0x18] sm:$0xff]
    %v323 = vld [vmem:[%s11] sm:$0x1]
    %v324 = vld [vmem:[%s11 + $0x1] sm:$0x1]
    %v325 = vld [vmem:[%s12] sm:$0x1]
    %v326 = vld [vmem:[%s12 + $0x1] sm:$0x1]
    %vm327 = vcmask 261120
    %v328 = vsel %vm327, %v315, 0.0
    %329 = vadd.xlane.f32.xlu0 %v328
    %v330 = vpop.xlane.xlu0 %329
    %v331 = vsel %vm327, %v316, 0.0
    %332 = vadd.xlane.f32.xlu0 %v331
    %v333 = vpop.xlane.xlu0 %332
    %v334 = vsel %vm327, %v317, 0.0
    %335 = vadd.xlane.f32.xlu0 %v334
    %v336 = vpop.xlane.xlu0 %335
    %v337 = vsel %vm327, %v318, 0.0
    %338 = vadd.xlane.f32.xlu0 %v337
    %v339 = vpop.xlane.xlu0 %338
    %v340 = vrcp.pop 32.0
    %v341 = vmul.f32 %v330, %v340
    %v342 = vmul.f32 %v333, %v340
    %v343 = vmul.f32 %v336, %v340
    %v344 = vmul.f32 %v339, %v340
    %v345 = vsub.f32 %v315, %v341
    %v346 = vsub.f32 %v316, %v342
    %v347 = vsub.f32 %v317, %v343
    %v348 = vsub.f32 %v318, %v344
    %v349 = vmul.f32 %v345, %v345
    %v350 = vmul.f32 %v346, %v346
    %v351 = vmul.f32 %v347, %v347
    %v352 = vmul.f32 %v348, %v348
    %v353 = vsel %vm327, %v349, 0.0
    %354 = vadd.xlane.f32.xlu0 %v353
    %v355 = vpop.xlane.xlu0 %354
    %v356 = vsel %vm327, %v350, 0.0
    %357 = vadd.xlane.f32.xlu0 %v356
    %v358 = vpop.xlane.xlu0 %357
    %v359 = vsel %vm327, %v351, 0.0
    %360 = vadd.xlane.f32.xlu0 %v359
    %v361 = vpop.xlane.xlu0 %360
    %v362 = vsel %vm327, %v352, 0.0
    %363 = vadd.xlane.f32.xlu0 %v362
    %v364 = vpop.xlane.xlu0 %363
    %v365 = vmul.f32 %v355, %v340
    %v366 = vmul.f32 %v358, %v340
    %v367 = vmul.f32 %v361, %v340
    %v368 = vmul.f32 %v364, %v340
    %v369 = vadd.f32 %v365, 1e-05
    %v370 = vadd.f32 %v366, 1e-05
    %v371 = vadd.f32 %v367, 1e-05
    %v372 = vadd.f32 %v368, 1e-05
    %v373 = vrsqrt.pop %v369
    %v374 = vrsqrt.pop %v370
    %v375 = vrsqrt.pop %v371
    %v376 = vrsqrt.pop %v372
    %v377 = vmul.f32 %v345, %v373
    %v378 = vmul.f32 %v346, %v374
    %v379 = vmul.f32 %v347, %v375
    %v380 = vmul.f32 %v348, %v376
    %v382 = vlaneseq
    %v383 = vshrl.u32 %v382, 7
    %v384 = vsub.s32 0, %v383
    %v385 = vrot.slane %v323, %v384
    %v387 = vmul.f32 %v377, %v385
    %v388 = vmul.f32 %v378, %v385
    %v389 = vmul.f32 %v379, %v385
    %v390 = vmul.f32 %v380, %v385
    %v392 = vlaneseq
    %v393 = vshrl.u32 %v392, 7
    %v394 = vsub.s32 0, %v393
    %v395 = vrot.slane %v325, %v394
    %v397 = vadd.f32 %v387, %v395
    %v398 = vadd.f32 %v388, %v395
    %v399 = vadd.f32 %v389, %v395
    %v400 = vadd.f32 %v390, %v395
    %v401 = vpack.c.bf16 %v398, %v397
    %v402 = vpack.c.bf16 %v400, %v399
    %v403 = vld [vmem:[%s7] sm:$0xf]
    %v404 = vld [vmem:[%s7 + $0x4] sm:$0xf]
    %v405 = vld [vmem:[%s7 + $0x8] sm:$0xf]
    %v406 = vld [vmem:[%s7 + $0xc] sm:$0xf]
    %v407 = vld [vmem:[%s8] sm:$0x1]
    %v409 = vlaneseq
    %v410 = vshrl.u32 %v409, 7
    %v411 = vsub.s32 0, %v410
    %v412 = vrot.slane %v407, %v411
    %v418 = vunpack.c.l.b16 %v403
    %v419 = vunpack.c.l.b16 %v404
    %v420 = vunpack.c.l.b16 %v405
    %v421 = vunpack.c.l.b16 %v406
    %v422 = vpack.c.b16 %v419, %v418
    %v423 = vpack.c.b16 %v421, %v420
    %v427 = vsel %vm327, %v401, 0
    %v430 = vsel %vm327, %v402, 0
    %432 = vmatprep.subr.bf16.mxu0 0
    %433 = vmatpush1.bf16.msra.mxu0 %v422
    %434 = vmatprep.subr.bf16.mxu0 0
    %435 = vmatpush1.bf16.msra.mxu0 %v423
    %436 = vmatprep.subr.bf16.mxu0 0
    %437 = vmatpush1.bf16.msra.mxu0 0
    %438 = vmatprep.subr.bf16.mxu0 0
    %439 = vmatpush1.bf16.msra.mxu0 0
    %440 = vmatprep.subr.bf16.mxu0 0
    %441 = vmatpush1.bf16.msra.mxu0 0
    %442 = vmatprep.subr.bf16.mxu0 0
    %443 = vmatpush1.bf16.msra.mxu0 0
    %444 = vmatprep.subr.bf16.mxu0 0
    %445 = vmatpush1.bf16.msra.mxu0 0
    %446 = vmatprep.subr.bf16.mxu0 0
    %447 = vmatpush1.bf16.msra.mxu0 0
    %448 = vmatprep.subr.bf16.mxu0 0
    %449 = vmatpush1.bf16.msra.mxu0 0
    %450 = vmatprep.subr.bf16.mxu0 0
    %451 = vmatpush1.bf16.msra.mxu0 0
    %452 = vmatprep.subr.bf16.mxu0 0
    %453 = vmatpush1.bf16.msra.mxu0 0
    %454 = vmatprep.subr.bf16.mxu0 0
    %455 = vmatpush1.bf16.msra.mxu0 0
    %456 = vmatprep.subr.bf16.mxu0 0
    %457 = vmatpush1.bf16.msra.mxu0 0
    %458 = vmatprep.subr.bf16.mxu0 0
    %459 = vmatpush1.bf16.msra.mxu0 0
    %460 = vmatprep.subr.bf16.mxu0 0
    %461 = vmatpush1.bf16.msra.mxu0 0
    %462 = vmatprep.subr.bf16.mxu0 0
    %463 = vmatpush1.bf16.msra.mxu0 0
    %464 = vmatprep.mubr.bf16.mxu0 0
    %465 = vmatmul.mubr.bf16.gmra.mrb[0].mxu0 %v427
    %v466 = vpop.f32.mrb[0].mxu0
    %v467 = vadd.f32 %v412, %v466
    %v468 = vpop.f32.mrb[0].mxu0
    %v469 = vpop.f32.mrb[0].mxu0
    %v470 = vadd.f32 %v412, %v469
    %v471 = vpop.f32.mrb[0].mxu0
    %472 = vmatprep.mubr.bf16.mxu0 0
    %473 = vmatmul.mubr.bf16.gmra.mrb[0].mxu0 %v430
    %v474 = vpop.f32.mrb[0].mxu0
    %v475 = vadd.f32 %v412, %v474
    %v476 = vpop.f32.mrb[0].mxu0
    %v477 = vpop.f32.mrb[0].mxu0
    %v478 = vadd.f32 %v412, %v477
    %v479 = vpop.f32.mrb[0].mxu0
    %480 = vdwg.mxu0
    %v481 = vpack.c.bf16 %v470, %v467
    %v482 = vpack.c.bf16 %v478, %v475
    %485 = vrot.lane.b32.xlu0 %v481, 96
    %v486 = vpop.permute.xlu0 %485
    %487 = vrot.lane.b32.xlu0 %v482, 96
    %v488 = vpop.permute.xlu0 %487
    %vm489 = vcmask 130048
    %v491 = vsel %vm489, %v481, 0
    %v494 = vsel %vm489, %v482, 0
    %v497 = vsel %vm489, %v486, 0
    %v500 = vsel %vm489, %v488, 0
    %502 = vmatprep.subr.bf16.mxu0 0
    %503 = vmatpush1.bf16.xpose.msra.mxu0 %v497
    %504 = vmatprep.subr.bf16.mxu0 0
    %505 = vmatpush1.bf16.xpose.msra.mxu0 %v500
    %506 = vmatprep.subr.bf16.mxu0 0
    %507 = vmatpush1.bf16.xpose.msra.mxu0 0
    %508 = vmatprep.subr.bf16.mxu0 0
    %509 = vmatpush1.bf16.xpose.msra.mxu0 0
    %510 = vmatprep.subr.bf16.mxu0 0
    %511 = vmatpush1.bf16.xpose.msra.mxu0 0
    %512 = vmatprep.subr.bf16.mxu0 0
    %513 = vmatpush1.bf16.xpose.msra.mxu0 0
    %514 = vmatprep.subr.bf16.mxu0 0
    %515 = vmatpush1.bf16.xpose.msra.mxu0 0
    %516 = vmatprep.subr.bf16.mxu0 0
    %517 = vmatpush1.bf16.xpose.msra.mxu0 0
    %518 = vmatprep.subr.bf16.mxu0 0
    %519 = vmatpush1.bf16.xpose.msra.mxu0 0
    %520 = vmatprep.subr.bf16.mxu0 0
    %521 = vmatpush1.bf16.xpose.msra.mxu0 0
    %522 = vmatprep.subr.bf16.mxu0 0
    %523 = vmatpush1.bf16.xpose.msra.mxu0 0
    %524 = vmatprep.subr.bf16.mxu0 0
    %525 = vmatpush1.bf16.xpose.msra.mxu0 0
    %526 = vmatprep.subr.bf16.mxu0 0
    %527 = vmatpush1.bf16.xpose.msra.mxu0 0
    %528 = vmatprep.subr.bf16.mxu0 0
    %529 = vmatpush1.bf16.xpose.msra.mxu0 0
    %530 = vmatprep.subr.bf16.mxu0 0
    %531 = vmatpush1.bf16.xpose.msra.mxu0 0
    %532 = vmatprep.subr.bf16.mxu0 0
    %533 = vmatpush1.bf16.xpose.msra.mxu0 0
    %534 = vmatprep.mubr.bf16.mxu0 0
    %535 = vmatmul.mubr.bf16.gmra.mrb[0].mxu0 %v491
    %v536 = vpop.f32.mrb[0].mxu0
    %v537 = vadd.f32 0.0, %v536
    %v538 = vpop.f32.mrb[0].mxu0
    %v539 = vpop.f32.mrb[0].mxu0
    %v540 = vadd.f32 0.0, %v539
    %v541 = vpop.f32.mrb[0].mxu0
    %542 = vmatprep.mubr.bf16.mxu0 0
    %543 = vmatmul.mubr.bf16.gmra.mrb[0].mxu0 %v494
    %v544 = vpop.f32.mrb[0].mxu0
    %v545 = vadd.f32 0.0, %v544
    %v546 = vpop.f32.mrb[0].mxu0
    %v547 = vpop.f32.mrb[0].mxu0
    %v548 = vadd.f32 0.0, %v547
    %v549 = vpop.f32.mrb[0].mxu0
    %550 = vdwg.mxu0
    %v551 = vmul.f32 %v537, 0.25
    %v552 = vmul.f32 %v540, 0.25
    %v553 = vmul.f32 %v545, 0.25
    %v554 = vmul.f32 %v548, 0.25
    %v555 = vadd.f32 %v551, %v319
    %v556 = vadd.f32 %v552, %v320
    %v557 = vadd.f32 %v553, %v321
    %v558 = vadd.f32 %v554, %v322
    %v559 = vsel %vm327, %v555, -inf
    %560 = vmax.xlane.f32.xlu0 %v559
    %v561 = vpop.xlane.xlu0 %560
    %v562 = vsel %vm327, %v556, -inf
    %563 = vmax.xlane.f32.xlu0 %v562
    %v564 = vpop.xlane.xlu0 %563
    %v565 = vsel %vm327, %v557, -inf
    %566 = vmax.xlane.f32.xlu0 %v565
    %v567 = vpop.xlane.xlu0 %566
    %v568 = vsel %vm327, %v558, -inf
    %569 = vmax.xlane.f32.xlu0 %v568
    %v570 = vpop.xlane.xlu0 %569
    %v571 = vsub.f32 %v555, %v561
    %v572 = vsub.f32 %v556, %v564
    %v573 = vsub.f32 %v557, %v567
    %v574 = vsub.f32 %v558, %v570
    %v575 = vmul.f32 %v571, 1.442695
    %v576 = vpow.pop %v575
    %v577 = vmul.f32 %v572, 1.442695
    %v578 = vpow.pop %v577
    %v579 = vmul.f32 %v573, 1.442695
    %v580 = vpow.pop %v579
    %v581 = vmul.f32 %v574, 1.442695
    %v582 = vpow.pop %v581
    %v583 = vsel %vm327, %v576, 0.0
    %584 = vadd.xlane.f32.xlu0 %v583
    %v585 = vpop.xlane.xlu0 %584
    %v586 = vsel %vm327, %v578, 0.0
    %587 = vadd.xlane.f32.xlu0 %v586
    %v588 = vpop.xlane.xlu0 %587
    %v589 = vsel %vm327, %v580, 0.0
    %590 = vadd.xlane.f32.xlu0 %v589
    %v591 = vpop.xlane.xlu0 %590
    %v592 = vsel %vm327, %v582, 0.0
    %593 = vadd.xlane.f32.xlu0 %v592
    %v594 = vpop.xlane.xlu0 %593
    %v595 = vrcp.pop %v585
    %v596 = vrcp.pop %v588
    %v597 = vrcp.pop %v591
    %v598 = vrcp.pop %v594
    %v599 = vmul.f32 %v576, %v595
    %v600 = vmul.f32 %v578, %v596
    %v601 = vmul.f32 %v580, %v597
    %v602 = vmul.f32 %v582, %v598
    %v603 = vpack.c.bf16 %v600, %v599
    %v604 = vpack.c.bf16 %v602, %v601
    %605 = vrot.lane.b32.xlu0 %v481, 64
    %v606 = vpop.permute.xlu0 %605
    %607 = vrot.lane.b32.xlu0 %v482, 64
    %v608 = vpop.permute.xlu0 %607
    %v612 = vsel %vm327, %v603, 0
    %v615 = vsel %vm327, %v604, 0
    %617 = vmatprep.subr.bf16.mxu0 0
    %618 = vmatpush1.bf16.msra.mxu0 %v606
    %619 = vmatprep.subr.bf16.mxu0 0
    %620 = vmatpush1.bf16.msra.mxu0 %v608
    %621 = vmatprep.subr.bf16.mxu0 0
    %622 = vmatpush1.bf16.msra.mxu0 0
    %623 = vmatprep.subr.bf16.mxu0 0
    %624 = vmatpush1.bf16.msra.mxu0 0
    %625 = vmatprep.subr.bf16.mxu0 0
    %626 = vmatpush1.bf16.msra.mxu0 0
    %627 = vmatprep.subr.bf16.mxu0 0
    %628 = vmatpush1.bf16.msra.mxu0 0
    %629 = vmatprep.subr.bf16.mxu0 0
    %630 = vmatpush1.bf16.msra.mxu0 0
    %631 = vmatprep.subr.bf16.mxu0 0
    %632 = vmatpush1.bf16.msra.mxu0 0
    %633 = vmatprep.subr.bf16.mxu0 0
    %634 = vmatpush1.bf16.msra.mxu0 0
    %635 = vmatprep.subr.bf16.mxu0 0
    %636 = vmatpush1.bf16.msra.mxu0 0
    %637 = vmatprep.subr.bf16.mxu0 0
    %638 = vmatpush1.bf16.msra.mxu0 0
    %639 = vmatprep.subr.bf16.mxu0 0
    %640 = vmatpush1.bf16.msra.mxu0 0
    %641 = vmatprep.subr.bf16.mxu0 0
    %642 = vmatpush1.bf16.msra.mxu0 0
    %643 = vmatprep.subr.bf16.mxu0 0
    %644 = vmatpush1.bf16.msra.mxu0 0
    %645 = vmatprep.subr.bf16.mxu0 0
    %646 = vmatpush1.bf16.msra.mxu0 0
    %647 = vmatprep.subr.bf16.mxu0 0
    %648 = vmatpush1.bf16.msra.mxu0 0
    %649 = vmatprep.mubr.bf16.mxu0 0
    %650 = vmatmul.mubr.bf16.gmra.mrb[0].mxu0 %v612
    %v651 = vpop.f32.mrb[0].mxu0
    %v652 = vadd.f32 0.0, %v651
    %v653 = vpop.f32.mrb[0].mxu0
    %v654 = vpop.f32.mrb[0].mxu0
    %v655 = vadd.f32 0.0, %v654
    %v656 = vpop.f32.mrb[0].mxu0
    %657 = vmatprep.mubr.bf16.mxu0 0
    %658 = vmatmul.mubr.bf16.gmra.mrb[0].mxu0 %v615
    %v659 = vpop.f32.mrb[0].mxu0
    %v660 = vadd.f32 0.0, %v659
    %v661 = vpop.f32.mrb[0].mxu0
    %v662 = vpop.f32.mrb[0].mxu0
    %v663 = vadd.f32 0.0, %v662
    %v664 = vpop.f32.mrb[0].mxu0
    %665 = vdwg.mxu0
    %666 = vrot.lane.b32.xlu0 %v481, 112
    %v667 = vpop.permute.xlu0 %666
    %668 = vrot.lane.b32.xlu0 %v482, 112
    %v669 = vpop.permute.xlu0 %668
    %670 = vrot.lane.b32.xlu0 %v481, 80
    %v671 = vpop.permute.xlu0 %670
    %672 = vrot.lane.b32.xlu0 %v482, 80
    %v673 = vpop.permute.xlu0 %672
    %v675 = vsel %vm489, %v667, 0
    %v678 = vsel %vm489, %v669, 0
    %v681 = vsel %vm489, %v671, 0
    %v684 = vsel %vm489, %v673, 0
    %686 = vmatprep.subr.bf16.mxu0 0
    %687 = vmatpush1.bf16.xpose.msra.mxu0 %v681
    %688 = vmatprep.subr.bf16.mxu0 0
    %689 = vmatpush1.bf16.xpose.msra.mxu0 %v684
    %690 = vmatprep.subr.bf16.mxu0 0
    %691 = vmatpush1.bf16.xpose.msra.mxu0 0
    %692 = vmatprep.subr.bf16.mxu0 0
    %693 = vmatpush1.bf16.xpose.msra.mxu0 0
    %694 = vmatprep.subr.bf16.mxu0 0
    %695 = vmatpush1.bf16.xpose.msra.mxu0 0
    %696 = vmatprep.subr.bf16.mxu0 0
    %697 = vmatpush1.bf16.xpose.msra.mxu0 0
    %698 = vmatprep.subr.bf16.mxu0 0
    %699 = vmatpush1.bf16.xpose.msra.mxu0 0
    %700 = vmatprep.subr.bf16.mxu0 0
    %701 = vmatpush1.bf16.xpose.msra.mxu0 0
    %702 = vmatprep.subr.bf16.mxu0 0
    %703 = vmatpush1.bf16.xpose.msra.mxu0 0
    %704 = vmatprep.subr.bf16.mxu0 0
    %705 = vmatpush1.bf16.xpose.msra.mxu0 0
    %706 = vmatprep.subr.bf16.mxu0 0
    %707 = vmatpush1.bf16.xpose.msra.mxu0 0
    %708 = vmatprep.subr.bf16.mxu0 0
    %709 = vmatpush1.bf16.xpose.msra.mxu0 0
    %710 = vmatprep.subr.bf16.mxu0 0
    %711 = vmatpush1.bf16.xpose.msra.mxu0 0
    %712 = vmatprep.subr.bf16.mxu0 0
    %713 = vmatpush1.bf16.xpose.msra.mxu0 0
    %714 = vmatprep.subr.bf16.mxu0 0
    %715 = vmatpush1.bf16.xpose.msra.mxu0 0
    %716 = vmatprep.subr.bf16.mxu0 0
    %717 = vmatpush1.bf16.xpose.msra.mxu0 0
    %718 = vmatprep.mubr.bf16.mxu0 0
    %719 = vmatmul.mubr.bf16.gmra.mrb[0].mxu0 %v675
    %v720 = vpop.f32.mrb[0].mxu0
    %v721 = vadd.f32 0.0, %v720
    %v722 = vpop.f32.mrb[0].mxu0
    %v723 = vpop.f32.mrb[0].mxu0
    %v724 = vadd.f32 0.0, %v723
    %v725 = vpop.f32.mrb[0].mxu0
    %726 = vmatprep.mubr.bf16.mxu0 0
    %727 = vmatmul.mubr.bf16.gmra.mrb[0].mxu0 %v678
    %v728 = vpop.f32.mrb[0].mxu0
    %v729 = vadd.f32 0.0, %v728
    %v730 = vpop.f32.mrb[0].mxu0
    %v731 = vpop.f32.mrb[0].mxu0
    %v732 = vadd.f32 0.0, %v731
    %v733 = vpop.f32.mrb[0].mxu0
    %734 = vdwg.mxu0
    %v735 = vmul.f32 %v721, 0.25
    %v736 = vmul.f32 %v724, 0.25
    %v737 = vmul.f32 %v729, 0.25
    %v738 = vmul.f32 %v732, 0.25
    %v739 = vadd.f32 %v735, %v319
    %v740 = vadd.f32 %v736, %v320
    %v741 = vadd.f32 %v737, %v321
    %v742 = vadd.f32 %v738, %v322
    %v743 = vsel %vm327, %v739, -inf
    %744 = vmax.xlane.f32.xlu0 %v743
    %v745 = vpop.xlane.xlu0 %744
    %v746 = vsel %vm327, %v740, -inf
    %747 = vmax.xlane.f32.xlu0 %v746
    %v748 = vpop.xlane.xlu0 %747
    %v749 = vsel %vm327, %v741, -inf
    %750 = vmax.xlane.f32.xlu0 %v749
    %v751 = vpop.xlane.xlu0 %750
    %v752 = vsel %vm327, %v742, -inf
    %753 = vmax.xlane.f32.xlu0 %v752
    %v754 = vpop.xlane.xlu0 %753
    %v755 = vsub.f32 %v739, %v745
    %v756 = vsub.f32 %v740, %v748
    %v757 = vsub.f32 %v741, %v751
    %v758 = vsub.f32 %v742, %v754
    %v759 = vmul.f32 %v755, 1.442695
    %v760 = vpow.pop %v759
    %v761 = vmul.f32 %v756, 1.442695
    %v762 = vpow.pop %v761
    %v763 = vmul.f32 %v757, 1.442695
    %v764 = vpow.pop %v763
    %v765 = vmul.f32 %v758, 1.442695
    %v766 = vpow.pop %v765
    %v767 = vsel %vm327, %v760, 0.0
    %768 = vadd.xlane.f32.xlu0 %v767
    %v769 = vpop.xlane.xlu0 %768
    %v770 = vsel %vm327, %v762, 0.0
    %771 = vadd.xlane.f32.xlu0 %v770
    %v772 = vpop.xlane.xlu0 %771
    %v773 = vsel %vm327, %v764, 0.0
    %774 = vadd.xlane.f32.xlu0 %v773
    %v775 = vpop.xlane.xlu0 %774
    %v776 = vsel %vm327, %v766, 0.0
    %777 = vadd.xlane.f32.xlu0 %v776
    %v778 = vpop.xlane.xlu0 %777
    %v779 = vrcp.pop %v769
    %v780 = vrcp.pop %v772
    %v781 = vrcp.pop %v775
    %v782 = vrcp.pop %v778
    %v783 = vmul.f32 %v760, %v779
    %v784 = vmul.f32 %v762, %v780
    %v785 = vmul.f32 %v764, %v781
    %v786 = vmul.f32 %v766, %v782
    %v787 = vpack.c.bf16 %v784, %v783
    %v788 = vpack.c.bf16 %v786, %v785
    %789 = vrot.lane.b32.xlu0 %v481, 48
    %v790 = vpop.permute.xlu0 %789
    %791 = vrot.lane.b32.xlu0 %v482, 48
    %v792 = vpop.permute.xlu0 %791
    %v796 = vsel %vm327, %v787, 0
    %v799 = vsel %vm327, %v788, 0
    %801 = vmatprep.subr.bf16.mxu0 0
    %802 = vmatpush1.bf16.msra.mxu0 %v790
    %803 = vmatprep.subr.bf16.mxu0 0
    %804 = vmatpush1.bf16.msra.mxu0 %v792
    %805 = vmatprep.subr.bf16.mxu0 0
    %806 = vmatpush1.bf16.msra.mxu0 0
    %807 = vmatprep.subr.bf16.mxu0 0
    %808 = vmatpush1.bf16.msra.mxu0 0
    %809 = vmatprep.subr.bf16.mxu0 0
    %810 = vmatpush1.bf16.msra.mxu0 0
    %811 = vmatprep.subr.bf16.mxu0 0
    %812 = vmatpush1.bf16.msra.mxu0 0
    %813 = vmatprep.subr.bf16.mxu0 0
    %814 = vmatpush1.bf16.msra.mxu0 0
    %815 = vmatprep.subr.bf16.mxu0 0
    %816 = vmatpush1.bf16.msra.mxu0 0
    %817 = vmatprep.subr.bf16.mxu0 0
    %818 = vmatpush1.bf16.msra.mxu0 0
    %819 = vmatprep.subr.bf16.mxu0 0
    %820 = vmatpush1.bf16.msra.mxu0 0
    %821 = vmatprep.subr.bf16.mxu0 0
    %822 = vmatpush1.bf16.msra.mxu0 0
    %823 = vmatprep.subr.bf16.mxu0 0
    %824 = vmatpush1.bf16.msra.mxu0 0
    %825 = vmatprep.subr.bf16.mxu0 0
    %826 = vmatpush1.bf16.msra.mxu0 0
    %827 = vmatprep.subr.bf16.mxu0 0
    %828 = vmatpush1.bf16.msra.mxu0 0
    %829 = vmatprep.subr.bf16.mxu0 0
    %830 = vmatpush1.bf16.msra.mxu0 0
    %831 = vmatprep.subr.bf16.mxu0 0
    %832 = vmatpush1.bf16.msra.mxu0 0
    %833 = vmatprep.mubr.bf16.mxu0 0
    %834 = vmatmul.mubr.bf16.gmra.mrb[0].mxu0 %v796
    %v835 = vpop.f32.mrb[0].mxu0
    %v836 = vadd.f32 0.0, %v835
    %v837 = vpop.f32.mrb[0].mxu0
    %v838 = vpop.f32.mrb[0].mxu0
    %v839 = vadd.f32 0.0, %v838
    %v840 = vpop.f32.mrb[0].mxu0
    %841 = vmatprep.mubr.bf16.mxu0 0
    %842 = vmatmul.mubr.bf16.gmra.mrb[0].mxu0 %v799
    %v843 = vpop.f32.mrb[0].mxu0
    %v844 = vadd.f32 0.0, %v843
    %v845 = vpop.f32.mrb[0].mxu0
    %v846 = vpop.f32.mrb[0].mxu0
    %v847 = vadd.f32 0.0, %v846
    %v848 = vpop.f32.mrb[0].mxu0
    %849 = vdwg.mxu0
    %854 = vrot.lane.b32.xlu0 %v836, 16
    %v855 = vpop.permute.xlu0 %854
    %856 = vrot.lane.b32.xlu0 %v839, 16
    %v857 = vpop.permute.xlu0 %856
    %858 = vrot.lane.b32.xlu0 %v844, 16
    %v859 = vpop.permute.xlu0 %858
    %860 = vrot.lane.b32.xlu0 %v847, 16
    %v861 = vpop.permute.xlu0 %860
    %v866 = vsel %vm489, %v652, %v855
    %v867 = vsel %vm489, %v655, %v857
    %v868 = vsel %vm489, %v660, %v859
    %v869 = vsel %vm489, %v663, %v861
    %v870 = vpack.c.bf16 %v867, %v866
    %v871 = vpack.c.bf16 %v869, %v868
    %v872 = vld [vmem:[%s9] sm:$0xf]
    %v873 = vld [vmem:[%s9 + $0x4] sm:$0xf]
    %v874 = vld [vmem:[%s9 + $0x8] sm:$0xf]
    %v875 = vld [vmem:[%s9 + $0xc] sm:$0xf]
    %v880 = vunpack.c.l.b16 %v872
    %v881 = vunpack.c.l.b16 %v873
    %v882 = vunpack.c.l.b16 %v874
    %v883 = vunpack.c.l.b16 %v875
    %v884 = vpack.c.b16 %v881, %v880
    %v885 = vpack.c.b16 %v883, %v882
    %v889 = vsel %vm327, %v870, 0
    %v892 = vsel %vm327, %v871, 0
    %894 = vmatprep.subr.bf16.mxu0 0
    %895 = vmatpush1.bf16.msra.mxu0 %v884
    %896 = vmatprep.subr.bf16.mxu0 0
    %897 = vmatpush1.bf16.msra.mxu0 %v885
    %898 = vmatprep.subr.bf16.mxu0 0
    %899 = vmatpush1.bf16.msra.mxu0 0
    %900 = vmatprep.subr.bf16.mxu0 0
    %901 = vmatpush1.bf16.msra.mxu0 0
    %902 = vmatprep.subr.bf16.mxu0 0
    %903 = vmatpush1.bf16.msra.mxu0 0
    %904 = vmatprep.subr.bf16.mxu0 0
    %905 = vmatpush1.bf16.msra.mxu0 0
    %906 = vmatprep.subr.bf16.mxu0 0
    %907 = vmatpush1.bf16.msra.mxu0 0
    %908 = vmatprep.subr.bf16.mxu0 0
    %909 = vmatpush1.bf16.msra.mxu0 0
    %910 = vmatprep.subr.bf16.mxu0 0
    %911 = vmatpush1.bf16.msra.mxu0 0
    %912 = vmatprep.subr.bf16.mxu0 0
    %913 = vmatpush1.bf16.msra.mxu0 0
    %914 = vmatprep.subr.bf16.mxu0 0
    %915 = vmatpush1.bf16.msra.mxu0 0
    %916 = vmatprep.subr.bf16.mxu0 0
    %917 = vmatpush1.bf16.msra.mxu0 0
    %918 = vmatprep.subr.bf16.mxu0 0
    %919 = vmatpush1.bf16.msra.mxu0 0
    %920 = vmatprep.subr.bf16.mxu0 0
    %921 = vmatpush1.bf16.msra.mxu0 0
    %922 = vmatprep.subr.bf16.mxu0 0
    %923 = vmatpush1.bf16.msra.mxu0 0
    %924 = vmatprep.subr.bf16.mxu0 0
    %925 = vmatpush1.bf16.msra.mxu0 0
    %926 = vmatprep.mubr.bf16.mxu0 0
    %927 = vmatmul.mubr.bf16.gmra.mrb[0].mxu0 %v889
    %v928 = vpop.f32.mrb[0].mxu0
    %v929 = vadd.f32 0.0, %v928
    %v930 = vpop.f32.mrb[0].mxu0
    %v931 = vpop.f32.mrb[0].mxu0
    %v932 = vadd.f32 0.0, %v931
    %v933 = vpop.f32.mrb[0].mxu0
    %934 = vmatprep.mubr.bf16.mxu0 0
    %935 = vmatmul.mubr.bf16.gmra.mrb[0].mxu0 %v892
    %v936 = vpop.f32.mrb[0].mxu0
    %v937 = vadd.f32 0.0, %v936
    %v938 = vpop.f32.mrb[0].mxu0
    %v939 = vpop.f32.mrb[0].mxu0
    %v940 = vadd.f32 0.0, %v939
    %v941 = vpop.f32.mrb[0].mxu0
    %942 = vdwg.mxu0
    %v943 = vadd.f32 %v315, %v929
    %v944 = vadd.f32 %v316, %v932
    %v945 = vadd.f32 %v317, %v937
    %v946 = vadd.f32 %v318, %v940
    %v947 = vld [vmem:[%s10] sm:$0x1]
    %v949 = vlaneseq
    %v950 = vshrl.u32 %v949, 7
    %v951 = vsub.s32 0, %v950
    %v952 = vrot.slane %v947, %v951
    %v954 = vadd.f32 %v943, %v952
    %v955 = vadd.f32 %v944, %v952
    %v956 = vadd.f32 %v945, %v952
    %v957 = vadd.f32 %v946, %v952
    %v958 = vsel %vm327, %v954, 0.0
    %959 = vadd.xlane.f32.xlu0 %v958
    %v960 = vpop.xlane.xlu0 %959
    %v961 = vsel %vm327, %v955, 0.0
    %962 = vadd.xlane.f32.xlu0 %v961
    %v963 = vpop.xlane.xlu0 %962
    %v964 = vsel %vm327, %v956, 0.0
    %965 = vadd.xlane.f32.xlu0 %v964
    %v966 = vpop.xlane.xlu0 %965
    %v967 = vsel %vm327, %v957, 0.0
    %968 = vadd.xlane.f32.xlu0 %v967
    %v969 = vpop.xlane.xlu0 %968
    %v970 = vmul.f32 %v960, %v340
    %v971 = vmul.f32 %v963, %v340
    %v972 = vmul.f32 %v966, %v340
    %v973 = vmul.f32 %v969, %v340
    %v974 = vsub.f32 %v954, %v970
    %v975 = vsub.f32 %v955, %v971
    %v976 = vsub.f32 %v956, %v972
    %v977 = vsub.f32 %v957, %v973
    %v978 = vmul.f32 %v974, %v974
    %v979 = vmul.f32 %v975, %v975
    %v980 = vmul.f32 %v976, %v976
    %v981 = vmul.f32 %v977, %v977
    %v982 = vsel %vm327, %v978, 0.0
    %983 = vadd.xlane.f32.xlu0 %v982
    %v984 = vpop.xlane.xlu0 %983
    %v985 = vsel %vm327, %v979, 0.0
    %986 = vadd.xlane.f32.xlu0 %v985
    %v987 = vpop.xlane.xlu0 %986
    %v988 = vsel %vm327, %v980, 0.0
    %989 = vadd.xlane.f32.xlu0 %v988
    %v990 = vpop.xlane.xlu0 %989
    %v991 = vsel %vm327, %v981, 0.0
    %992 = vadd.xlane.f32.xlu0 %v991
    %v993 = vpop.xlane.xlu0 %992
    %v994 = vmul.f32 %v984, %v340
    %v995 = vmul.f32 %v987, %v340
    %v996 = vmul.f32 %v990, %v340
    %v997 = vmul.f32 %v993, %v340
    %v998 = vadd.f32 %v994, 1e-05
    %v999 = vadd.f32 %v995, 1e-05
    %v1000 = vadd.f32 %v996, 1e-05
    %v1001 = vadd.f32 %v997, 1e-05
    %v1002 = vrsqrt.pop %v998
    %v1003 = vrsqrt.pop %v999
    %v1004 = vrsqrt.pop %v1000
    %v1005 = vrsqrt.pop %v1001
    %v1006 = vmul.f32 %v974, %v1002
    %v1007 = vmul.f32 %v975, %v1003
    %v1008 = vmul.f32 %v976, %v1004
    %v1009 = vmul.f32 %v977, %v1005
    %v1011 = vlaneseq
    %v1012 = vshrl.u32 %v1011, 7
    %v1013 = vsub.s32 0, %v1012
    %v1014 = vrot.slane %v324, %v1013
    %v1016 = vmul.f32 %v1006, %v1014
    %v1017 = vmul.f32 %v1007, %v1014
    %v1018 = vmul.f32 %v1008, %v1014
    %v1019 = vmul.f32 %v1009, %v1014
    %v1021 = vlaneseq
    %v1022 = vshrl.u32 %v1021, 7
    %v1023 = vsub.s32 0, %v1022
    %v1024 = vrot.slane %v326, %v1023
    %v1026 = vadd.f32 %v1016, %v1024
    %v1027 = vadd.f32 %v1017, %v1024
    %v1028 = vadd.f32 %v1018, %v1024
    %v1029 = vadd.f32 %v1019, %v1024
    %v1030 = vpack.c.bf16 %v1027, %v1026
    %v1031 = vpack.c.bf16 %v1029, %v1028
    %v1032 = vld [vmem:[%s13] sm:$0xf]
    %v1033 = vld [vmem:[%s13 + $0x4] sm:$0xf]
    %v1034 = vld [vmem:[%s13 + $0x8] sm:$0xf]
    %v1035 = vld [vmem:[%s13 + $0xc] sm:$0xf]
    %v1036 = vld [vmem:[%s14] sm:$0x1]
    %v1038 = vlaneseq
    %v1039 = vshrl.u32 %v1038, 7
    %v1040 = vsub.s32 0, %v1039
    %v1041 = vrot.slane %v1036, %v1040
    %v1047 = vunpack.c.l.b16 %v1032
    %v1048 = vunpack.c.l.b16 %v1033
    %v1049 = vunpack.c.l.b16 %v1034
    %v1050 = vunpack.c.l.b16 %v1035
    %v1051 = vpack.c.b16 %v1048, %v1047
    %v1052 = vpack.c.b16 %v1050, %v1049
    %v1056 = vsel %vm327, %v1030, 0
    %v1059 = vsel %vm327, %v1031, 0
    %1061 = vmatprep.subr.bf16.mxu0 0
    %1062 = vmatpush1.bf16.msra.mxu0 %v1051
    %1063 = vmatprep.subr.bf16.mxu0 0
    %1064 = vmatpush1.bf16.msra.mxu0 %v1052
    %1065 = vmatprep.subr.bf16.mxu0 0
    %1066 = vmatpush1.bf16.msra.mxu0 0
    %1067 = vmatprep.subr.bf16.mxu0 0
    %1068 = vmatpush1.bf16.msra.mxu0 0
    %1069 = vmatprep.subr.bf16.mxu0 0
    %1070 = vmatpush1.bf16.msra.mxu0 0
    %1071 = vmatprep.subr.bf16.mxu0 0
    %1072 = vmatpush1.bf16.msra.mxu0 0
    %1073 = vmatprep.subr.bf16.mxu0 0
    %1074 = vmatpush1.bf16.msra.mxu0 0
    %1075 = vmatprep.subr.bf16.mxu0 0
    %1076 = vmatpush1.bf16.msra.mxu0 0
    %1077 = vmatprep.subr.bf16.mxu0 0
    %1078 = vmatpush1.bf16.msra.mxu0 0
    %1079 = vmatprep.subr.bf16.mxu0 0
    %1080 = vmatpush1.bf16.msra.mxu0 0
    %1081 = vmatprep.subr.bf16.mxu0 0
    %1082 = vmatpush1.bf16.msra.mxu0 0
    %1083 = vmatprep.subr.bf16.mxu0 0
    %1084 = vmatpush1.bf16.msra.mxu0 0
    %1085 = vmatprep.subr.bf16.mxu0 0
    %1086 = vmatpush1.bf16.msra.mxu0 0
    %1087 = vmatprep.subr.bf16.mxu0 0
    %1088 = vmatpush1.bf16.msra.mxu0 0
    %1089 = vmatprep.subr.bf16.mxu0 0
    %1090 = vmatpush1.bf16.msra.mxu0 0
    %1091 = vmatprep.subr.bf16.mxu0 0
    %1092 = vmatpush1.bf16.msra.mxu0 0
    %1093 = vmatprep.mubr.bf16.mxu0 0
    %1094 = vmatmul.mubr.bf16.gmra.mrb[0].mxu0 %v1056
    %v1095 = vpop.f32.mrb[0].mxu0
    %v1096 = vadd.f32 %v1041, %v1095
    %v1097 = vpop.f32.mrb[0].mxu0
    %v1098 = vpop.f32.mrb[0].mxu0
    %v1099 = vadd.f32 %v1041, %v1098
    %v1100 = vpop.f32.mrb[0].mxu0
    %1101 = vmatprep.mubr.bf16.mxu0 0
    %1102 = vmatmul.mubr.bf16.gmra.mrb[0].mxu0 %v1059
    %v1103 = vpop.f32.mrb[0].mxu0
    %v1104 = vadd.f32 %v1041, %v1103
    %v1105 = vpop.f32.mrb[0].mxu0
    %v1106 = vpop.f32.mrb[0].mxu0
    %v1107 = vadd.f32 %v1041, %v1106
    %v1108 = vpop.f32.mrb[0].mxu0
    %1109 = vdwg.mxu0
    %v1110 = vmul.f32 %v1096, 0.5
    %v1111 = vmul.f32 %v1099, 0.5
    %v1112 = vmul.f32 %v1104, 0.5
    %v1113 = vmul.f32 %v1107, 0.5
    %v1114 = vmul.f32 %v1096, 0.044715
    %v1115 = vmul.f32 %v1099, 0.044715
    %v1116 = vmul.f32 %v1104, 0.044715
    %v1117 = vmul.f32 %v1107, 0.044715
    %v1118 = vmul.f32 %v1114, %v1096
    %v1119 = vmul.f32 %v1115, %v1099
    %v1120 = vmul.f32 %v1116, %v1104
    %v1121 = vmul.f32 %v1117, %v1107
    %v1122 = vmul.f32 %v1118, %v1096
    %v1123 = vmul.f32 %v1119, %v1099
    %v1124 = vmul.f32 %v1120, %v1104
    %v1125 = vmul.f32 %v1121, %v1107
    %v1126 = vadd.f32 %v1096, %v1122
    %v1127 = vadd.f32 %v1099, %v1123
    %v1128 = vadd.f32 %v1104, %v1124
    %v1129 = vadd.f32 %v1107, %v1125
    %v1130 = vmul.f32 %v1126, 0.7978846
    %v1131 = vmul.f32 %v1127, 0.7978846
    %v1132 = vmul.f32 %v1128, 0.7978846
    %v1133 = vmul.f32 %v1129, 0.7978846
    %v1134 = vtanh.pop %v1130
    %v1135 = vtanh.pop %v1131
    %v1136 = vtanh.pop %v1132
    %v1137 = vtanh.pop %v1133
    %v1138 = vadd.f32 %v1134, 1.0
    %v1139 = vadd.f32 %v1135, 1.0
    %v1140 = vadd.f32 %v1136, 1.0
    %v1141 = vadd.f32 %v1137, 1.0
    %v1142 = vmul.f32 %v1110, %v1138
    %v1143 = vmul.f32 %v1111, %v1139
    %v1144 = vmul.f32 %v1112, %v1140
    %v1145 = vmul.f32 %v1113, %v1141
    %v1146 = vpack.c.bf16 %v1143, %v1142
    %v1147 = vpack.c.bf16 %v1145, %v1144
    %v1148 = vld [vmem:[%s15] sm:$0xf]
    %v1149 = vld [vmem:[%s15 + $0x4] sm:$0xf]
    %v1150 = vld [vmem:[%s15 + $0x8] sm:$0xf]
    %v1151 = vld [vmem:[%s15 + $0xc] sm:$0xf]
    %v1152 = vld [vmem:[%s15 + $0x10] sm:$0xf]
    %v1153 = vld [vmem:[%s15 + $0x14] sm:$0xf]
    %v1154 = vld [vmem:[%s15 + $0x18] sm:$0xf]
    %v1155 = vld [vmem:[%s15 + $0x1c] sm:$0xf]
    %v1156 = vld [vmem:[%s15 + $0x20] sm:$0xf]
    %v1157 = vld [vmem:[%s15 + $0x24] sm:$0xf]
    %v1158 = vld [vmem:[%s15 + $0x28] sm:$0xf]
    %v1159 = vld [vmem:[%s15 + $0x2c] sm:$0xf]
    %v1160 = vld [vmem:[%s15 + $0x30] sm:$0xf]
    %v1161 = vld [vmem:[%s15 + $0x34] sm:$0xf]
    %v1162 = vld [vmem:[%s15 + $0x38] sm:$0xf]
    %v1163 = vld [vmem:[%s15 + $0x3c] sm:$0xf]
    %v1164 = vld [vmem:[%s16] sm:$0x1]
    %v1166 = vlaneseq
    %v1167 = vshrl.u32 %v1166, 7
    %v1168 = vsub.s32 0, %v1167
    %v1169 = vrot.slane %v1164, %v1168
    %v1187 = vunpack.c.l.b16 %v1148
    %v1188 = vunpack.c.l.b16 %v1149
    %v1189 = vunpack.c.l.b16 %v1150
    %v1190 = vunpack.c.l.b16 %v1151
    %v1191 = vunpack.c.l.b16 %v1152
    %v1192 = vunpack.c.l.b16 %v1153
    %v1193 = vunpack.c.l.b16 %v1154
    %v1194 = vunpack.c.l.b16 %v1155
    %v1195 = vunpack.c.l.b16 %v1156
    %v1196 = vunpack.c.l.b16 %v1157
    %v1197 = vunpack.c.l.b16 %v1158
    %v1198 = vunpack.c.l.b16 %v1159
    %v1199 = vunpack.c.l.b16 %v1160
    %v1200 = vunpack.c.l.b16 %v1161
    %v1201 = vunpack.c.l.b16 %v1162
    %v1202 = vunpack.c.l.b16 %v1163
    %v1203 = vpack.c.b16 %v1188, %v1187
    %v1204 = vpack.c.b16 %v1190, %v1189
    %v1205 = vpack.c.b16 %v1192, %v1191
    %v1206 = vpack.c.b16 %v1194, %v1193
    %v1207 = vpack.c.b16 %v1196, %v1195
    %v1208 = vpack.c.b16 %v1198, %v1197
    %v1209 = vpack.c.b16 %v1200, %v1199
    %v1210 = vpack.c.b16 %v1202, %v1201
    %1219 = vmatprep.subr.bf16.mxu0 0
    %1220 = vmatpush1.bf16.msra.mxu0 %v1203
    %1221 = vmatprep.subr.bf16.mxu0 0
    %1222 = vmatpush1.bf16.msra.mxu0 %v1204
    %1223 = vmatprep.subr.bf16.mxu0 0
    %1224 = vmatpush1.bf16.msra.mxu0 %v1205
    %1225 = vmatprep.subr.bf16.mxu0 0
    %1226 = vmatpush1.bf16.msra.mxu0 %v1206
    %1227 = vmatprep.subr.bf16.mxu0 0
    %1228 = vmatpush1.bf16.msra.mxu0 %v1207
    %1229 = vmatprep.subr.bf16.mxu0 0
    %1230 = vmatpush1.bf16.msra.mxu0 %v1208
    %1231 = vmatprep.subr.bf16.mxu0 0
    %1232 = vmatpush1.bf16.msra.mxu0 %v1209
    %1233 = vmatprep.subr.bf16.mxu0 0
    %1234 = vmatpush1.bf16.msra.mxu0 %v1210
    %1235 = vmatprep.subr.bf16.mxu0 0
    %1236 = vmatpush1.bf16.msra.mxu0 0
    %1237 = vmatprep.subr.bf16.mxu0 0
    %1238 = vmatpush1.bf16.msra.mxu0 0
    %1239 = vmatprep.subr.bf16.mxu0 0
    %1240 = vmatpush1.bf16.msra.mxu0 0
    %1241 = vmatprep.subr.bf16.mxu0 0
    %1242 = vmatpush1.bf16.msra.mxu0 0
    %1243 = vmatprep.subr.bf16.mxu0 0
    %1244 = vmatpush1.bf16.msra.mxu0 0
    %1245 = vmatprep.subr.bf16.mxu0 0
    %1246 = vmatpush1.bf16.msra.mxu0 0
    %1247 = vmatprep.subr.bf16.mxu0 0
    %1248 = vmatpush1.bf16.msra.mxu0 0
    %1249 = vmatprep.subr.bf16.mxu0 0
    %1250 = vmatpush1.bf16.msra.mxu0 0
    %1251 = vmatprep.mubr.bf16.mxu0 0
    %1252 = vmatmul.mubr.bf16.gmra.mrb[0].mxu0 %v1146
    %v1253 = vpop.f32.mrb[0].mxu0
    %v1254 = vadd.f32 %v1169, %v1253
    %v1255 = vpop.f32.mrb[0].mxu0
    %v1256 = vpop.f32.mrb[0].mxu0
    %v1257 = vadd.f32 %v1169, %v1256
    %v1258 = vpop.f32.mrb[0].mxu0
    %1259 = vmatprep.mubr.bf16.mxu0 0
    %1260 = vmatmul.mubr.bf16.gmra.mrb[0].mxu0 %v1147
    %v1261 = vpop.f32.mrb[0].mxu0
    %v1262 = vadd.f32 %v1169, %v1261
    %v1263 = vpop.f32.mrb[0].mxu0
    %v1264 = vpop.f32.mrb[0].mxu0
    %v1265 = vadd.f32 %v1169, %v1264
    %v1266 = vpop.f32.mrb[0].mxu0
    %1267 = vdwg.mxu0
    %v1268 = vadd.f32 %v954, %v1254
    %v1269 = vadd.f32 %v955, %v1257
    %v1270 = vadd.f32 %v956, %v1262
    %v1271 = vadd.f32 %v957, %v1265
    %s1272 = scalar_lea.vmem %s11, 2
    %v1273 = vld [vmem:[%s1272] sm:$0x1]
    %v1274 = vld [vmem:[%s1272 + $0x1] sm:$0x1]
    %s1275 = scalar_lea.vmem %s12, 2
    %v1276 = vld [vmem:[%s1275] sm:$0x1]
    %v1277 = vld [vmem:[%s1275 + $0x1] sm:$0x1]
    %v1278 = vsel %vm327, %v1268, 0.0
    %1279 = vadd.xlane.f32.xlu0 %v1278
    %v1280 = vpop.xlane.xlu0 %1279
    %v1281 = vsel %vm327, %v1269, 0.0
    %1282 = vadd.xlane.f32.xlu0 %v1281
    %v1283 = vpop.xlane.xlu0 %1282
    %v1284 = vsel %vm327, %v1270, 0.0
    %1285 = vadd.xlane.f32.xlu0 %v1284
    %v1286 = vpop.xlane.xlu0 %1285
    %v1287 = vsel %vm327, %v1271, 0.0
    %1288 = vadd.xlane.f32.xlu0 %v1287
    %v1289 = vpop.xlane.xlu0 %1288
    %v1290 = vmul.f32 %v1280, %v340
    %v1291 = vmul.f32 %v1283, %v340
    %v1292 = vmul.f32 %v1286, %v340
    %v1293 = vmul.f32 %v1289, %v340
    %v1294 = vsub.f32 %v1268, %v1290
    %v1295 = vsub.f32 %v1269, %v1291
    %v1296 = vsub.f32 %v1270, %v1292
    %v1297 = vsub.f32 %v1271, %v1293
    %v1298 = vmul.f32 %v1294, %v1294
    %v1299 = vmul.f32 %v1295, %v1295
    %v1300 = vmul.f32 %v1296, %v1296
    %v1301 = vmul.f32 %v1297, %v1297
    %v1302 = vsel %vm327, %v1298, 0.0
    %1303 = vadd.xlane.f32.xlu0 %v1302
    %v1304 = vpop.xlane.xlu0 %1303
    %v1305 = vsel %vm327, %v1299, 0.0
    %1306 = vadd.xlane.f32.xlu0 %v1305
    %v1307 = vpop.xlane.xlu0 %1306
    %v1308 = vsel %vm327, %v1300, 0.0
    %1309 = vadd.xlane.f32.xlu0 %v1308
    %v1310 = vpop.xlane.xlu0 %1309
    %v1311 = vsel %vm327, %v1301, 0.0
    %1312 = vadd.xlane.f32.xlu0 %v1311
    %v1313 = vpop.xlane.xlu0 %1312
    %v1314 = vmul.f32 %v1304, %v340
    %v1315 = vmul.f32 %v1307, %v340
    %v1316 = vmul.f32 %v1310, %v340
    %v1317 = vmul.f32 %v1313, %v340
    %v1318 = vadd.f32 %v1314, 1e-05
    %v1319 = vadd.f32 %v1315, 1e-05
    %v1320 = vadd.f32 %v1316, 1e-05
    %v1321 = vadd.f32 %v1317, 1e-05
    %v1322 = vrsqrt.pop %v1318
    %v1323 = vrsqrt.pop %v1319
    %v1324 = vrsqrt.pop %v1320
    %v1325 = vrsqrt.pop %v1321
    %v1326 = vmul.f32 %v1294, %v1322
    %v1327 = vmul.f32 %v1295, %v1323
    %v1328 = vmul.f32 %v1296, %v1324
    %v1329 = vmul.f32 %v1297, %v1325
    %v1331 = vlaneseq
    %v1332 = vshrl.u32 %v1331, 7
    %v1333 = vsub.s32 0, %v1332
    %v1334 = vrot.slane %v1273, %v1333
    %v1336 = vmul.f32 %v1326, %v1334
    %v1337 = vmul.f32 %v1327, %v1334
    %v1338 = vmul.f32 %v1328, %v1334
    %v1339 = vmul.f32 %v1329, %v1334
    %v1341 = vlaneseq
    %v1342 = vshrl.u32 %v1341, 7
    %v1343 = vsub.s32 0, %v1342
    %v1344 = vrot.slane %v1276, %v1343
    %v1346 = vadd.f32 %v1336, %v1344
    %v1347 = vadd.f32 %v1337, %v1344
    %v1348 = vadd.f32 %v1338, %v1344
    %v1349 = vadd.f32 %v1339, %v1344
    %v1350 = vpack.c.bf16 %v1347, %v1346
    %v1351 = vpack.c.bf16 %v1349, %v1348
    %s1352 = scalar_lea.vmem %s7, 16
    %v1353 = vld [vmem:[%s1352] sm:$0xf]
    %v1354 = vld [vmem:[%s1352 + $0x4] sm:$0xf]
    %v1355 = vld [vmem:[%s1352 + $0x8] sm:$0xf]
    %v1356 = vld [vmem:[%s1352 + $0xc] sm:$0xf]
    %s1357 = scalar_lea.vmem %s8, 1
    %v1358 = vld [vmem:[%s1357] sm:$0x1]
    %v1360 = vlaneseq
    %v1361 = vshrl.u32 %v1360, 7
    %v1362 = vsub.s32 0, %v1361
    %v1363 = vrot.slane %v1358, %v1362
    %v1369 = vunpack.c.l.b16 %v1353
    %v1370 = vunpack.c.l.b16 %v1354
    %v1371 = vunpack.c.l.b16 %v1355
    %v1372 = vunpack.c.l.b16 %v1356
    %v1373 = vpack.c.b16 %v1370, %v1369
    %v1374 = vpack.c.b16 %v1372, %v1371
    %v1378 = vsel %vm327, %v1350, 0
    %v1381 = vsel %vm327, %v1351, 0
    %1383 = vmatprep.subr.bf16.mxu0 0
    %1384 = vmatpush1.bf16.msra.mxu0 %v1373
    %1385 = vmatprep.subr.bf16.mxu0 0
    %1386 = vmatpush1.bf16.msra.mxu0 %v1374
    %1387 = vmatprep.subr.bf16.mxu0 0
    %1388 = vmatpush1.bf16.msra.mxu0 0
    %1389 = vmatprep.subr.bf16.mxu0 0
    %1390 = vmatpush1.bf16.msra.mxu0 0
    %1391 = vmatprep.subr.bf16.mxu0 0
    %1392 = vmatpush1.bf16.msra.mxu0 0
    %1393 = vmatprep.subr.bf16.mxu0 0
    %1394 = vmatpush1.bf16.msra.mxu0 0
    %1395 = vmatprep.subr.bf16.mxu0 0
    %1396 = vmatpush1.bf16.msra.mxu0 0
    %1397 = vmatprep.subr.bf16.mxu0 0
    %1398 = vmatpush1.bf16.msra.mxu0 0
    %1399 = vmatprep.subr.bf16.mxu0 0
    %1400 = vmatpush1.bf16.msra.mxu0 0
    %1401 = vmatprep.subr.bf16.mxu0 0
    %1402 = vmatpush1.bf16.msra.mxu0 0
    %1403 = vmatprep.subr.bf16.mxu0 0
    %1404 = vmatpush1.bf16.msra.mxu0 0
    %1405 = vmatprep.subr.bf16.mxu0 0
    %1406 = vmatpush1.bf16.msra.mxu0 0
    %1407 = vmatprep.subr.bf16.mxu0 0
    %1408 = vmatpush1.bf16.msra.mxu0 0
    %1409 = vmatprep.subr.bf16.mxu0 0
    %1410 = vmatpush1.bf16.msra.mxu0 0
    %1411 = vmatprep.subr.bf16.mxu0 0
    %1412 = vmatpush1.bf16.msra.mxu0 0
    %1413 = vmatprep.subr.bf16.mxu0 0
    %1414 = vmatpush1.bf16.msra.mxu0 0
    %1415 = vmatprep.mubr.bf16.mxu0 0
    %1416 = vmatmul.mubr.bf16.gmra.mrb[0].mxu0 %v1378
    %v1417 = vpop.f32.mrb[0].mxu0
    %v1418 = vadd.f32 %v1363, %v1417
    %v1419 = vpop.f32.mrb[0].mxu0
    %v1420 = vpop.f32.mrb[0].mxu0
    %v1421 = vadd.f32 %v1363, %v1420
    %v1422 = vpop.f32.mrb[0].mxu0
    %1423 = vmatprep.mubr.bf16.mxu0 0
    %1424 = vmatmul.mubr.bf16.gmra.mrb[0].mxu0 %v1381
    %v1425 = vpop.f32.mrb[0].mxu0
    %v1426 = vadd.f32 %v1363, %v1425
    %v1427 = vpop.f32.mrb[0].mxu0
    %v1428 = vpop.f32.mrb[0].mxu0
    %v1429 = vadd.f32 %v1363, %v1428
    %v1430 = vpop.f32.mrb[0].mxu0
    %1431 = vdwg.mxu0
    %v1432 = vpack.c.bf16 %v1421, %v1418
    %v1433 = vpack.c.bf16 %v1429, %v1426
    %1436 = vrot.lane.b32.xlu0 %v1432, 96
    %v1437 = vpop.permute.xlu0 %1436
    %1438 = vrot.lane.b32.xlu0 %v1433, 96
    %v1439 = vpop.permute.xlu0 %1438
    %v1441 = vsel %vm489, %v1432, 0
    %v1444 = vsel %vm489, %v1433, 0
    %v1447 = vsel %vm489, %v1437, 0
    %v1450 = vsel %vm489, %v1439, 0
    %1452 = vmatprep.subr.bf16.mxu0 0
    %1453 = vmatpush1.bf16.xpose.msra.mxu0 %v1447
    %1454 = vmatprep.subr.bf16.mxu0 0
    %1455 = vmatpush1.bf16.xpose.msra.mxu0 %v1450
    %1456 = vmatprep.subr.bf16.mxu0 0
    %1457 = vmatpush1.bf16.xpose.msra.mxu0 0
    %1458 = vmatprep.subr.bf16.mxu0 0
    %1459 = vmatpush1.bf16.xpose.msra.mxu0 0
    %1460 = vmatprep.subr.bf16.mxu0 0
    %1461 = vmatpush1.bf16.xpose.msra.mxu0 0
    %1462 = vmatprep.subr.bf16.mxu0 0
    %1463 = vmatpush1.bf16.xpose.msra.mxu0 0
    %1464 = vmatprep.subr.bf16.mxu0 0
    %1465 = vmatpush1.bf16.xpose.msra.mxu0 0
    %1466 = vmatprep.subr.bf16.mxu0 0
    %1467 = vmatpush1.bf16.xpose.msra.mxu0 0
    %1468 = vmatprep.subr.bf16.mxu0 0
    %1469 = vmatpush1.bf16.xpose.msra.mxu0 0
    %1470 = vmatprep.subr.bf16.mxu0 0
    %1471 = vmatpush1.bf16.xpose.msra.mxu0 0
    %1472 = vmatprep.subr.bf16.mxu0 0
    %1473 = vmatpush1.bf16.xpose.msra.mxu0 0
    %1474 = vmatprep.subr.bf16.mxu0 0
    %1475 = vmatpush1.bf16.xpose.msra.mxu0 0
    %1476 = vmatprep.subr.bf16.mxu0 0
    %1477 = vmatpush1.bf16.xpose.msra.mxu0 0
    %1478 = vmatprep.subr.bf16.mxu0 0
    %1479 = vmatpush1.bf16.xpose.msra.mxu0 0
    %1480 = vmatprep.subr.bf16.mxu0 0
    %1481 = vmatpush1.bf16.xpose.msra.mxu0 0
    %1482 = vmatprep.subr.bf16.mxu0 0
    %1483 = vmatpush1.bf16.xpose.msra.mxu0 0
    %1484 = vmatprep.mubr.bf16.mxu0 0
    %1485 = vmatmul.mubr.bf16.gmra.mrb[0].mxu0 %v1441
    %v1486 = vpop.f32.mrb[0].mxu0
    %v1487 = vadd.f32 0.0, %v1486
    %v1488 = vpop.f32.mrb[0].mxu0
    %v1489 = vpop.f32.mrb[0].mxu0
    %v1490 = vadd.f32 0.0, %v1489
    %v1491 = vpop.f32.mrb[0].mxu0
    %1492 = vmatprep.mubr.bf16.mxu0 0
    %1493 = vmatmul.mubr.bf16.gmra.mrb[0].mxu0 %v1444
    %v1494 = vpop.f32.mrb[0].mxu0
    %v1495 = vadd.f32 0.0, %v1494
    %v1496 = vpop.f32.mrb[0].mxu0
    %v1497 = vpop.f32.mrb[0].mxu0
    %v1498 = vadd.f32 0.0, %v1497
    %v1499 = vpop.f32.mrb[0].mxu0
    %1500 = vdwg.mxu0
    %v1501 = vmul.f32 %v1487, 0.25
    %v1502 = vmul.f32 %v1490, 0.25
    %v1503 = vmul.f32 %v1495, 0.25
    %v1504 = vmul.f32 %v1498, 0.25
    %v1505 = vadd.f32 %v1501, %v319
    %v1506 = vadd.f32 %v1502, %v320
    %v1507 = vadd.f32 %v1503, %v321
    %v1508 = vadd.f32 %v1504, %v322
    %v1509 = vsel %vm327, %v1505, -inf
    %1510 = vmax.xlane.f32.xlu0 %v1509
    %v1511 = vpop.xlane.xlu0 %1510
    %v1512 = vsel %vm327, %v1506, -inf
    %1513 = vmax.xlane.f32.xlu0 %v1512
    %v1514 = vpop.xlane.xlu0 %1513
    %v1515 = vsel %vm327, %v1507, -inf
    %1516 = vmax.xlane.f32.xlu0 %v1515
    %v1517 = vpop.xlane.xlu0 %1516
    %v1518 = vsel %vm327, %v1508, -inf
    %1519 = vmax.xlane.f32.xlu0 %v1518
    %v1520 = vpop.xlane.xlu0 %1519
    %v1521 = vsub.f32 %v1505, %v1511
    %v1522 = vsub.f32 %v1506, %v1514
    %v1523 = vsub.f32 %v1507, %v1517
    %v1524 = vsub.f32 %v1508, %v1520
    %v1525 = vmul.f32 %v1521, 1.442695
    %v1526 = vpow.pop %v1525
    %v1527 = vmul.f32 %v1522, 1.442695
    %v1528 = vpow.pop %v1527
    %v1529 = vmul.f32 %v1523, 1.442695
    %v1530 = vpow.pop %v1529
    %v1531 = vmul.f32 %v1524, 1.442695
    %v1532 = vpow.pop %v1531
    %v1533 = vsel %vm327, %v1526, 0.0
    %1534 = vadd.xlane.f32.xlu0 %v1533
    %v1535 = vpop.xlane.xlu0 %1534
    %v1536 = vsel %vm327, %v1528, 0.0
    %1537 = vadd.xlane.f32.xlu0 %v1536
    %v1538 = vpop.xlane.xlu0 %1537
    %v1539 = vsel %vm327, %v1530, 0.0
    %1540 = vadd.xlane.f32.xlu0 %v1539
    %v1541 = vpop.xlane.xlu0 %1540
    %v1542 = vsel %vm327, %v1532, 0.0
    %1543 = vadd.xlane.f32.xlu0 %v1542
    %v1544 = vpop.xlane.xlu0 %1543
    %v1545 = vrcp.pop %v1535
    %v1546 = vrcp.pop %v1538
    %v1547 = vrcp.pop %v1541
    %v1548 = vrcp.pop %v1544
    %v1549 = vmul.f32 %v1526, %v1545
    %v1550 = vmul.f32 %v1528, %v1546
    %v1551 = vmul.f32 %v1530, %v1547
    %v1552 = vmul.f32 %v1532, %v1548
    %v1553 = vpack.c.bf16 %v1550, %v1549
    %v1554 = vpack.c.bf16 %v1552, %v1551
    %1555 = vrot.lane.b32.xlu0 %v1432, 64
    %v1556 = vpop.permute.xlu0 %1555
    %1557 = vrot.lane.b32.xlu0 %v1433, 64
    %v1558 = vpop.permute.xlu0 %1557
    %v1562 = vsel %vm327, %v1553, 0
    %v1565 = vsel %vm327, %v1554, 0
    %1567 = vmatprep.subr.bf16.mxu0 0
    %1568 = vmatpush1.bf16.msra.mxu0 %v1556
    %1569 = vmatprep.subr.bf16.mxu0 0
    %1570 = vmatpush1.bf16.msra.mxu0 %v1558
    %1571 = vmatprep.subr.bf16.mxu0 0
    %1572 = vmatpush1.bf16.msra.mxu0 0
    %1573 = vmatprep.subr.bf16.mxu0 0
    %1574 = vmatpush1.bf16.msra.mxu0 0
    %1575 = vmatprep.subr.bf16.mxu0 0
    %1576 = vmatpush1.bf16.msra.mxu0 0
    %1577 = vmatprep.subr.bf16.mxu0 0
    %1578 = vmatpush1.bf16.msra.mxu0 0
    %1579 = vmatprep.subr.bf16.mxu0 0
    %1580 = vmatpush1.bf16.msra.mxu0 0
    %1581 = vmatprep.subr.bf16.mxu0 0
    %1582 = vmatpush1.bf16.msra.mxu0 0
    %1583 = vmatprep.subr.bf16.mxu0 0
    %1584 = vmatpush1.bf16.msra.mxu0 0
    %1585 = vmatprep.subr.bf16.mxu0 0
    %1586 = vmatpush1.bf16.msra.mxu0 0
    %1587 = vmatprep.subr.bf16.mxu0 0
    %1588 = vmatpush1.bf16.msra.mxu0 0
    %1589 = vmatprep.subr.bf16.mxu0 0
    %1590 = vmatpush1.bf16.msra.mxu0 0
    %1591 = vmatprep.subr.bf16.mxu0 0
    %1592 = vmatpush1.bf16.msra.mxu0 0
    %1593 = vmatprep.subr.bf16.mxu0 0
    %1594 = vmatpush1.bf16.msra.mxu0 0
    %1595 = vmatprep.subr.bf16.mxu0 0
    %1596 = vmatpush1.bf16.msra.mxu0 0
    %1597 = vmatprep.subr.bf16.mxu0 0
    %1598 = vmatpush1.bf16.msra.mxu0 0
    %1599 = vmatprep.mubr.bf16.mxu0 0
    %1600 = vmatmul.mubr.bf16.gmra.mrb[0].mxu0 %v1562
    %v1601 = vpop.f32.mrb[0].mxu0
    %v1602 = vadd.f32 0.0, %v1601
    %v1603 = vpop.f32.mrb[0].mxu0
    %v1604 = vpop.f32.mrb[0].mxu0
    %v1605 = vadd.f32 0.0, %v1604
    %v1606 = vpop.f32.mrb[0].mxu0
    %1607 = vmatprep.mubr.bf16.mxu0 0
    %1608 = vmatmul.mubr.bf16.gmra.mrb[0].mxu0 %v1565
    %v1609 = vpop.f32.mrb[0].mxu0
    %v1610 = vadd.f32 0.0, %v1609
    %v1611 = vpop.f32.mrb[0].mxu0
    %v1612 = vpop.f32.mrb[0].mxu0
    %v1613 = vadd.f32 0.0, %v1612
    %v1614 = vpop.f32.mrb[0].mxu0
    %1615 = vdwg.mxu0
    %1616 = vrot.lane.b32.xlu0 %v1432, 112
    %v1617 = vpop.permute.xlu0 %1616
    %1618 = vrot.lane.b32.xlu0 %v1433, 112
    %v1619 = vpop.permute.xlu0 %1618
    %1620 = vrot.lane.b32.xlu0 %v1432, 80
    %v1621 = vpop.permute.xlu0 %1620
    %1622 = vrot.lane.b32.xlu0 %v1433, 80
    %v1623 = vpop.permute.xlu0 %1622
    %v1625 = vsel %vm489, %v1617, 0
    %v1628 = vsel %vm489, %v1619, 0
    %v1631 = vsel %vm489, %v1621, 0
    %v1634 = vsel %vm489, %v1623, 0
    %1636 = vmatprep.subr.bf16.mxu0 0
    %1637 = vmatpush1.bf16.xpose.msra.mxu0 %v1631
    %1638 = vmatprep.subr.bf16.mxu0 0
    %1639 = vmatpush1.bf16.xpose.msra.mxu0 %v1634
    %1640 = vmatprep.subr.bf16.mxu0 0
    %1641 = vmatpush1.bf16.xpose.msra.mxu0 0
    %1642 = vmatprep.subr.bf16.mxu0 0
    %1643 = vmatpush1.bf16.xpose.msra.mxu0 0
    %1644 = vmatprep.subr.bf16.mxu0 0
    %1645 = vmatpush1.bf16.xpose.msra.mxu0 0
    %1646 = vmatprep.subr.bf16.mxu0 0
    %1647 = vmatpush1.bf16.xpose.msra.mxu0 0
    %1648 = vmatprep.subr.bf16.mxu0 0
    %1649 = vmatpush1.bf16.xpose.msra.mxu0 0
    %1650 = vmatprep.subr.bf16.mxu0 0
    %1651 = vmatpush1.bf16.xpose.msra.mxu0 0
    %1652 = vmatprep.subr.bf16.mxu0 0
    %1653 = vmatpush1.bf16.xpose.msra.mxu0 0
    %1654 = vmatprep.subr.bf16.mxu0 0
    %1655 = vmatpush1.bf16.xpose.msra.mxu0 0
    %1656 = vmatprep.subr.bf16.mxu0 0
    %1657 = vmatpush1.bf16.xpose.msra.mxu0 0
    %1658 = vmatprep.subr.bf16.mxu0 0
    %1659 = vmatpush1.bf16.xpose.msra.mxu0 0
    %1660 = vmatprep.subr.bf16.mxu0 0
    %1661 = vmatpush1.bf16.xpose.msra.mxu0 0
    %1662 = vmatprep.subr.bf16.mxu0 0
    %1663 = vmatpush1.bf16.xpose.msra.mxu0 0
    %1664 = vmatprep.subr.bf16.mxu0 0
    %1665 = vmatpush1.bf16.xpose.msra.mxu0 0
    %1666 = vmatprep.subr.bf16.mxu0 0
    %1667 = vmatpush1.bf16.xpose.msra.mxu0 0
    %1668 = vmatprep.mubr.bf16.mxu0 0
    %1669 = vmatmul.mubr.bf16.gmra.mrb[0].mxu0 %v1625
    %v1670 = vpop.f32.mrb[0].mxu0
    %v1671 = vadd.f32 0.0, %v1670
    %v1672 = vpop.f32.mrb[0].mxu0
    %v1673 = vpop.f32.mrb[0].mxu0
    %v1674 = vadd.f32 0.0, %v1673
    %v1675 = vpop.f32.mrb[0].mxu0
    %1676 = vmatprep.mubr.bf16.mxu0 0
    %1677 = vmatmul.mubr.bf16.gmra.mrb[0].mxu0 %v1628
    %v1678 = vpop.f32.mrb[0].mxu0
    %v1679 = vadd.f32 0.0, %v1678
    %v1680 = vpop.f32.mrb[0].mxu0
    %v1681 = vpop.f32.mrb[0].mxu0
    %v1682 = vadd.f32 0.0, %v1681
    %v1683 = vpop.f32.mrb[0].mxu0
    %1684 = vdwg.mxu0
    %v1685 = vmul.f32 %v1671, 0.25
    %v1686 = vmul.f32 %v1674, 0.25
    %v1687 = vmul.f32 %v1679, 0.25
    %v1688 = vmul.f32 %v1682, 0.25
    %v1689 = vadd.f32 %v1685, %v319
    %v1690 = vadd.f32 %v1686, %v320
    %v1691 = vadd.f32 %v1687, %v321
    %v1692 = vadd.f32 %v1688, %v322
    %v1693 = vsel %vm327, %v1689, -inf
    %1694 = vmax.xlane.f32.xlu0 %v1693
    %v1695 = vpop.xlane.xlu0 %1694
    %v1696 = vsel %vm327, %v1690, -inf
    %1697 = vmax.xlane.f32.xlu0 %v1696
    %v1698 = vpop.xlane.xlu0 %1697
    %v1699 = vsel %vm327, %v1691, -inf
    %1700 = vmax.xlane.f32.xlu0 %v1699
    %v1701 = vpop.xlane.xlu0 %1700
    %v1702 = vsel %vm327, %v1692, -inf
    %1703 = vmax.xlane.f32.xlu0 %v1702
    %v1704 = vpop.xlane.xlu0 %1703
    %v1705 = vsub.f32 %v1689, %v1695
    %v1706 = vsub.f32 %v1690, %v1698
    %v1707 = vsub.f32 %v1691, %v1701
    %v1708 = vsub.f32 %v1692, %v1704
    %v1709 = vmul.f32 %v1705, 1.442695
    %v1710 = vpow.pop %v1709
    %v1711 = vmul.f32 %v1706, 1.442695
    %v1712 = vpow.pop %v1711
    %v1713 = vmul.f32 %v1707, 1.442695
    %v1714 = vpow.pop %v1713
    %v1715 = vmul.f32 %v1708, 1.442695
    %v1716 = vpow.pop %v1715
    %v1717 = vsel %vm327, %v1710, 0.0
    %1718 = vadd.xlane.f32.xlu0 %v1717
    %v1719 = vpop.xlane.xlu0 %1718
    %v1720 = vsel %vm327, %v1712, 0.0
    %1721 = vadd.xlane.f32.xlu0 %v1720
    %v1722 = vpop.xlane.xlu0 %1721
    %v1723 = vsel %vm327, %v1714, 0.0
    %1724 = vadd.xlane.f32.xlu0 %v1723
    %v1725 = vpop.xlane.xlu0 %1724
    %v1726 = vsel %vm327, %v1716, 0.0
    %1727 = vadd.xlane.f32.xlu0 %v1726
    %v1728 = vpop.xlane.xlu0 %1727
    %v1729 = vrcp.pop %v1719
    %v1730 = vrcp.pop %v1722
    %v1731 = vrcp.pop %v1725
    %v1732 = vrcp.pop %v1728
    %v1733 = vmul.f32 %v1710, %v1729
    %v1734 = vmul.f32 %v1712, %v1730
    %v1735 = vmul.f32 %v1714, %v1731
    %v1736 = vmul.f32 %v1716, %v1732
    %v1737 = vpack.c.bf16 %v1734, %v1733
    %v1738 = vpack.c.bf16 %v1736, %v1735
    %1739 = vrot.lane.b32.xlu0 %v1432, 48
    %v1740 = vpop.permute.xlu0 %1739
    %1741 = vrot.lane.b32.xlu0 %v1433, 48
    %v1742 = vpop.permute.xlu0 %1741
    %v1746 = vsel %vm327, %v1737, 0
    %v1749 = vsel %vm327, %v1738, 0
    %1751 = vmatprep.subr.bf16.mxu0 0
    %1752 = vmatpush1.bf16.msra.mxu0 %v1740
    %1753 = vmatprep.subr.bf16.mxu0 0
    %1754 = vmatpush1.bf16.msra.mxu0 %v1742
    %1755 = vmatprep.subr.bf16.mxu0 0
    %1756 = vmatpush1.bf16.msra.mxu0 0
    %1757 = vmatprep.subr.bf16.mxu0 0
    %1758 = vmatpush1.bf16.msra.mxu0 0
    %1759 = vmatprep.subr.bf16.mxu0 0
    %1760 = vmatpush1.bf16.msra.mxu0 0
    %1761 = vmatprep.subr.bf16.mxu0 0
    %1762 = vmatpush1.bf16.msra.mxu0 0
    %1763 = vmatprep.subr.bf16.mxu0 0
    %1764 = vmatpush1.bf16.msra.mxu0 0
    %1765 = vmatprep.subr.bf16.mxu0 0
    %1766 = vmatpush1.bf16.msra.mxu0 0
    %1767 = vmatprep.subr.bf16.mxu0 0
    %1768 = vmatpush1.bf16.msra.mxu0 0
    %1769 = vmatprep.subr.bf16.mxu0 0
    %1770 = vmatpush1.bf16.msra.mxu0 0
    %1771 = vmatprep.subr.bf16.mxu0 0
    %1772 = vmatpush1.bf16.msra.mxu0 0
    %1773 = vmatprep.subr.bf16.mxu0 0
    %1774 = vmatpush1.bf16.msra.mxu0 0
    %1775 = vmatprep.subr.bf16.mxu0 0
    %1776 = vmatpush1.bf16.msra.mxu0 0
    %1777 = vmatprep.subr.bf16.mxu0 0
    %1778 = vmatpush1.bf16.msra.mxu0 0
    %1779 = vmatprep.subr.bf16.mxu0 0
    %1780 = vmatpush1.bf16.msra.mxu0 0
    %1781 = vmatprep.subr.bf16.mxu0 0
    %1782 = vmatpush1.bf16.msra.mxu0 0
    %1783 = vmatprep.mubr.bf16.mxu0 0
    %1784 = vmatmul.mubr.bf16.gmra.mrb[0].mxu0 %v1746
    %v1785 = vpop.f32.mrb[0].mxu0
    %v1786 = vadd.f32 0.0, %v1785
    %v1787 = vpop.f32.mrb[0].mxu0
    %v1788 = vpop.f32.mrb[0].mxu0
    %v1789 = vadd.f32 0.0, %v1788
    %v1790 = vpop.f32.mrb[0].mxu0
    %1791 = vmatprep.mubr.bf16.mxu0 0
    %1792 = vmatmul.mubr.bf16.gmra.mrb[0].mxu0 %v1749
    %v1793 = vpop.f32.mrb[0].mxu0
    %v1794 = vadd.f32 0.0, %v1793
    %v1795 = vpop.f32.mrb[0].mxu0
    %v1796 = vpop.f32.mrb[0].mxu0
    %v1797 = vadd.f32 0.0, %v1796
    %v1798 = vpop.f32.mrb[0].mxu0
    %1799 = vdwg.mxu0
    %1804 = vrot.lane.b32.xlu0 %v1786, 16
    %v1805 = vpop.permute.xlu0 %1804
    %1806 = vrot.lane.b32.xlu0 %v1789, 16
    %v1807 = vpop.permute.xlu0 %1806
    %1808 = vrot.lane.b32.xlu0 %v1794, 16
    %v1809 = vpop.permute.xlu0 %1808
    %1810 = vrot.lane.b32.xlu0 %v1797, 16
    %v1811 = vpop.permute.xlu0 %1810
    %v1816 = vsel %vm489, %v1602, %v1805
    %v1817 = vsel %vm489, %v1605, %v1807
    %v1818 = vsel %vm489, %v1610, %v1809
    %v1819 = vsel %vm489, %v1613, %v1811
    %v1820 = vpack.c.bf16 %v1817, %v1816
    %v1821 = vpack.c.bf16 %v1819, %v1818
    %s1822 = scalar_lea.vmem %s9, 16
    %v1823 = vld [vmem:[%s1822] sm:$0xf]
    %v1824 = vld [vmem:[%s1822 + $0x4] sm:$0xf]
    %v1825 = vld [vmem:[%s1822 + $0x8] sm:$0xf]
    %v1826 = vld [vmem:[%s1822 + $0xc] sm:$0xf]
    %v1831 = vunpack.c.l.b16 %v1823
    %v1832 = vunpack.c.l.b16 %v1824
    %v1833 = vunpack.c.l.b16 %v1825
    %v1834 = vunpack.c.l.b16 %v1826
    %v1835 = vpack.c.b16 %v1832, %v1831
    %v1836 = vpack.c.b16 %v1834, %v1833
    %v1840 = vsel %vm327, %v1820, 0
    %v1843 = vsel %vm327, %v1821, 0
    %1845 = vmatprep.subr.bf16.mxu0 0
    %1846 = vmatpush1.bf16.msra.mxu0 %v1835
    %1847 = vmatprep.subr.bf16.mxu0 0
    %1848 = vmatpush1.bf16.msra.mxu0 %v1836
    %1849 = vmatprep.subr.bf16.mxu0 0
    %1850 = vmatpush1.bf16.msra.mxu0 0
    %1851 = vmatprep.subr.bf16.mxu0 0
    %1852 = vmatpush1.bf16.msra.mxu0 0
    %1853 = vmatprep.subr.bf16.mxu0 0
    %1854 = vmatpush1.bf16.msra.mxu0 0
    %1855 = vmatprep.subr.bf16.mxu0 0
    %1856 = vmatpush1.bf16.msra.mxu0 0
    %1857 = vmatprep.subr.bf16.mxu0 0
    %1858 = vmatpush1.bf16.msra.mxu0 0
    %1859 = vmatprep.subr.bf16.mxu0 0
    %1860 = vmatpush1.bf16.msra.mxu0 0
    %1861 = vmatprep.subr.bf16.mxu0 0
    %1862 = vmatpush1.bf16.msra.mxu0 0
    %1863 = vmatprep.subr.bf16.mxu0 0
    %1864 = vmatpush1.bf16.msra.mxu0 0
    %1865 = vmatprep.subr.bf16.mxu0 0
    %1866 = vmatpush1.bf16.msra.mxu0 0
    %1867 = vmatprep.subr.bf16.mxu0 0
    %1868 = vmatpush1.bf16.msra.mxu0 0
    %1869 = vmatprep.subr.bf16.mxu0 0
    %1870 = vmatpush1.bf16.msra.mxu0 0
    %1871 = vmatprep.subr.bf16.mxu0 0
    %1872 = vmatpush1.bf16.msra.mxu0 0
    %1873 = vmatprep.subr.bf16.mxu0 0
    %1874 = vmatpush1.bf16.msra.mxu0 0
    %1875 = vmatprep.subr.bf16.mxu0 0
    %1876 = vmatpush1.bf16.msra.mxu0 0
    %1877 = vmatprep.mubr.bf16.mxu0 0
    %1878 = vmatmul.mubr.bf16.gmra.mrb[0].mxu0 %v1840
    %v1879 = vpop.f32.mrb[0].mxu0
    %v1880 = vadd.f32 0.0, %v1879
    %v1881 = vpop.f32.mrb[0].mxu0
    %v1882 = vpop.f32.mrb[0].mxu0
    %v1883 = vadd.f32 0.0, %v1882
    %v1884 = vpop.f32.mrb[0].mxu0
    %1885 = vmatprep.mubr.bf16.mxu0 0
    %1886 = vmatmul.mubr.bf16.gmra.mrb[0].mxu0 %v1843
    %v1887 = vpop.f32.mrb[0].mxu0
    %v1888 = vadd.f32 0.0, %v1887
    %v1889 = vpop.f32.mrb[0].mxu0
    %v1890 = vpop.f32.mrb[0].mxu0
    %v1891 = vadd.f32 0.0, %v1890
    %v1892 = vpop.f32.mrb[0].mxu0
    %1893 = vdwg.mxu0
    %v1894 = vadd.f32 %v1268, %v1880
    %v1895 = vadd.f32 %v1269, %v1883
    %v1896 = vadd.f32 %v1270, %v1888
    %v1897 = vadd.f32 %v1271, %v1891
    %s1898 = scalar_lea.vmem %s10, 1
    %v1899 = vld [vmem:[%s1898] sm:$0x1]
    %v1901 = vlaneseq
    %v1902 = vshrl.u32 %v1901, 7
    %v1903 = vsub.s32 0, %v1902
    %v1904 = vrot.slane %v1899, %v1903
    %v1906 = vadd.f32 %v1894, %v1904
    %v1907 = vadd.f32 %v1895, %v1904
    %v1908 = vadd.f32 %v1896, %v1904
    %v1909 = vadd.f32 %v1897, %v1904
    %v1910 = vsel %vm327, %v1906, 0.0
    %1911 = vadd.xlane.f32.xlu0 %v1910
    %v1912 = vpop.xlane.xlu0 %1911
    %v1913 = vsel %vm327, %v1907, 0.0
    %1914 = vadd.xlane.f32.xlu0 %v1913
    %v1915 = vpop.xlane.xlu0 %1914
    %v1916 = vsel %vm327, %v1908, 0.0
    %1917 = vadd.xlane.f32.xlu0 %v1916
    %v1918 = vpop.xlane.xlu0 %1917
    %v1919 = vsel %vm327, %v1909, 0.0
    %1920 = vadd.xlane.f32.xlu0 %v1919
    %v1921 = vpop.xlane.xlu0 %1920
    %v1922 = vmul.f32 %v1912, %v340
    %v1923 = vmul.f32 %v1915, %v340
    %v1924 = vmul.f32 %v1918, %v340
    %v1925 = vmul.f32 %v1921, %v340
    %v1926 = vsub.f32 %v1906, %v1922
    %v1927 = vsub.f32 %v1907, %v1923
    %v1928 = vsub.f32 %v1908, %v1924
    %v1929 = vsub.f32 %v1909, %v1925
    %v1930 = vmul.f32 %v1926, %v1926
    %v1931 = vmul.f32 %v1927, %v1927
    %v1932 = vmul.f32 %v1928, %v1928
    %v1933 = vmul.f32 %v1929, %v1929
    %v1934 = vsel %vm327, %v1930, 0.0
    %1935 = vadd.xlane.f32.xlu0 %v1934
    %v1936 = vpop.xlane.xlu0 %1935
    %v1937 = vsel %vm327, %v1931, 0.0
    %1938 = vadd.xlane.f32.xlu0 %v1937
    %v1939 = vpop.xlane.xlu0 %1938
    %v1940 = vsel %vm327, %v1932, 0.0
    %1941 = vadd.xlane.f32.xlu0 %v1940
    %v1942 = vpop.xlane.xlu0 %1941
    %v1943 = vsel %vm327, %v1933, 0.0
    %1944 = vadd.xlane.f32.xlu0 %v1943
    %v1945 = vpop.xlane.xlu0 %1944
    %v1946 = vmul.f32 %v1936, %v340
    %v1947 = vmul.f32 %v1939, %v340
    %v1948 = vmul.f32 %v1942, %v340
    %v1949 = vmul.f32 %v1945, %v340
    %v1950 = vadd.f32 %v1946, 1e-05
    %v1951 = vadd.f32 %v1947, 1e-05
    %v1952 = vadd.f32 %v1948, 1e-05
    %v1953 = vadd.f32 %v1949, 1e-05
    %v1954 = vrsqrt.pop %v1950
    %v1955 = vrsqrt.pop %v1951
    %v1956 = vrsqrt.pop %v1952
    %v1957 = vrsqrt.pop %v1953
    %v1958 = vmul.f32 %v1926, %v1954
    %v1959 = vmul.f32 %v1927, %v1955
    %v1960 = vmul.f32 %v1928, %v1956
    %v1961 = vmul.f32 %v1929, %v1957
    %v1963 = vlaneseq
    %v1964 = vshrl.u32 %v1963, 7
    %v1965 = vsub.s32 0, %v1964
    %v1966 = vrot.slane %v1274, %v1965
    %v1968 = vmul.f32 %v1958, %v1966
    %v1969 = vmul.f32 %v1959, %v1966
    %v1970 = vmul.f32 %v1960, %v1966
    %v1971 = vmul.f32 %v1961, %v1966
    %v1973 = vlaneseq
    %v1974 = vshrl.u32 %v1973, 7
    %v1975 = vsub.s32 0, %v1974
    %v1976 = vrot.slane %v1277, %v1975
    %v1978 = vadd.f32 %v1968, %v1976
    %v1979 = vadd.f32 %v1969, %v1976
    %v1980 = vadd.f32 %v1970, %v1976
    %v1981 = vadd.f32 %v1971, %v1976
    %v1982 = vpack.c.bf16 %v1979, %v1978
    %v1983 = vpack.c.bf16 %v1981, %v1980
    %s1984 = scalar_lea.vmem %s13, 16
    %v1985 = vld [vmem:[%s1984] sm:$0xf]
    %v1986 = vld [vmem:[%s1984 + $0x4] sm:$0xf]
    %v1987 = vld [vmem:[%s1984 + $0x8] sm:$0xf]
    %v1988 = vld [vmem:[%s1984 + $0xc] sm:$0xf]
    %s1989 = scalar_lea.vmem %s14, 1
    %v1990 = vld [vmem:[%s1989] sm:$0x1]
    %v1992 = vlaneseq
    %v1993 = vshrl.u32 %v1992, 7
    %v1994 = vsub.s32 0, %v1993
    %v1995 = vrot.slane %v1990, %v1994
    %v2001 = vunpack.c.l.b16 %v1985
    %v2002 = vunpack.c.l.b16 %v1986
    %v2003 = vunpack.c.l.b16 %v1987
    %v2004 = vunpack.c.l.b16 %v1988
    %v2005 = vpack.c.b16 %v2002, %v2001
    %v2006 = vpack.c.b16 %v2004, %v2003
    %v2010 = vsel %vm327, %v1982, 0
    %v2013 = vsel %vm327, %v1983, 0
    %2015 = vmatprep.subr.bf16.mxu0 0
    %2016 = vmatpush1.bf16.msra.mxu0 %v2005
    %2017 = vmatprep.subr.bf16.mxu0 0
    %2018 = vmatpush1.bf16.msra.mxu0 %v2006
    %2019 = vmatprep.subr.bf16.mxu0 0
    %2020 = vmatpush1.bf16.msra.mxu0 0
    %2021 = vmatprep.subr.bf16.mxu0 0
    %2022 = vmatpush1.bf16.msra.mxu0 0
    %2023 = vmatprep.subr.bf16.mxu0 0
    %2024 = vmatpush1.bf16.msra.mxu0 0
    %2025 = vmatprep.subr.bf16.mxu0 0
    %2026 = vmatpush1.bf16.msra.mxu0 0
    %2027 = vmatprep.subr.bf16.mxu0 0
    %2028 = vmatpush1.bf16.msra.mxu0 0
    %2029 = vmatprep.subr.bf16.mxu0 0
    %2030 = vmatpush1.bf16.msra.mxu0 0
    %2031 = vmatprep.subr.bf16.mxu0 0
    %2032 = vmatpush1.bf16.msra.mxu0 0
    %2033 = vmatprep.subr.bf16.mxu0 0
    %2034 = vmatpush1.bf16.msra.mxu0 0
    %2035 = vmatprep.subr.bf16.mxu0 0
    %2036 = vmatpush1.bf16.msra.mxu0 0
    %2037 = vmatprep.subr.bf16.mxu0 0
    %2038 = vmatpush1.bf16.msra.mxu0 0
    %2039 = vmatprep.subr.bf16.mxu0 0
    %2040 = vmatpush1.bf16.msra.mxu0 0
    %2041 = vmatprep.subr.bf16.mxu0 0
    %2042 = vmatpush1.bf16.msra.mxu0 0
    %2043 = vmatprep.subr.bf16.mxu0 0
    %2044 = vmatpush1.bf16.msra.mxu0 0
    %2045 = vmatprep.subr.bf16.mxu0 0
    %2046 = vmatpush1.bf16.msra.mxu0 0
    %2047 = vmatprep.mubr.bf16.mxu0 0
    %2048 = vmatmul.mubr.bf16.gmra.mrb[0].mxu0 %v2010
    %v2049 = vpop.f32.mrb[0].mxu0
    %v2050 = vadd.f32 %v1995, %v2049
    %v2051 = vpop.f32.mrb[0].mxu0
    %v2052 = vpop.f32.mrb[0].mxu0
    %v2053 = vadd.f32 %v1995, %v2052
    %v2054 = vpop.f32.mrb[0].mxu0
    %2055 = vmatprep.mubr.bf16.mxu0 0
    %2056 = vmatmul.mubr.bf16.gmra.mrb[0].mxu0 %v2013
    %v2057 = vpop.f32.mrb[0].mxu0
    %v2058 = vadd.f32 %v1995, %v2057
    %v2059 = vpop.f32.mrb[0].mxu0
    %v2060 = vpop.f32.mrb[0].mxu0
    %v2061 = vadd.f32 %v1995, %v2060
    %v2062 = vpop.f32.mrb[0].mxu0
    %2063 = vdwg.mxu0
    %v2064 = vmul.f32 %v2050, 0.5
    %v2065 = vmul.f32 %v2053, 0.5
    %v2066 = vmul.f32 %v2058, 0.5
    %v2067 = vmul.f32 %v2061, 0.5
    %v2068 = vmul.f32 %v2050, 0.044715
    %v2069 = vmul.f32 %v2053, 0.044715
    %v2070 = vmul.f32 %v2058, 0.044715
    %v2071 = vmul.f32 %v2061, 0.044715
    %v2072 = vmul.f32 %v2068, %v2050
    %v2073 = vmul.f32 %v2069, %v2053
    %v2074 = vmul.f32 %v2070, %v2058
    %v2075 = vmul.f32 %v2071, %v2061
    %v2076 = vmul.f32 %v2072, %v2050
    %v2077 = vmul.f32 %v2073, %v2053
    %v2078 = vmul.f32 %v2074, %v2058
    %v2079 = vmul.f32 %v2075, %v2061
    %v2080 = vadd.f32 %v2050, %v2076
    %v2081 = vadd.f32 %v2053, %v2077
    %v2082 = vadd.f32 %v2058, %v2078
    %v2083 = vadd.f32 %v2061, %v2079
    %v2084 = vmul.f32 %v2080, 0.7978846
    %v2085 = vmul.f32 %v2081, 0.7978846
    %v2086 = vmul.f32 %v2082, 0.7978846
    %v2087 = vmul.f32 %v2083, 0.7978846
    %v2088 = vtanh.pop %v2084
    %v2089 = vtanh.pop %v2085
    %v2090 = vtanh.pop %v2086
    %v2091 = vtanh.pop %v2087
    %v2092 = vadd.f32 %v2088, 1.0
    %v2093 = vadd.f32 %v2089, 1.0
    %v2094 = vadd.f32 %v2090, 1.0
    %v2095 = vadd.f32 %v2091, 1.0
    %v2096 = vmul.f32 %v2064, %v2092
    %v2097 = vmul.f32 %v2065, %v2093
    %v2098 = vmul.f32 %v2066, %v2094
    %v2099 = vmul.f32 %v2067, %v2095
    %v2100 = vpack.c.bf16 %v2097, %v2096
    %v2101 = vpack.c.bf16 %v2099, %v2098
    %s2102 = scalar_lea.vmem %s15, 64
    %v2103 = vld [vmem:[%s2102] sm:$0xf]
    %v2104 = vld [vmem:[%s2102 + $0x4] sm:$0xf]
    %v2105 = vld [vmem:[%s2102 + $0x8] sm:$0xf]
    %v2106 = vld [vmem:[%s2102 + $0xc] sm:$0xf]
    %v2107 = vld [vmem:[%s2102 + $0x10] sm:$0xf]
    %v2108 = vld [vmem:[%s2102 + $0x14] sm:$0xf]
    %v2109 = vld [vmem:[%s2102 + $0x18] sm:$0xf]
    %v2110 = vld [vmem:[%s2102 + $0x1c] sm:$0xf]
    %v2111 = vld [vmem:[%s2102 + $0x20] sm:$0xf]
    %v2112 = vld [vmem:[%s2102 + $0x24] sm:$0xf]
    %v2113 = vld [vmem:[%s2102 + $0x28] sm:$0xf]
    %v2114 = vld [vmem:[%s2102 + $0x2c] sm:$0xf]
    %v2115 = vld [vmem:[%s2102 + $0x30] sm:$0xf]
    %v2116 = vld [vmem:[%s2102 + $0x34] sm:$0xf]
    %v2117 = vld [vmem:[%s2102 + $0x38] sm:$0xf]
    %v2118 = vld [vmem:[%s2102 + $0x3c] sm:$0xf]
    %s2119 = scalar_lea.vmem %s16, 1
    %v2120 = vld [vmem:[%s2119] sm:$0x1]
    %v2122 = vlaneseq
    %v2123 = vshrl.u32 %v2122, 7
    %v2124 = vsub.s32 0, %v2123
    %v2125 = vrot.slane %v2120, %v2124
    %v2143 = vunpack.c.l.b16 %v2103
    %v2144 = vunpack.c.l.b16 %v2104
    %v2145 = vunpack.c.l.b16 %v2105
    %v2146 = vunpack.c.l.b16 %v2106
    %v2147 = vunpack.c.l.b16 %v2107
    %v2148 = vunpack.c.l.b16 %v2108
    %v2149 = vunpack.c.l.b16 %v2109
    %v2150 = vunpack.c.l.b16 %v2110
    %v2151 = vunpack.c.l.b16 %v2111
    %v2152 = vunpack.c.l.b16 %v2112
    %v2153 = vunpack.c.l.b16 %v2113
    %v2154 = vunpack.c.l.b16 %v2114
    %v2155 = vunpack.c.l.b16 %v2115
    %v2156 = vunpack.c.l.b16 %v2116
    %v2157 = vunpack.c.l.b16 %v2117
    %v2158 = vunpack.c.l.b16 %v2118
    %v2159 = vpack.c.b16 %v2144, %v2143
    %v2160 = vpack.c.b16 %v2146, %v2145
    %v2161 = vpack.c.b16 %v2148, %v2147
    %v2162 = vpack.c.b16 %v2150, %v2149
    %v2163 = vpack.c.b16 %v2152, %v2151
    %v2164 = vpack.c.b16 %v2154, %v2153
    %v2165 = vpack.c.b16 %v2156, %v2155
    %v2166 = vpack.c.b16 %v2158, %v2157
    %2175 = vmatprep.subr.bf16.mxu0 0
    %2176 = vmatpush1.bf16.msra.mxu0 %v2159
    %2177 = vmatprep.subr.bf16.mxu0 0
    %2178 = vmatpush1.bf16.msra.mxu0 %v2160
    %2179 = vmatprep.subr.bf16.mxu0 0
    %2180 = vmatpush1.bf16.msra.mxu0 %v2161
    %2181 = vmatprep.subr.bf16.mxu0 0
    %2182 = vmatpush1.bf16.msra.mxu0 %v2162
    %2183 = vmatprep.subr.bf16.mxu0 0
    %2184 = vmatpush1.bf16.msra.mxu0 %v2163
    %2185 = vmatprep.subr.bf16.mxu0 0
    %2186 = vmatpush1.bf16.msra.mxu0 %v2164
    %2187 = vmatprep.subr.bf16.mxu0 0
    %2188 = vmatpush1.bf16.msra.mxu0 %v2165
    %2189 = vmatprep.subr.bf16.mxu0 0
    %2190 = vmatpush1.bf16.msra.mxu0 %v2166
    %2191 = vmatprep.subr.bf16.mxu0 0
    %2192 = vmatpush1.bf16.msra.mxu0 0
    %2193 = vmatprep.subr.bf16.mxu0 0
    %2194 = vmatpush1.bf16.msra.mxu0 0
    %2195 = vmatprep.subr.bf16.mxu0 0
    %2196 = vmatpush1.bf16.msra.mxu0 0
    %2197 = vmatprep.subr.bf16.mxu0 0
    %2198 = vmatpush1.bf16.msra.mxu0 0
    %2199 = vmatprep.subr.bf16.mxu0 0
    %2200 = vmatpush1.bf16.msra.mxu0 0
    %2201 = vmatprep.subr.bf16.mxu0 0
    %2202 = vmatpush1.bf16.msra.mxu0 0
    %2203 = vmatprep.subr.bf16.mxu0 0
    %2204 = vmatpush1.bf16.msra.mxu0 0
    %2205 = vmatprep.subr.bf16.mxu0 0
    %2206 = vmatpush1.bf16.msra.mxu0 0
    %2207 = vmatprep.mubr.bf16.mxu0 0
    %2208 = vmatmul.mubr.bf16.gmra.mrb[0].mxu0 %v2100
    %v2209 = vpop.f32.mrb[0].mxu0
    %v2210 = vadd.f32 %v2125, %v2209
    %v2211 = vpop.f32.mrb[0].mxu0
    %v2212 = vpop.f32.mrb[0].mxu0
    %v2213 = vadd.f32 %v2125, %v2212
    %v2214 = vpop.f32.mrb[0].mxu0
    %2215 = vmatprep.mubr.bf16.mxu0 0
    %2216 = vmatmul.mubr.bf16.gmra.mrb[0].mxu0 %v2101
    %v2217 = vpop.f32.mrb[0].mxu0
    %v2218 = vadd.f32 %v2125, %v2217
    %v2219 = vpop.f32.mrb[0].mxu0
    %v2220 = vpop.f32.mrb[0].mxu0
    %v2221 = vadd.f32 %v2125, %v2220
    %v2222 = vpop.f32.mrb[0].mxu0
    %2223 = vdwg.mxu0
    %v2224 = vadd.f32 %v1906, %v2210
    %v2225 = vadd.f32 %v1907, %v2213
    %v2226 = vadd.f32 %v1908, %v2218
    %v2227 = vadd.f32 %v1909, %v2221
    %v2228 = vld [vmem:[%s17] sm:$0x1]
    %v2229 = vld [vmem:[%s18] sm:$0x1]
    %v2230 = vsel %vm327, %v2224, 0.0
    %2231 = vadd.xlane.f32.xlu0 %v2230
    %v2232 = vpop.xlane.xlu0 %2231
    %v2233 = vsel %vm327, %v2225, 0.0
    %2234 = vadd.xlane.f32.xlu0 %v2233
    %v2235 = vpop.xlane.xlu0 %2234
    %v2236 = vsel %vm327, %v2226, 0.0
    %2237 = vadd.xlane.f32.xlu0 %v2236
    %v2238 = vpop.xlane.xlu0 %2237
    %v2239 = vsel %vm327, %v2227, 0.0
    %2240 = vadd.xlane.f32.xlu0 %v2239
    %v2241 = vpop.xlane.xlu0 %2240
    %v2242 = vmul.f32 %v2232, %v340
    %v2243 = vmul.f32 %v2235, %v340
    %v2244 = vmul.f32 %v2238, %v340
    %v2245 = vmul.f32 %v2241, %v340
    %v2246 = vsub.f32 %v2224, %v2242
    %v2247 = vsub.f32 %v2225, %v2243
    %v2248 = vsub.f32 %v2226, %v2244
    %v2249 = vsub.f32 %v2227, %v2245
    %v2250 = vmul.f32 %v2246, %v2246
    %v2251 = vmul.f32 %v2247, %v2247
    %v2252 = vmul.f32 %v2248, %v2248
    %v2253 = vmul.f32 %v2249, %v2249
    %v2254 = vsel %vm327, %v2250, 0.0
    %2255 = vadd.xlane.f32.xlu0 %v2254
    %v2256 = vpop.xlane.xlu0 %2255
    %v2257 = vsel %vm327, %v2251, 0.0
    %2258 = vadd.xlane.f32.xlu0 %v2257
    %v2259 = vpop.xlane.xlu0 %2258
    %v2260 = vsel %vm327, %v2252, 0.0
    %2261 = vadd.xlane.f32.xlu0 %v2260
    %v2262 = vpop.xlane.xlu0 %2261
    %v2263 = vsel %vm327, %v2253, 0.0
    %2264 = vadd.xlane.f32.xlu0 %v2263
    %v2265 = vpop.xlane.xlu0 %2264
    %v2266 = vmul.f32 %v2256, %v340
    %v2267 = vmul.f32 %v2259, %v340
    %v2268 = vmul.f32 %v2262, %v340
    %v2269 = vmul.f32 %v2265, %v340
    %v2270 = vadd.f32 %v2266, 1e-05
    %v2271 = vadd.f32 %v2267, 1e-05
    %v2272 = vadd.f32 %v2268, 1e-05
    %v2273 = vadd.f32 %v2269, 1e-05
    %v2274 = vrsqrt.pop %v2270
    %v2275 = vrsqrt.pop %v2271
    %v2276 = vrsqrt.pop %v2272
    %v2277 = vrsqrt.pop %v2273
    %v2278 = vmul.f32 %v2246, %v2274
    %v2279 = vmul.f32 %v2247, %v2275
    %v2280 = vmul.f32 %v2248, %v2276
    %v2281 = vmul.f32 %v2249, %v2277
    %v2283 = vlaneseq
    %v2284 = vshrl.u32 %v2283, 7
    %v2285 = vsub.s32 0, %v2284
    %v2286 = vrot.slane %v2228, %v2285
    %v2288 = vmul.f32 %v2278, %v2286
    %v2289 = vmul.f32 %v2279, %v2286
    %v2290 = vmul.f32 %v2280, %v2286
    %v2291 = vmul.f32 %v2281, %v2286
    %v2293 = vlaneseq
    %v2294 = vshrl.u32 %v2293, 7
    %v2295 = vsub.s32 0, %v2294
    %v2296 = vrot.slane %v2229, %v2295
    %v2298 = vadd.f32 %v2288, %v2296
    %v2299 = vadd.f32 %v2289, %v2296
    %v2300 = vadd.f32 %v2290, %v2296
    %v2301 = vadd.f32 %v2291, %v2296
    %v2302 = vpack.c.bf16 %v2299, %v2298
    %v2303 = vpack.c.bf16 %v2301, %v2300
    %v2304 = vld [vmem:[%s19] sm:$0xf]
    %v2305 = vld [vmem:[%s19 + $0x4] sm:$0xf]
    %v2306 = vld [vmem:[%s19 + $0x8] sm:$0xf]
    %v2307 = vld [vmem:[%s19 + $0xc] sm:$0xf]
    %v2308 = vld [vmem:[%s20] sm:$0x1]
    %v2310 = vlaneseq
    %v2311 = vshrl.u32 %v2310, 7
    %v2312 = vsub.s32 0, %v2311
    %v2313 = vrot.slane %v2308, %v2312
    %v2319 = vunpack.c.l.b16 %v2304
    %v2320 = vunpack.c.l.b16 %v2305
    %v2321 = vunpack.c.l.b16 %v2306
    %v2322 = vunpack.c.l.b16 %v2307
    %v2323 = vpack.c.b16 %v2320, %v2319
    %v2324 = vpack.c.b16 %v2322, %v2321
    %v2328 = vsel %vm327, %v2302, 0
    %v2331 = vsel %vm327, %v2303, 0
    %2333 = vmatprep.subr.bf16.mxu0 0
    %2334 = vmatpush1.bf16.msra.mxu0 %v2323
    %2335 = vmatprep.subr.bf16.mxu0 0
    %2336 = vmatpush1.bf16.msra.mxu0 %v2324
    %2337 = vmatprep.subr.bf16.mxu0 0
    %2338 = vmatpush1.bf16.msra.mxu0 0
    %2339 = vmatprep.subr.bf16.mxu0 0
    %2340 = vmatpush1.bf16.msra.mxu0 0
    %2341 = vmatprep.subr.bf16.mxu0 0
    %2342 = vmatpush1.bf16.msra.mxu0 0
    %2343 = vmatprep.subr.bf16.mxu0 0
    %2344 = vmatpush1.bf16.msra.mxu0 0
    %2345 = vmatprep.subr.bf16.mxu0 0
    %2346 = vmatpush1.bf16.msra.mxu0 0
    %2347 = vmatprep.subr.bf16.mxu0 0
    %2348 = vmatpush1.bf16.msra.mxu0 0
    %2349 = vmatprep.subr.bf16.mxu0 0
    %2350 = vmatpush1.bf16.msra.mxu0 0
    %2351 = vmatprep.subr.bf16.mxu0 0
    %2352 = vmatpush1.bf16.msra.mxu0 0
    %2353 = vmatprep.subr.bf16.mxu0 0
    %2354 = vmatpush1.bf16.msra.mxu0 0
    %2355 = vmatprep.subr.bf16.mxu0 0
    %2356 = vmatpush1.bf16.msra.mxu0 0
    %2357 = vmatprep.subr.bf16.mxu0 0
    %2358 = vmatpush1.bf16.msra.mxu0 0
    %2359 = vmatprep.subr.bf16.mxu0 0
    %2360 = vmatpush1.bf16.msra.mxu0 0
    %2361 = vmatprep.subr.bf16.mxu0 0
    %2362 = vmatpush1.bf16.msra.mxu0 0
    %2363 = vmatprep.subr.bf16.mxu0 0
    %2364 = vmatpush1.bf16.msra.mxu0 0
    %2365 = vmatprep.mubr.bf16.mxu0 0
    %2366 = vmatmul.mubr.bf16.gmra.mrb[0].mxu0 %v2328
    %v2367 = vpop.f32.mrb[0].mxu0
    %v2368 = vadd.f32 %v2313, %v2367
    %v2369 = vpop.f32.mrb[0].mxu0
    %v2370 = vpop.f32.mrb[0].mxu0
    %v2371 = vadd.f32 %v2313, %v2370
    %v2372 = vpop.f32.mrb[0].mxu0
    %2373 = vmatprep.mubr.bf16.mxu0 0
    %2374 = vmatmul.mubr.bf16.gmra.mrb[0].mxu0 %v2331
    %v2375 = vpop.f32.mrb[0].mxu0
    %v2376 = vadd.f32 %v2313, %v2375
    %v2377 = vpop.f32.mrb[0].mxu0
    %v2378 = vpop.f32.mrb[0].mxu0
    %v2379 = vadd.f32 %v2313, %v2378
    %v2380 = vpop.f32.mrb[0].mxu0
    %2381 = vdwg.mxu0
    %2382 = vst [vmem:[#allocation2] sm:$0xff] %v2368
    %2383 = vst [vmem:[#allocation2 + $0x8] sm:$0xff] %v2371
    %2384 = vst [vmem:[#allocation2 + $0x10] sm:$0xff] %v2376
    %2385 = vst [vmem:[#allocation2 + $0x18] sm:$0xff] %v2379
    // Predicated region
    $region86: #{tpu_custom_call.1} parent=1 // pred_check
      _
    $region87: #{tpu_custom_call.1} parent=1 // pred_check_branch
      %2387 = sbr.rel (0) target = $region89
    $region88: #{tpu_custom_call.1} parent=1 // pred_region
      %s2389 = ssub.s32 512, 512
      %2390 = vsyncadd [#allocation3], %s2389
      %s2391 = sshll.u32 [#allocation2], 4
      %s2392 = int_to_ptr.vmem [resolvable:$true] %s2391
      %2397 = dma.vmem_to_hbm [thread:$0]  %s2392, 512, %s21, [#allocation3], 128, 128, 8
    $region89: #{tpu_custom_call.1} parent=1 // pred_fallthru
      _
    // Predicated region
    $region90: #{tpu_custom_call.1} parent=1 // pred_check
      _
    $region91: #{tpu_custom_call.1} parent=1 // pred_check_branch
      %2399 = sbr.rel (0) target = $region93
    $region92: #{tpu_custom_call.1} parent=1 // pred_region
      %2400 = dma.done [#allocation3], 512
    $region93: #{tpu_custom_call.1} parent=1 // pred_fallthru
      _
    %2401 = vsyncpa [#allocation3], 1

</llo_original>
